<compile_context>
chip_gen: v6e
topology: v6e:2x2x1
jax: 0.10.0
libtpu: 0.0.40
codegen_flags: <defaults>
</compile_context>

<pallas_src>
import functools
import math

import jax
import jax.numpy as jnp
from jax.experimental import pallas as pl
from jax.experimental.pallas import tpu as pltpu


_NEG = jnp.float32(-1e9)   # large-but-finite additive mask value


def _default_vmem_limit():
    """~3/4 of physical VMEM, capped at 100 MiB (v5e/v6e ~96 MiB, v7x ~48 MiB)."""
    try:
        info = pltpu.get_tpu_info()
        cap = getattr(info, "vmem_capacity_bytes", 128 * 1024 * 1024)
        return min(int(cap) * 3 // 4, 100 * 1024 * 1024)
    except Exception:
        return 48 * 1024 * 1024


_VMEM_LIMIT = _default_vmem_limit()


def _cparams(*sem):
    return pltpu.CompilerParams(dimension_semantics=sem,
                                vmem_limit_bytes=_VMEM_LIMIT)


def _round_up(n, m):
    return ((n + m - 1) // m) * m


def _row_tile(n):
    """Return (tile, padded_n): tile is a multiple of 8 (<=512), padded_n a
    multiple of tile.  Never falls back to a single full-N block for ragged N."""
    for t in (512, 256, 128):
        if n % t == 0:
            return t, n
    if n <= 512:
        t = _round_up(n, 8)
        return t, t
    t = 256
    return t, _round_up(n, t)


def _pad_rows(x, n_pad):
    n = x.shape[0]
    if n_pad == n:
        return x
    return jnp.pad(x, ((0, n_pad - n), (0, 0)))


# --------------------------------------------------------------------------
# kernel: fused projection  y = x @ W + b   (rows tiled, weights resident)
# --------------------------------------------------------------------------

def _proj_kernel(x_ref, w_ref, b_ref, o_ref):
    x = x_ref[...].astype(jnp.bfloat16)
    acc = jnp.dot(x, w_ref[...], preferred_element_type=jnp.float32) + b_ref[...]
    o_ref[...] = acc.astype(o_ref.dtype)


def project(x, w_bf16, b_f32, out_dtype=jnp.bfloat16):
    """x: (N, Din) f32/bf16, w: (Din, Dout) bf16, b: (Dout,) f32 -> (N, Dout)."""
    # TODO(synk): K-tile over Din with an f32 accumulator for very large fused
    #             weights (v7x VMEM); unnecessary at demo sizes.
    N, Din = x.shape
    Dout = w_bf16.shape[1]
    tn, Np = _row_tile(N)
    xp = _pad_rows(x, Np)
    out = pl.pallas_call(
        _proj_kernel,
        out_shape=jax.ShapeDtypeStruct((Np, Dout), out_dtype),
        grid=(Np // tn,),
        in_specs=[
            pl.BlockSpec((tn, Din), lambda i: (i, 0)),
            pl.BlockSpec((Din, Dout), lambda i: (0, 0)),
            pl.BlockSpec((1, Dout), lambda i: (0, 0)),
        ],
        out_specs=pl.BlockSpec((tn, Dout), lambda i: (i, 0)),
        compiler_params=_cparams("parallel"),
    )(xp, w_bf16, b_f32.reshape(1, Dout))
    return out if Np == N else out[:N]


# --------------------------------------------------------------------------
# kernel: masked self-attention.  One batch per grid step; heads split from the
# flat fused-QKV block with static lane slices; heads merged in-kernel so the
# output is written lane-dense as (1, T, D).  No attention-weight writeback.
# --------------------------------------------------------------------------

def _self_attn_kernel(qkv_ref, cm_ref, pm_ref, o_ref, *, H, D, hd):
    qkv = qkv_ref[0]                       # (T, 3D) bf16 (query pre-scaled)
    mask = cm_ref[...] + pm_ref[0]         # (T, T) f32 (causal + key padding)
    outs = []
    for h in range(H):                     # static unroll over heads
        q = qkv[:, h * hd:(h + 1) * hd]                    # (T, hd)
        k = qkv[:, D + h * hd:D + (h + 1) * hd]            # (T, hd)
        v = qkv[:, 2 * D + h * hd:2 * D + (h + 1) * hd]    # (T, hd)
        s = jnp.dot(q, k.T, preferred_element_type=jnp.float32) + mask   # (T, T)
        m = jnp.max(s, axis=-1, keepdims=True)
        p = jnp.exp(s - m)
        p = p / jnp.sum(p, axis=-1, keepdims=True)          # exact normalization
        outs.append(jnp.dot(p.astype(v.dtype), v,
                            preferred_element_type=jnp.float32))         # (T, hd)
    o_ref[0] = jnp.concatenate(outs, axis=-1).astype(o_ref.dtype)        # (T, D)


def self_attention(qkv3, causal_add, pad_add, num_heads):
    """qkv3: (B, T, 3D) bf16; causal_add: (T,T) f32; pad_add: (B,1,T) f32."""
    B, T, D3 = qkv3.shape
    D = D3 // 3
    hd = D // num_heads
    kernel = functools.partial(_self_attn_kernel, H=num_heads, D=D, hd=hd)
    return pl.pallas_call(
        kernel,
        out_shape=jax.ShapeDtypeStruct((B, T, D), jnp.bfloat16),
        grid=(B,),
        in_specs=[
            pl.BlockSpec((1, T, D3), lambda b: (b, 0, 0)),
            pl.BlockSpec((T, T), lambda b: (0, 0)),        # shared causal mask
            pl.BlockSpec((1, 1, T), lambda b: (b, 0, 0)),  # per-batch pad mask
        ],
        out_specs=pl.BlockSpec((1, T, D), lambda b: (b, 0, 0)),
        compiler_params=_cparams("parallel"),
    )(qkv3, causal_add, pad_add)


# --------------------------------------------------------------------------
# kernel: unmasked cross-attention.  Same flat-input / lane-dense-output layout;
# also emits the per-head attention weights (returned by the module).
# --------------------------------------------------------------------------

def _cross_attn_kernel(q_ref, kv_ref, o_ref, w_ref, *, H, D, hd):
    qx = q_ref[0]                          # (T, D) bf16 (pre-scaled)
    kv = kv_ref[0]                         # (S, 2D) bf16
    outs = []
    for h in range(H):
        q = qx[:, h * hd:(h + 1) * hd]                     # (T, hd)
        k = kv[:, h * hd:(h + 1) * hd]                     # (S, hd)
        v = kv[:, D + h * hd:D + (h + 1) * hd]             # (S, hd)
        s = jnp.dot(q, k.T, preferred_element_type=jnp.float32)          # (T, S)
        m = jnp.max(s, axis=-1, keepdims=True)
        p = jnp.exp(s - m)
        p = p / jnp.sum(p, axis=-1, keepdims=True)
        w_ref[0, h] = p.astype(w_ref.dtype)
        outs.append(jnp.dot(p.astype(v.dtype), v,
                            preferred_element_type=jnp.float32))         # (T, hd)
    o_ref[0] = jnp.concatenate(outs, axis=-1).astype(o_ref.dtype)        # (T, D)


def cross_attention(q3, kv3, num_heads, attn_dtype=jnp.bfloat16):
    """q3: (B, T, D) bf16; kv3: (B, S, 2D) bf16 -> ((B,T,D) bf16, (B,H,T,S))."""
    B, T, D = q3.shape
    S = kv3.shape[1]
    hd = D // num_heads
    kernel = functools.partial(_cross_attn_kernel, H=num_heads, D=D, hd=hd)
    return pl.pallas_call(
        kernel,
        out_shape=(jax.ShapeDtypeStruct((B, T, D), jnp.bfloat16),
                   jax.ShapeDtypeStruct((B, num_heads, T, S), attn_dtype)),
        grid=(B,),
        in_specs=[
            pl.BlockSpec((1, T, D), lambda b: (b, 0, 0)),
            pl.BlockSpec((1, S, 2 * D), lambda b: (b, 0, 0)),
        ],
        out_specs=(
            pl.BlockSpec((1, T, D), lambda b: (b, 0, 0)),
            pl.BlockSpec((1, num_heads, T, S), lambda b: (b, 0, 0, 0)),
        ),
        compiler_params=_cparams("parallel"),
    )(q3, kv3)


# --------------------------------------------------------------------------
# kernel: out-projection + bias + residual + LayerNorm (eps=1e-5), fused
# --------------------------------------------------------------------------

def _proj_add_ln_kernel(a_ref, w_ref, b_ref, r_ref, g_ref, be_ref, o_ref):
    y = jnp.dot(a_ref[...], w_ref[...], preferred_element_type=jnp.float32) + b_ref[...]
    y = y + r_ref[...].astype(jnp.float32)
    mean = jnp.mean(y, axis=-1, keepdims=True)
    var = jnp.mean(jnp.square(y - mean), axis=-1, keepdims=True)
    out = (y - mean) * jax.lax.rsqrt(var + 1e-5) * g_ref[...] + be_ref[...]
    o_ref[...] = out.astype(o_ref.dtype)


def proj_add_layernorm(a_bf16, w_bf16, b, residual, gamma, beta,
                       out_dtype=jnp.bfloat16):
    """LayerNorm(residual + (a @ W + b)).  a: (N, Din) bf16, residual: (N, D)."""
    N, Din = a_bf16.shape
    D = w_bf16.shape[1]
    tn, Np = _row_tile(N)
    ap = _pad_rows(a_bf16, Np)
    rp = _pad_rows(residual, Np)
    out = pl.pallas_call(
        _proj_add_ln_kernel,
        out_shape=jax.ShapeDtypeStruct((Np, D), out_dtype),
        grid=(Np // tn,),
        in_specs=[
            pl.BlockSpec((tn, Din), lambda i: (i, 0)),
            pl.BlockSpec((Din, D), lambda i: (0, 0)),
            pl.BlockSpec((1, D), lambda i: (0, 0)),
            pl.BlockSpec((tn, D), lambda i: (i, 0)),
            pl.BlockSpec((1, D), lambda i: (0, 0)),
            pl.BlockSpec((1, D), lambda i: (0, 0)),
        ],
        out_specs=pl.BlockSpec((tn, D), lambda i: (i, 0)),
        compiler_params=_cparams("parallel"),
    )(ap, w_bf16, b.reshape(1, D), rp, gamma.reshape(1, D), beta.reshape(1, D))
    return out if Np == N else out[:N]


# --------------------------------------------------------------------------
# kernel: FFN (Linear -> ReLU -> Linear) + residual + LayerNorm, fused
# --------------------------------------------------------------------------

def _ffn_add_ln_kernel(x_ref, w1_ref, b1_ref, w2_ref, b2_ref, g_ref, be_ref, o_ref):
    x = x_ref[...]                                               # (tn, D) bf16
    h = jnp.dot(x, w1_ref[...], preferred_element_type=jnp.float32) + b1_ref[...]
    h = jnp.maximum(h, 0.0)
    y = jnp.dot(h.astype(jnp.bfloat16), w2_ref[...],
                preferred_element_type=jnp.float32) + b2_ref[...]
    y = y + x.astype(jnp.float32)                                # residual
    mean = jnp.mean(y, axis=-1, keepdims=True)
    var = jnp.mean(jnp.square(y - mean), axis=-1, keepdims=True)
    out = (y - mean) * jax.lax.rsqrt(var + 1e-5) * g_ref[...] + be_ref[...]
    o_ref[...] = out.astype(o_ref.dtype)


def ffn_add_layernorm(x, w1, b1, w2, b2, gamma, beta, out_dtype=jnp.float32):
    """LayerNorm(x + W2(relu(W1 x + b1)) + b2).  x: (N, D) bf16."""
    # TODO(synk): F-tile (grid over F, f32 (tn,D) accumulator, pl.when init/fin)
    #             for production F on v7x; weights are tiny at demo sizes.
    N, D = x.shape
    F = w1.shape[1]
    tn, Np = _row_tile(N)
    xp = _pad_rows(x, Np)
    out = pl.pallas_call(
        _ffn_add_ln_kernel,
        out_shape=jax.ShapeDtypeStruct((Np, D), out_dtype),
        grid=(Np // tn,),
        in_specs=[
            pl.BlockSpec((tn, D), lambda i: (i, 0)),
            pl.BlockSpec((D, F), lambda i: (0, 0)),
            pl.BlockSpec((1, F), lambda i: (0, 0)),
            pl.BlockSpec((F, D), lambda i: (0, 0)),
            pl.BlockSpec((1, D), lambda i: (0, 0)),
            pl.BlockSpec((1, D), lambda i: (0, 0)),
            pl.BlockSpec((1, D), lambda i: (0, 0)),
        ],
        out_specs=pl.BlockSpec((tn, D), lambda i: (i, 0)),
        compiler_params=_cparams("parallel"),
    )(xp, w1, b1.reshape(1, F), w2, b2.reshape(1, D),
      gamma.reshape(1, D), beta.reshape(1, D))
    return out if Np == N else out[:N]


# --------------------------------------------------------------------------
# parameters
# --------------------------------------------------------------------------

def init_params(key, d_model, num_heads, ff_dim):
    """PyTorch-layout parameters (in_proj_weight (3D,D), nn.Linear (out,in))."""
    ks = jax.random.split(key, 8)
    s = 1.0 / math.sqrt(d_model)
    sf = 1.0 / math.sqrt(ff_dim)
    return {
        "num_heads": num_heads,
        "sa_in_w": jax.random.uniform(ks[0], (3 * d_model, d_model), jnp.float32, -s, s),
        "sa_in_b": jnp.zeros((3 * d_model,), jnp.float32),
        "sa_out_w": jax.random.uniform(ks[1], (d_model, d_model), jnp.float32, -s, s),
        "sa_out_b": jnp.zeros((d_model,), jnp.float32),
        "ca_in_w": jax.random.uniform(ks[2], (3 * d_model, d_model), jnp.float32, -s, s),
        "ca_in_b": jnp.zeros((3 * d_model,), jnp.float32),
        "ca_out_w": jax.random.uniform(ks[3], (d_model, d_model), jnp.float32, -s, s),
        "ca_out_b": jnp.zeros((d_model,), jnp.float32),
        "ln1_g": jnp.ones((d_model,), jnp.float32),
        "ln1_b": jnp.zeros((d_model,), jnp.float32),
        "ln2_g": jnp.ones((d_model,), jnp.float32),
        "ln2_b": jnp.zeros((d_model,), jnp.float32),
        "ln3_g": jnp.ones((d_model,), jnp.float32),
        "ln3_b": jnp.zeros((d_model,), jnp.float32),
        "ff_w1": jax.random.uniform(ks[4], (ff_dim, d_model), jnp.float32, -s, s),
        "ff_b1": jax.random.uniform(ks[5], (ff_dim,), jnp.float32, -s, s),
        "ff_w2": jax.random.uniform(ks[6], (d_model, ff_dim), jnp.float32, -sf, sf),
        "ff_b2": jax.random.uniform(ks[7], (d_model,), jnp.float32, -sf, sf),
    }


def prepare_params(p):
    """One-time parameter prep: transpose weights to (in,out), fold the
    1/sqrt(head_dim) query scale into Wq/bq, fuse KV weights, cast to bf16."""
    D = p["sa_out_w"].shape[0]
    H = p["num_heads"]
    hd = D // H
    scale = 1.0 / math.sqrt(hd)
    bf = lambda x: x.astype(jnp.bfloat16)

    sa_w, sa_b = p["sa_in_w"], p["sa_in_b"]
    ca_w, ca_b = p["ca_in_w"], p["ca_in_b"]
    return {
        "num_heads": H,
        # self-attn: fused QKV (D, 3D), q section pre-scaled
        "sa_qkv_w": bf(jnp.concatenate([sa_w[:D] * scale, sa_w[D:]], axis=0).T),
        "sa_qkv_b": jnp.concatenate([sa_b[:D] * scale, sa_b[D:]], axis=0),
        "sa_out_w": bf(p["sa_out_w"].T),
        "sa_out_b": p["sa_out_b"],
        # cross-attn: Q (D, D) pre-scaled, fused KV (D, 2D)
        "ca_q_w": bf((ca_w[:D] * scale).T),
        "ca_q_b": ca_b[:D] * scale,
        "ca_kv_w": bf(ca_w[D:].T),
        "ca_kv_b": ca_b[D:],
        "ca_out_w": bf(p["ca_out_w"].T),
        "ca_out_b": p["ca_out_b"],
        # layer norms (f32)
        "ln1_g": p["ln1_g"], "ln1_b": p["ln1_b"],
        "ln2_g": p["ln2_g"], "ln2_b": p["ln2_b"],
        "ln3_g": p["ln3_g"], "ln3_b": p["ln3_b"],
        # FFN, stored as (in, out)
        "ff_w1": bf(p["ff_w1"].T), "ff_b1": p["ff_b1"],
        "ff_w2": bf(p["ff_w2"].T), "ff_b2": p["ff_b2"],
    }


# --------------------------------------------------------------------------
# forward pass (matches DecoderLayer.forward, eval mode: dropout = identity)
# --------------------------------------------------------------------------

def decoder_layer_forward(prep, dec_inputs, enc_outputs, tgt_mask, tgt_pad_mask,
                          attn_dtype=jnp.bfloat16):
    """dec_inputs: (T,B,D), enc_outputs: (S,B,D), tgt_mask: (T,T) additive f32,
    tgt_pad_mask: (B,T) bool.  Returns (output (T,B,D) f32, attns (B,H,T,S)).
    Intermediates run in bf16 (bf16-level tolerance vs the f32 PyTorch ref)."""
    H = prep["num_heads"]
    x = jnp.transpose(dec_inputs, (1, 0, 2)).astype(jnp.float32)      # (B, T, D)
    mem = jnp.transpose(enc_outputs, (1, 0, 2)).astype(jnp.float32)   # (B, S, D)
    B, T, D = x.shape
    S = mem.shape[1]

    causal_add = tgt_mask.astype(jnp.float32)                              # (T, T)
    pad_add = jnp.where(tgt_pad_mask, _NEG, jnp.float32(0.0))[:, None, :]  # (B,1,T)

    # ---- masked self-attention + residual + LayerNorm ----
    x0 = x.reshape(B * T, D)                                           # f32 residual
    qkv = project(x0, prep["sa_qkv_w"], prep["sa_qkv_b"])              # (B*T, 3D) bf16
    sa = self_attention(qkv.reshape(B, T, 3 * D), causal_add, pad_add, H)  # (B,T,D) bf16
    x1 = proj_add_layernorm(sa.reshape(B * T, D), prep["sa_out_w"], prep["sa_out_b"],
                            x0, prep["ln1_g"], prep["ln1_b"],
                            out_dtype=jnp.bfloat16)                    # (B*T, D) bf16

    # ---- cross-attention + residual + LayerNorm ----
    q = project(x1, prep["ca_q_w"], prep["ca_q_b"])                    # (B*T, D) bf16
    kv = project(mem.reshape(B * S, D), prep["ca_kv_w"], prep["ca_kv_b"])  # (B*S, 2D) bf16
    ca, attns = cross_attention(q.reshape(B, T, D), kv.reshape(B, S, 2 * D), H,
                                attn_dtype=attn_dtype)                 # (B,T,D), (B,H,T,S)
    x2 = proj_add_layernorm(ca.reshape(B * T, D), prep["ca_out_w"], prep["ca_out_b"],
                            x1, prep["ln2_g"], prep["ln2_b"],
                            out_dtype=jnp.bfloat16)                    # (B*T, D) bf16

    # ---- feed-forward + residual + LayerNorm ----
    x3 = ffn_add_layernorm(x2, prep["ff_w1"], prep["ff_b1"],
                           prep["ff_w2"], prep["ff_b2"],
                           prep["ln3_g"], prep["ln3_b"],
                           out_dtype=jnp.float32)                      # (B*T, D) f32

    out = x3.reshape(B, T, D).transpose(1, 0, 2)                       # (T, B, D)
    return out, attns


# --------------------------------------------------------------------------
# demo
# --------------------------------------------------------------------------

if __name__ == "__main__":
    B, T, S = 2, 8, 10
    d_model, num_heads, ff_dim = 32, 4, 64

    root = jax.random.PRNGKey(0)
    k_par, k_dec, k_enc = jax.random.split(root, 3)

    raw_params = init_params(k_par, d_model, num_heads, ff_dim)
    prep = prepare_params(raw_params)     # one-time layout / scale / dtype prep

    dec_inputs = jax.random.normal(k_dec, (T, B, d_model), jnp.float32)
    enc_outputs = jax.random.normal(k_enc, (S, B, d_model), jnp.float32)

    # causal additive mask (like nn.Transformer.generate_square_subsequent_mask)
    causal = jnp.where(jnp.triu(jnp.ones((T, T), jnp.bool_), k=1),
                       jnp.float32(-1e9), jnp.float32(0.0))
    # pad only the last target position of batch 1 (keeps every row partially unmasked)
    tgt_pad_mask = jnp.zeros((B, T), jnp.bool_).at[1, T - 1].set(True)

    @jax.jit
    def fwd(dec, enc, cm, pm):
        return decoder_layer_forward(prep, dec, enc, cm, pm)

    out, attns = fwd(dec_inputs, enc_outputs, causal, tgt_pad_mask)
    jax.block_until_ready((out, attns))

    assert out.shape == (T, B, d_model)
    assert attns.shape == (B, num_heads, T, S)
    assert bool(jnp.all(jnp.isfinite(out))) and bool(jnp.all(jnp.isfinite(attns)))
    print("KERNEL_OK")
</pallas_src>

<mosaic_0001>
module attributes {stable_mosaic.version = 11 : i64} {
  func.func @_proj_kernel(%arg0: i32, %arg1: memref<16x32xf32, #tpu.memory_space<vmem>>, %arg2: memref<32x96xbf16, #tpu.memory_space<vmem>>, %arg3: memref<1x96xf32, #tpu.memory_space<vmem>>, %arg4: memref<16x96xbf16, #tpu.memory_space<vmem>>) attributes {dimension_semantics = [#tpu.dimension_semantics<parallel>], iteration_bounds = array<i64: 1>, scalar_prefetch = 0 : i64, scratch_operands = 0 : i64, tpu.core_type = #tpu.core_type<tc>, window_params = [{transform_indices = @transform_0, window_bounds = array<i64: 16, 32>}, {pipeline_mode = #tpu.pipeline_mode<synchronous>, transform_indices = @transform_1, window_bounds = array<i64: 32, 96>}, {pipeline_mode = #tpu.pipeline_mode<synchronous>, transform_indices = @transform_2, window_bounds = array<i64: 1, 96>}, {transform_indices = @transform_3, window_bounds = array<i64: 16, 96>}]} {
    %c0 = arith.constant 0 : index
    %c0_0 = arith.constant 0 : index
    %0 = vector.load %arg1[%c0, %c0_0] : memref<16x32xf32, #tpu.memory_space<vmem>>, vector<16x32xf32>
    %1 = arith.truncf %0 : vector<16x32xf32> to vector<16x32xbf16>
    %c0_1 = arith.constant 0 : index
    %c0_2 = arith.constant 0 : index
    %2 = vector.load %arg2[%c0_1, %c0_2] : memref<32x96xbf16, #tpu.memory_space<vmem>>, vector<32x96xbf16>
    %cst = arith.constant dense<0.000000e+00> : vector<16x96xf32>
    %3 = tpu.matmul %1, %2, %cst {dimension_numbers = #tpu.dot_dimension_numbers<[1], [0], [0], [1], [0, 0, 1, 1], [], []>} : vector<16x32xbf16>, vector<32x96xbf16>, vector<16x96xf32> -> vector<16x96xf32>
    %c0_3 = arith.constant 0 : index
    %c0_4 = arith.constant 0 : index
    %4 = vector.load %arg3[%c0_3, %c0_4] : memref<1x96xf32, #tpu.memory_space<vmem>>, vector<1x96xf32>
    %5 = vector.broadcast %4 : vector<1x96xf32> to vector<16x96xf32>
    %6 = arith.addf %3, %5 : vector<16x96xf32>
    %7 = arith.truncf %6 : vector<16x96xf32> to vector<16x96xbf16>
    %c0_5 = arith.constant 0 : index
    %c0_6 = arith.constant 0 : index
    %8 = vector.load %arg4[%c0_5, %c0_6] : memref<16x96xbf16, #tpu.memory_space<vmem>>, vector<16x96xbf16>
    tpu.vector_store %arg4[%c0_5, %c0_6], %7 {strides = array<i32>} : memref<16x96xbf16, #tpu.memory_space<vmem>>, vector<16x96xbf16>,
    return
  }
  func.func @transform_0(%arg0: i32) -> (i32, i32) {
    %c0_i32 = arith.constant 0 : i32
    %c0_i32_0 = arith.constant 0 : i32
    return %arg0, %c0_i32 : i32, i32
  }
  func.func @transform_1(%arg0: i32) -> (i32, i32) {
    %c0_i32 = arith.constant 0 : i32
    %c0_i32_0 = arith.constant 0 : i32
    %c0_i32_1 = arith.constant 0 : i32
    return %c0_i32, %c0_i32_0 : i32, i32
  }
  func.func @transform_2(%arg0: i32) -> (i32, i32) {
    %c0_i32 = arith.constant 0 : i32
    %c0_i32_0 = arith.constant 0 : i32
    %c0_i32_1 = arith.constant 0 : i32
    return %c0_i32, %c0_i32_0 : i32, i32
  }
  func.func @transform_3(%arg0: i32) -> (i32, i32) {
    %c0_i32 = arith.constant 0 : i32
    %c0_i32_0 = arith.constant 0 : i32
    return %arg0, %c0_i32 : i32, i32
  }
}

module attributes {stable_mosaic.version = 11 : i64} {
  func.func @_proj_add_ln_kernel(%arg0: i32, %arg1: memref<16x32xbf16, #tpu.memory_space<vmem>>, %arg2: memref<32x32xbf16, #tpu.memory_space<vmem>>, %arg3: memref<1x32xf32, #tpu.memory_space<vmem>>, %arg4: memref<16x32xf32, #tpu.memory_space<vmem>>, %arg5: memref<1x32xf32, #tpu.memory_space<vmem>>, %arg6: memref<1x32xf32, #tpu.memory_space<vmem>>, %arg7: memref<16x32xbf16, #tpu.memory_space<vmem>>) attributes {dimension_semantics = [#tpu.dimension_semantics<parallel>], iteration_bounds = array<i64: 1>, scalar_prefetch = 0 : i64, scratch_operands = 0 : i64, tpu.core_type = #tpu.core_type<tc>, window_params = [{transform_indices = @transform_0, window_bounds = array<i64: 16, 32>}, {pipeline_mode = #tpu.pipeline_mode<synchronous>, transform_indices = @transform_1, window_bounds = array<i64: 32, 32>}, {pipeline_mode = #tpu.pipeline_mode<synchronous>, transform_indices = @transform_2, window_bounds = array<i64: 1, 32>}, {transform_indices = @transform_3, window_bounds = array<i64: 16, 32>}, {pipeline_mode = #tpu.pipeline_mode<synchronous>, transform_indices = @transform_4, window_bounds = array<i64: 1, 32>}, {pipeline_mode = #tpu.pipeline_mode<synchronous>, transform_indices = @transform_5, window_bounds = array<i64: 1, 32>}, {transform_indices = @transform_6, window_bounds = array<i64: 16, 32>}]} {
    %c0 = arith.constant 0 : index
    %c0_0 = arith.constant 0 : index
    %0 = vector.load %arg1[%c0, %c0_0] : memref<16x32xbf16, #tpu.memory_space<vmem>>, vector<16x32xbf16>
    %c0_1 = arith.constant 0 : index
    %c0_2 = arith.constant 0 : index
    %1 = vector.load %arg2[%c0_1, %c0_2] : memref<32x32xbf16, #tpu.memory_space<vmem>>, vector<32x32xbf16>
    %cst = arith.constant dense<0.000000e+00> : vector<16x32xf32>
    %2 = tpu.matmul %0, %1, %cst {dimension_numbers = #tpu.dot_dimension_numbers<[1], [0], [0], [1], [0, 0, 1, 1], [], []>} : vector<16x32xbf16>, vector<32x32xbf16>, vector<16x32xf32> -> vector<16x32xf32>
    %c0_3 = arith.constant 0 : index
    %c0_4 = arith.constant 0 : index
    %3 = vector.load %arg3[%c0_3, %c0_4] : memref<1x32xf32, #tpu.memory_space<vmem>>, vector<1x32xf32>
    %4 = vector.broadcast %3 : vector<1x32xf32> to vector<16x32xf32>
    %5 = arith.addf %2, %4 : vector<16x32xf32>
    %c0_5 = arith.constant 0 : index
    %c0_6 = arith.constant 0 : index
    %6 = vector.load %arg4[%c0_5, %c0_6] : memref<16x32xf32, #tpu.memory_space<vmem>>, vector<16x32xf32>
    %7 = arith.addf %5, %6 : vector<16x32xf32>
    %cst_7 = arith.constant dense<0.000000e+00> : vector<16xf32>
    %8 = vector.multi_reduction <add>, %7, %cst_7 [1] : vector<16x32xf32> to vector<16xf32>
    %9 = vector.shape_cast %8 : vector<16xf32> to vector<16x1xf32>
    %cst_8 = arith.constant 3.200000e+01 : f32
    %10 = vector.broadcast %cst_8 : f32 to vector<16x1xf32>
    %11 = arith.divf %9, %10 : vector<16x1xf32>
    %12 = vector.broadcast %11 : vector<16x1xf32> to vector<16x32xf32>
    %13 = arith.subf %7, %12 : vector<16x32xf32>
    %14 = arith.mulf %13, %13 : vector<16x32xf32>
    %cst_9 = arith.constant dense<0.000000e+00> : vector<16xf32>
    %15 = vector.multi_reduction <add>, %14, %cst_9 [1] : vector<16x32xf32> to vector<16xf32>
    %16 = vector.shape_cast %15 : vector<16xf32> to vector<16x1xf32>
    %cst_10 = arith.constant 3.200000e+01 : f32
    %17 = vector.broadcast %cst_10 : f32 to vector<16x1xf32>
    %18 = arith.divf %16, %17 : vector<16x1xf32>
    %19 = vector.broadcast %11 : vector<16x1xf32> to vector<16x32xf32>
    %20 = arith.subf %7, %19 : vector<16x32xf32>
    %cst_11 = arith.constant 9.99999974E-6 : f32
    %21 = vector.broadcast %cst_11 : f32 to vector<16x1xf32>
    %22 = arith.addf %18, %21 : vector<16x1xf32>
    %23 = math.rsqrt %22 : vector<16x1xf32>
    %24 = vector.broadcast %23 : vector<16x1xf32> to vector<16x32xf32>
    %25 = arith.mulf %20, %24 : vector<16x32xf32>
    %c0_12 = arith.constant 0 : index
    %c0_13 = arith.constant 0 : index
    %26 = vector.load %arg5[%c0_12, %c0_13] : memref<1x32xf32, #tpu.memory_space<vmem>>, vector<1x32xf32>
    %27 = vector.broadcast %26 : vector<1x32xf32> to vector<16x32xf32>
    %28 = arith.mulf %25, %27 : vector<16x32xf32>
    %c0_14 = arith.constant 0 : index
    %c0_15 = arith.constant 0 : index
    %29 = vector.load %arg6[%c0_14, %c0_15] : memref<1x32xf32, #tpu.memory_space<vmem>>, vector<1x32xf32>
    %30 = vector.broadcast %29 : vector<1x32xf32> to vector<16x32xf32>
    %31 = arith.addf %28, %30 : vector<16x32xf32>
    %32 = arith.truncf %31 : vector<16x32xf32> to vector<16x32xbf16>
    %c0_16 = arith.constant 0 : index
    %c0_17 = arith.constant 0 : index
    %33 = vector.load %arg7[%c0_16, %c0_17] : memref<16x32xbf16, #tpu.memory_space<vmem>>, vector<16x32xbf16>
    tpu.vector_store %arg7[%c0_16, %c0_17], %32 {strides = array<i32>} : memref<16x32xbf16, #tpu.memory_space<vmem>>, vector<16x32xbf16>,
    return
  }
  func.func @transform_0(%arg0: i32) -> (i32, i32) {
    %c0_i32 = arith.constant 0 : i32
    %c0_i32_0 = arith.constant 0 : i32
    return %arg0, %c0_i32 : i32, i32
  }
  func.func @transform_1(%arg0: i32) -> (i32, i32) {
    %c0_i32 = arith.constant 0 : i32
    %c0_i32_0 = arith.constant 0 : i32
    %c0_i32_1 = arith.constant 0 : i32
    return %c0_i32, %c0_i32_0 : i32, i32
  }
  func.func @transform_2(%arg0: i32) -> (i32, i32) {
    %c0_i32 = arith.constant 0 : i32
    %c0_i32_0 = arith.constant 0 : i32
    %c0_i32_1 = arith.constant 0 : i32
    return %c0_i32, %c0_i32_0 : i32, i32
  }
  func.func @transform_3(%arg0: i32) -> (i32, i32) {
    %c0_i32 = arith.constant 0 : i32
    %c0_i32_0 = arith.constant 0 : i32
    return %arg0, %c0_i32 : i32, i32
  }
  func.func @transform_4(%arg0: i32) -> (i32, i32) {
    %c0_i32 = arith.constant 0 : i32
    %c0_i32_0 = arith.constant 0 : i32
    %c0_i32_1 = arith.constant 0 : i32
    return %c0_i32, %c0_i32_0 : i32, i32
  }
  func.func @transform_5(%arg0: i32) -> (i32, i32) {
    %c0_i32 = arith.constant 0 : i32
    %c0_i32_0 = arith.constant 0 : i32
    %c0_i32_1 = arith.constant 0 : i32
    return %c0_i32, %c0_i32_0 : i32, i32
  }
  func.func @transform_6(%arg0: i32) -> (i32, i32) {
    %c0_i32 = arith.constant 0 : i32
    %c0_i32_0 = arith.constant 0 : i32
    return %arg0, %c0_i32 : i32, i32
  }
}

module attributes {stable_mosaic.version = 11 : i64} {
  func.func @_proj_kernel(%arg0: i32, %arg1: memref<16x32xbf16, #tpu.memory_space<vmem>>, %arg2: memref<32x32xbf16, #tpu.memory_space<vmem>>, %arg3: memref<1x32xf32, #tpu.memory_space<vmem>>, %arg4: memref<16x32xbf16, #tpu.memory_space<vmem>>) attributes {dimension_semantics = [#tpu.dimension_semantics<parallel>], iteration_bounds = array<i64: 1>, scalar_prefetch = 0 : i64, scratch_operands = 0 : i64, tpu.core_type = #tpu.core_type<tc>, window_params = [{transform_indices = @transform_0, window_bounds = array<i64: 16, 32>}, {pipeline_mode = #tpu.pipeline_mode<synchronous>, transform_indices = @transform_1, window_bounds = array<i64: 32, 32>}, {pipeline_mode = #tpu.pipeline_mode<synchronous>, transform_indices = @transform_2, window_bounds = array<i64: 1, 32>}, {transform_indices = @transform_3, window_bounds = array<i64: 16, 32>}]} {
    %c0 = arith.constant 0 : index
    %c0_0 = arith.constant 0 : index
    %0 = vector.load %arg1[%c0, %c0_0] : memref<16x32xbf16, #tpu.memory_space<vmem>>, vector<16x32xbf16>
    %c0_1 = arith.constant 0 : index
    %c0_2 = arith.constant 0 : index
    %1 = vector.load %arg2[%c0_1, %c0_2] : memref<32x32xbf16, #tpu.memory_space<vmem>>, vector<32x32xbf16>
    %cst = arith.constant dense<0.000000e+00> : vector<16x32xf32>
    %2 = tpu.matmul %0, %1, %cst {dimension_numbers = #tpu.dot_dimension_numbers<[1], [0], [0], [1], [0, 0, 1, 1], [], []>} : vector<16x32xbf16>, vector<32x32xbf16>, vector<16x32xf32> -> vector<16x32xf32>
    %c0_3 = arith.constant 0 : index
    %c0_4 = arith.constant 0 : index
    %3 = vector.load %arg3[%c0_3, %c0_4] : memref<1x32xf32, #tpu.memory_space<vmem>>, vector<1x32xf32>
    %4 = vector.broadcast %3 : vector<1x32xf32> to vector<16x32xf32>
    %5 = arith.addf %2, %4 : vector<16x32xf32>
    %6 = arith.truncf %5 : vector<16x32xf32> to vector<16x32xbf16>
    %c0_5 = arith.constant 0 : index
    %c0_6 = arith.constant 0 : index
    %7 = vector.load %arg4[%c0_5, %c0_6] : memref<16x32xbf16, #tpu.memory_space<vmem>>, vector<16x32xbf16>
    tpu.vector_store %arg4[%c0_5, %c0_6], %6 {strides = array<i32>} : memref<16x32xbf16, #tpu.memory_space<vmem>>, vector<16x32xbf16>,
    return
  }
  func.func @transform_0(%arg0: i32) -> (i32, i32) {
    %c0_i32 = arith.constant 0 : i32
    %c0_i32_0 = arith.constant 0 : i32
    return %arg0, %c0_i32 : i32, i32
  }
  func.func @transform_1(%arg0: i32) -> (i32, i32) {
    %c0_i32 = arith.constant 0 : i32
    %c0_i32_0 = arith.constant 0 : i32
    %c0_i32_1 = arith.constant 0 : i32
    return %c0_i32, %c0_i32_0 : i32, i32
  }
  func.func @transform_2(%arg0: i32) -> (i32, i32) {
    %c0_i32 = arith.constant 0 : i32
    %c0_i32_0 = arith.constant 0 : i32
    %c0_i32_1 = arith.constant 0 : i32
    return %c0_i32, %c0_i32_0 : i32, i32
  }
  func.func @transform_3(%arg0: i32) -> (i32, i32) {
    %c0_i32 = arith.constant 0 : i32
    %c0_i32_0 = arith.constant 0 : i32
    return %arg0, %c0_i32 : i32, i32
  }
}

module attributes {stable_mosaic.version = 11 : i64} {
  func.func @_self_attn_kernel(%arg0: i32, %arg1: memref<1x8x96xbf16, #tpu.memory_space<vmem>>, %arg2: memref<8x8xf32, #tpu.memory_space<vmem>>, %arg3: memref<1x1x8xf32, #tpu.memory_space<vmem>>, %arg4: memref<1x8x32xbf16, #tpu.memory_space<vmem>>) attributes {dimension_semantics = [#tpu.dimension_semantics<parallel>], iteration_bounds = array<i64: 2>, scalar_prefetch = 0 : i64, scratch_operands = 0 : i64, tpu.core_type = #tpu.core_type<tc>, window_params = [{transform_indices = @transform_0, window_bounds = array<i64: 1, 8, 96>}, {pipeline_mode = #tpu.pipeline_mode<synchronous>, transform_indices = @transform_1, window_bounds = array<i64: 8, 8>}, {transform_indices = @transform_2, window_bounds = array<i64: 1, 1, 8>}, {transform_indices = @transform_3, window_bounds = array<i64: 1, 8, 32>}]} {
    %c0 = arith.constant 0 : index
    %c0_0 = arith.constant 0 : index
    %c0_1 = arith.constant 0 : index
    %0 = vector.load %arg1[%c0, %c0_0, %c0_1] : memref<1x8x96xbf16, #tpu.memory_space<vmem>>, vector<1x8x96xbf16>
    %1 = vector.shape_cast %0 : vector<1x8x96xbf16> to vector<8x96xbf16>
    %c0_2 = arith.constant 0 : index
    %c0_3 = arith.constant 0 : index
    %2 = vector.load %arg2[%c0_2, %c0_3] : memref<8x8xf32, #tpu.memory_space<vmem>>, vector<8x8xf32>
    %c0_4 = arith.constant 0 : index
    %c0_5 = arith.constant 0 : index
    %c0_6 = arith.constant 0 : index
    %3 = vector.load %arg3[%c0_4, %c0_5, %c0_6] : memref<1x1x8xf32, #tpu.memory_space<vmem>>, vector<1x1x8xf32>
    %4 = vector.shape_cast %3 : vector<1x1x8xf32> to vector<1x8xf32>
    %5 = vector.broadcast %4 : vector<1x8xf32> to vector<8x8xf32>
    %6 = arith.addf %2, %5 : vector<8x8xf32>
    %7 = vector.extract_strided_slice %1 {offsets = [0, 0], sizes = [8, 8], strides = [1, 1]} : vector<8x96xbf16> to vector<8x8xbf16>
    %8 = vector.extract_strided_slice %1 {offsets = [0, 32], sizes = [8, 8], strides = [1, 1]} : vector<8x96xbf16> to vector<8x8xbf16>
    %9 = vector.extract_strided_slice %1 {offsets = [0, 64], sizes = [8, 8], strides = [1, 1]} : vector<8x96xbf16> to vector<8x8xbf16>
    %10 = tpu.transpose %8, [1, 0] : vector<8x8xbf16> -> vector<8x8xbf16>
    %cst = arith.constant dense<0.000000e+00> : vector<8x8xf32>
    %11 = tpu.matmul %7, %10, %cst {dimension_numbers = #tpu.dot_dimension_numbers<[1], [0], [0], [1], [0, 0, 1, 1], [], []>} : vector<8x8xbf16>, vector<8x8xbf16>, vector<8x8xf32> -> vector<8x8xf32>
    %12 = arith.addf %11, %6 : vector<8x8xf32>
    %cst_7 = arith.constant dense<0xFF800000> : vector<8xf32>
    %13 = vector.multi_reduction <maximumf>, %12, %cst_7 [1] : vector<8x8xf32> to vector<8xf32>
    %14 = vector.shape_cast %13 : vector<8xf32> to vector<8x1xf32>
    %15 = vector.broadcast %14 : vector<8x1xf32> to vector<8x8xf32>
    %16 = arith.subf %12, %15 : vector<8x8xf32>
    %17 = math.exp %16 : vector<8x8xf32>
    %cst_8 = arith.constant dense<0.000000e+00> : vector<8xf32>
    %18 = vector.multi_reduction <add>, %17, %cst_8 [1] : vector<8x8xf32> to vector<8xf32>
    %19 = vector.shape_cast %18 : vector<8xf32> to vector<8x1xf32>
    %20 = vector.broadcast %19 : vector<8x1xf32> to vector<8x8xf32>
    %21 = arith.divf %17, %20 : vector<8x8xf32>
    %22 = arith.truncf %21 : vector<8x8xf32> to vector<8x8xbf16>
    %cst_9 = arith.constant dense<0.000000e+00> : vector<8x8xf32>
    %23 = tpu.matmul %22, %9, %cst_9 {dimension_numbers = #tpu.dot_dimension_numbers<[1], [0], [0], [1], [0, 0, 1, 1], [], []>} : vector<8x8xbf16>, vector<8x8xbf16>, vector<8x8xf32> -> vector<8x8xf32>
    %24 = vector.extract_strided_slice %1 {offsets = [0, 8], sizes = [8, 8], strides = [1, 1]} : vector<8x96xbf16> to vector<8x8xbf16>
    %25 = vector.extract_strided_slice %1 {offsets = [0, 40], sizes = [8, 8], strides = [1, 1]} : vector<8x96xbf16> to vector<8x8xbf16>
    %26 = vector.extract_strided_slice %1 {offsets = [0, 72], sizes = [8, 8], strides = [1, 1]} : vector<8x96xbf16> to vector<8x8xbf16>
    %27 = tpu.transpose %25, [1, 0] : vector<8x8xbf16> -> vector<8x8xbf16>
    %cst_10 = arith.constant dense<0.000000e+00> : vector<8x8xf32>
    %28 = tpu.matmul %24, %27, %cst_10 {dimension_numbers = #tpu.dot_dimension_numbers<[1], [0], [0], [1], [0, 0, 1, 1], [], []>} : vector<8x8xbf16>, vector<8x8xbf16>, vector<8x8xf32> -> vector<8x8xf32>
    %29 = arith.addf %28, %6 : vector<8x8xf32>
    %cst_11 = arith.constant dense<0xFF800000> : vector<8xf32>
    %30 = vector.multi_reduction <maximumf>, %29, %cst_11 [1] : vector<8x8xf32> to vector<8xf32>
    %31 = vector.shape_cast %30 : vector<8xf32> to vector<8x1xf32>
    %32 = vector.broadcast %31 : vector<8x1xf32> to vector<8x8xf32>
    %33 = arith.subf %29, %32 : vector<8x8xf32>
    %34 = math.exp %33 : vector<8x8xf32>
    %cst_12 = arith.constant dense<0.000000e+00> : vector<8xf32>
    %35 = vector.multi_reduction <add>, %34, %cst_12 [1] : vector<8x8xf32> to vector<8xf32>
    %36 = vector.shape_cast %35 : vector<8xf32> to vector<8x1xf32>
    %37 = vector.broadcast %36 : vector<8x1xf32> to vector<8x8xf32>
    %38 = arith.divf %34, %37 : vector<8x8xf32>
    %39 = arith.truncf %38 : vector<8x8xf32> to vector<8x8xbf16>
    %cst_13 = arith.constant dense<0.000000e+00> : vector<8x8xf32>
    %40 = tpu.matmul %39, %26, %cst_13 {dimension_numbers = #tpu.dot_dimension_numbers<[1], [0], [0], [1], [0, 0, 1, 1], [], []>} : vector<8x8xbf16>, vector<8x8xbf16>, vector<8x8xf32> -> vector<8x8xf32>
    %41 = vector.extract_strided_slice %1 {offsets = [0, 16], sizes = [8, 8], strides = [1, 1]} : vector<8x96xbf16> to vector<8x8xbf16>
    %42 = vector.extract_strided_slice %1 {offsets = [0, 48], sizes = [8, 8], strides = [1, 1]} : vector<8x96xbf16> to vector<8x8xbf16>
    %43 = vector.extract_strided_slice %1 {offsets = [0, 80], sizes = [8, 8], strides = [1, 1]} : vector<8x96xbf16> to vector<8x8xbf16>
    %44 = tpu.transpose %42, [1, 0] : vector<8x8xbf16> -> vector<8x8xbf16>
    %cst_14 = arith.constant dense<0.000000e+00> : vector<8x8xf32>
    %45 = tpu.matmul %41, %44, %cst_14 {dimension_numbers = #tpu.dot_dimension_numbers<[1], [0], [0], [1], [0, 0, 1, 1], [], []>} : vector<8x8xbf16>, vector<8x8xbf16>, vector<8x8xf32> -> vector<8x8xf32>
    %46 = arith.addf %45, %6 : vector<8x8xf32>
    %cst_15 = arith.constant dense<0xFF800000> : vector<8xf32>
    %47 = vector.multi_reduction <maximumf>, %46, %cst_15 [1] : vector<8x8xf32> to vector<8xf32>
    %48 = vector.shape_cast %47 : vector<8xf32> to vector<8x1xf32>
    %49 = vector.broadcast %48 : vector<8x1xf32> to vector<8x8xf32>
    %50 = arith.subf %46, %49 : vector<8x8xf32>
    %51 = math.exp %50 : vector<8x8xf32>
    %cst_16 = arith.constant dense<0.000000e+00> : vector<8xf32>
    %52 = vector.multi_reduction <add>, %51, %cst_16 [1] : vector<8x8xf32> to vector<8xf32>
    %53 = vector.shape_cast %52 : vector<8xf32> to vector<8x1xf32>
    %54 = vector.broadcast %53 : vector<8x1xf32> to vector<8x8xf32>
    %55 = arith.divf %51, %54 : vector<8x8xf32>
    %56 = arith.truncf %55 : vector<8x8xf32> to vector<8x8xbf16>
    %cst_17 = arith.constant dense<0.000000e+00> : vector<8x8xf32>
    %57 = tpu.matmul %56, %43, %cst_17 {dimension_numbers = #tpu.dot_dimension_numbers<[1], [0], [0], [1], [0, 0, 1, 1], [], []>} : vector<8x8xbf16>, vector<8x8xbf16>, vector<8x8xf32> -> vector<8x8xf32>
    %58 = vector.extract_strided_slice %1 {offsets = [0, 24], sizes = [8, 8], strides = [1, 1]} : vector<8x96xbf16> to vector<8x8xbf16>
    %59 = vector.extract_strided_slice %1 {offsets = [0, 56], sizes = [8, 8], strides = [1, 1]} : vector<8x96xbf16> to vector<8x8xbf16>
    %60 = vector.extract_strided_slice %1 {offsets = [0, 88], sizes = [8, 8], strides = [1, 1]} : vector<8x96xbf16> to vector<8x8xbf16>
    %61 = tpu.transpose %59, [1, 0] : vector<8x8xbf16> -> vector<8x8xbf16>
    %cst_18 = arith.constant dense<0.000000e+00> : vector<8x8xf32>
    %62 = tpu.matmul %58, %61, %cst_18 {dimension_numbers = #tpu.dot_dimension_numbers<[1], [0], [0], [1], [0, 0, 1, 1], [], []>} : vector<8x8xbf16>, vector<8x8xbf16>, vector<8x8xf32> -> vector<8x8xf32>
    %63 = arith.addf %62, %6 : vector<8x8xf32>
    %cst_19 = arith.constant dense<0xFF800000> : vector<8xf32>
    %64 = vector.multi_reduction <maximumf>, %63, %cst_19 [1] : vector<8x8xf32> to vector<8xf32>
    %65 = vector.shape_cast %64 : vector<8xf32> to vector<8x1xf32>
    %66 = vector.broadcast %65 : vector<8x1xf32> to vector<8x8xf32>
    %67 = arith.subf %63, %66 : vector<8x8xf32>
    %68 = math.exp %67 : vector<8x8xf32>
    %cst_20 = arith.constant dense<0.000000e+00> : vector<8xf32>
    %69 = vector.multi_reduction <add>, %68, %cst_20 [1] : vector<8x8xf32> to vector<8xf32>
    %70 = vector.shape_cast %69 : vector<8xf32> to vector<8x1xf32>
    %71 = vector.broadcast %70 : vector<8x1xf32> to vector<8x8xf32>
    %72 = arith.divf %68, %71 : vector<8x8xf32>
    %73 = arith.truncf %72 : vector<8x8xf32> to vector<8x8xbf16>
    %cst_21 = arith.constant dense<0.000000e+00> : vector<8x8xf32>
    %74 = tpu.matmul %73, %60, %cst_21 {dimension_numbers = #tpu.dot_dimension_numbers<[1], [0], [0], [1], [0, 0, 1, 1], [], []>} : vector<8x8xbf16>, vector<8x8xbf16>, vector<8x8xf32> -> vector<8x8xf32>
    %75 = tpu.concatenate %23, %40, %57, %74 in 1 : vector<8x8xf32>, vector<8x8xf32>, vector<8x8xf32>, vector<8x8xf32> -> vector<8x32xf32>
    %76 = arith.truncf %75 : vector<8x32xf32> to vector<8x32xbf16>
    %c0_22 = arith.constant 0 : index
    %c0_23 = arith.constant 0 : index
    %c0_24 = arith.constant 0 : index
    %77 = vector.load %arg4[%c0_22, %c0_23, %c0_24] : memref<1x8x32xbf16, #tpu.memory_space<vmem>>, vector<1x8x32xbf16>
    %78 = vector.shape_cast %77 : vector<1x8x32xbf16> to vector<8x32xbf16>
    %79 = vector.shape_cast %76 : vector<8x32xbf16> to vector<1x8x32xbf16>
    tpu.vector_store %arg4[%c0_22, %c0_23, %c0_24], %79 {strides = array<i32>} : memref<1x8x32xbf16, #tpu.memory_space<vmem>>, vector<1x8x32xbf16>,
    return
  }
  func.func @transform_0(%arg0: i32) -> (i32, i32, i32) {
    %c0_i32 = arith.constant 0 : i32
    %c0_i32_0 = arith.constant 0 : i32
    %c0_i32_1 = arith.constant 0 : i32
    return %arg0, %c0_i32, %c0_i32_0 : i32, i32, i32
  }
  func.func @transform_1(%arg0: i32) -> (i32, i32) {
    %c0_i32 = arith.constant 0 : i32
    %c0_i32_0 = arith.constant 0 : i32
    %c0_i32_1 = arith.constant 0 : i32
    return %c0_i32, %c0_i32_0 : i32, i32
  }
  func.func @transform_2(%arg0: i32) -> (i32, i32, i32) {
    %c0_i32 = arith.constant 0 : i32
    %c0_i32_0 = arith.constant 0 : i32
    %c0_i32_1 = arith.constant 0 : i32
    return %arg0, %c0_i32, %c0_i32_0 : i32, i32, i32
  }
  func.func @transform_3(%arg0: i32) -> (i32, i32, i32) {
    %c0_i32 = arith.constant 0 : i32
    %c0_i32_0 = arith.constant 0 : i32
    %c0_i32_1 = arith.constant 0 : i32
    return %arg0, %c0_i32, %c0_i32_0 : i32, i32, i32
  }
}

module attributes {stable_mosaic.version = 11 : i64} {
  func.func @_cross_attn_kernel(%arg0: i32, %arg1: memref<1x8x32xbf16, #tpu.memory_space<vmem>>, %arg2: memref<1x10x64xbf16, #tpu.memory_space<vmem>>, %arg3: memref<1x8x32xbf16, #tpu.memory_space<vmem>>, %arg4: memref<1x4x8x10xbf16, #tpu.memory_space<vmem>>) attributes {dimension_semantics = [#tpu.dimension_semantics<parallel>], iteration_bounds = array<i64: 2>, scalar_prefetch = 0 : i64, scratch_operands = 0 : i64, tpu.core_type = #tpu.core_type<tc>, window_params = [{transform_indices = @transform_0, window_bounds = array<i64: 1, 8, 32>}, {transform_indices = @transform_1, window_bounds = array<i64: 1, 10, 64>}, {transform_indices = @transform_2, window_bounds = array<i64: 1, 8, 32>}, {transform_indices = @transform_3, window_bounds = array<i64: 1, 4, 8, 10>}]} {
    %c0 = arith.constant 0 : index
    %c0_0 = arith.constant 0 : index
    %c0_1 = arith.constant 0 : index
    %0 = vector.load %arg1[%c0, %c0_0, %c0_1] : memref<1x8x32xbf16, #tpu.memory_space<vmem>>, vector<1x8x32xbf16>
    %1 = vector.shape_cast %0 : vector<1x8x32xbf16> to vector<8x32xbf16>
    %c0_2 = arith.constant 0 : index
    %c0_3 = arith.constant 0 : index
    %c0_4 = arith.constant 0 : index
    %2 = vector.load %arg2[%c0_2, %c0_3, %c0_4] : memref<1x10x64xbf16, #tpu.memory_space<vmem>>, vector<1x10x64xbf16>
    %3 = vector.shape_cast %2 : vector<1x10x64xbf16> to vector<10x64xbf16>
    %4 = vector.extract_strided_slice %1 {offsets = [0, 0], sizes = [8, 8], strides = [1, 1]} : vector<8x32xbf16> to vector<8x8xbf16>
    %5 = vector.extract_strided_slice %3 {offsets = [0, 0], sizes = [10, 8], strides = [1, 1]} : vector<10x64xbf16> to vector<10x8xbf16>
    %6 = vector.extract_strided_slice %3 {offsets = [0, 32], sizes = [10, 8], strides = [1, 1]} : vector<10x64xbf16> to vector<10x8xbf16>
    %7 = tpu.transpose %5, [1, 0] : vector<10x8xbf16> -> vector<8x10xbf16>
    %cst = arith.constant dense<0.000000e+00> : vector<8x10xf32>
    %8 = tpu.matmul %4, %7, %cst {dimension_numbers = #tpu.dot_dimension_numbers<[1], [0], [0], [1], [0, 0, 1, 1], [], []>} : vector<8x8xbf16>, vector<8x10xbf16>, vector<8x10xf32> -> vector<8x10xf32>
    %cst_5 = arith.constant dense<0xFF800000> : vector<8xf32>
    %9 = vector.multi_reduction <maximumf>, %8, %cst_5 [1] : vector<8x10xf32> to vector<8xf32>
    %10 = vector.shape_cast %9 : vector<8xf32> to vector<8x1xf32>
    %11 = vector.broadcast %10 : vector<8x1xf32> to vector<8x10xf32>
    %12 = arith.subf %8, %11 : vector<8x10xf32>
    %13 = math.exp %12 : vector<8x10xf32>
    %cst_6 = arith.constant dense<0.000000e+00> : vector<8xf32>
    %14 = vector.multi_reduction <add>, %13, %cst_6 [1] : vector<8x10xf32> to vector<8xf32>
    %15 = vector.shape_cast %14 : vector<8xf32> to vector<8x1xf32>
    %16 = vector.broadcast %15 : vector<8x1xf32> to vector<8x10xf32>
    %17 = arith.divf %13, %16 : vector<8x10xf32>
    %18 = arith.truncf %17 : vector<8x10xf32> to vector<8x10xbf16>
    %c0_7 = arith.constant 0 : index
    %c0_8 = arith.constant 0 : index
    %c0_9 = arith.constant 0 : index
    %c0_10 = arith.constant 0 : index
    %19 = vector.load %arg4[%c0_7, %c0_8, %c0_9, %c0_10] : memref<1x4x8x10xbf16, #tpu.memory_space<vmem>>, vector<1x1x8x10xbf16>
    %20 = vector.shape_cast %19 : vector<1x1x8x10xbf16> to vector<8x10xbf16>
    %21 = vector.shape_cast %18 : vector<8x10xbf16> to vector<1x1x8x10xbf16>
    tpu.vector_store %arg4[%c0_7, %c0_8, %c0_9, %c0_10], %21 {strides = array<i32>} : memref<1x4x8x10xbf16, #tpu.memory_space<vmem>>, vector<1x1x8x10xbf16>,
    %22 = arith.truncf %17 : vector<8x10xf32> to vector<8x10xbf16>
    %cst_11 = arith.constant dense<0.000000e+00> : vector<8x8xf32>
    %23 = tpu.matmul %22, %6, %cst_11 {dimension_numbers = #tpu.dot_dimension_numbers<[1], [0], [0], [1], [0, 0, 1, 1], [], []>} : vector<8x10xbf16>, vector<10x8xbf16>, vector<8x8xf32> -> vector<8x8xf32>
    %24 = vector.extract_strided_slice %1 {offsets = [0, 8], sizes = [8, 8], strides = [1, 1]} : vector<8x32xbf16> to vector<8x8xbf16>
    %25 = vector.extract_strided_slice %3 {offsets = [0, 8], sizes = [10, 8], strides = [1, 1]} : vector<10x64xbf16> to vector<10x8xbf16>
    %26 = vector.extract_strided_slice %3 {offsets = [0, 40], sizes = [10, 8], strides = [1, 1]} : vector<10x64xbf16> to vector<10x8xbf16>
    %27 = tpu.transpose %25, [1, 0] : vector<10x8xbf16> -> vector<8x10xbf16>
    %cst_12 = arith.constant dense<0.000000e+00> : vector<8x10xf32>
    %28 = tpu.matmul %24, %27, %cst_12 {dimension_numbers = #tpu.dot_dimension_numbers<[1], [0], [0], [1], [0, 0, 1, 1], [], []>} : vector<8x8xbf16>, vector<8x10xbf16>, vector<8x10xf32> -> vector<8x10xf32>
    %cst_13 = arith.constant dense<0xFF800000> : vector<8xf32>
    %29 = vector.multi_reduction <maximumf>, %28, %cst_13 [1] : vector<8x10xf32> to vector<8xf32>
    %30 = vector.shape_cast %29 : vector<8xf32> to vector<8x1xf32>
    %31 = vector.broadcast %30 : vector<8x1xf32> to vector<8x10xf32>
    %32 = arith.subf %28, %31 : vector<8x10xf32>
    %33 = math.exp %32 : vector<8x10xf32>
    %cst_14 = arith.constant dense<0.000000e+00> : vector<8xf32>
    %34 = vector.multi_reduction <add>, %33, %cst_14 [1] : vector<8x10xf32> to vector<8xf32>
    %35 = vector.shape_cast %34 : vector<8xf32> to vector<8x1xf32>
    %36 = vector.broadcast %35 : vector<8x1xf32> to vector<8x10xf32>
    %37 = arith.divf %33, %36 : vector<8x10xf32>
    %38 = arith.truncf %37 : vector<8x10xf32> to vector<8x10xbf16>
    %c0_15 = arith.constant 0 : index
    %c1 = arith.constant 1 : index
    %c0_16 = arith.constant 0 : index
    %c0_17 = arith.constant 0 : index
    %39 = vector.load %arg4[%c0_15, %c1, %c0_16, %c0_17] : memref<1x4x8x10xbf16, #tpu.memory_space<vmem>>, vector<1x1x8x10xbf16>
    %40 = vector.shape_cast %39 : vector<1x1x8x10xbf16> to vector<8x10xbf16>
    %41 = vector.shape_cast %38 : vector<8x10xbf16> to vector<1x1x8x10xbf16>
    tpu.vector_store %arg4[%c0_15, %c1, %c0_16, %c0_17], %41 {strides = array<i32>} : memref<1x4x8x10xbf16, #tpu.memory_space<vmem>>, vector<1x1x8x10xbf16>,
    %42 = arith.truncf %37 : vector<8x10xf32> to vector<8x10xbf16>
    %cst_18 = arith.constant dense<0.000000e+00> : vector<8x8xf32>
    %43 = tpu.matmul %42, %26, %cst_18 {dimension_numbers = #tpu.dot_dimension_numbers<[1], [0], [0], [1], [0, 0, 1, 1], [], []>} : vector<8x10xbf16>, vector<10x8xbf16>, vector<8x8xf32> -> vector<8x8xf32>
    %44 = vector.extract_strided_slice %1 {offsets = [0, 16], sizes = [8, 8], strides = [1, 1]} : vector<8x32xbf16> to vector<8x8xbf16>
    %45 = vector.extract_strided_slice %3 {offsets = [0, 16], sizes = [10, 8], strides = [1, 1]} : vector<10x64xbf16> to vector<10x8xbf16>
    %46 = vector.extract_strided_slice %3 {offsets = [0, 48], sizes = [10, 8], strides = [1, 1]} : vector<10x64xbf16> to vector<10x8xbf16>
    %47 = tpu.transpose %45, [1, 0] : vector<10x8xbf16> -> vector<8x10xbf16>
    %cst_19 = arith.constant dense<0.000000e+00> : vector<8x10xf32>
    %48 = tpu.matmul %44, %47, %cst_19 {dimension_numbers = #tpu.dot_dimension_numbers<[1], [0], [0], [1], [0, 0, 1, 1], [], []>} : vector<8x8xbf16>, vector<8x10xbf16>, vector<8x10xf32> -> vector<8x10xf32>
    %cst_20 = arith.constant dense<0xFF800000> : vector<8xf32>
    %49 = vector.multi_reduction <maximumf>, %48, %cst_20 [1] : vector<8x10xf32> to vector<8xf32>
    %50 = vector.shape_cast %49 : vector<8xf32> to vector<8x1xf32>
    %51 = vector.broadcast %50 : vector<8x1xf32> to vector<8x10xf32>
    %52 = arith.subf %48, %51 : vector<8x10xf32>
    %53 = math.exp %52 : vector<8x10xf32>
    %cst_21 = arith.constant dense<0.000000e+00> : vector<8xf32>
    %54 = vector.multi_reduction <add>, %53, %cst_21 [1] : vector<8x10xf32> to vector<8xf32>
    %55 = vector.shape_cast %54 : vector<8xf32> to vector<8x1xf32>
    %56 = vector.broadcast %55 : vector<8x1xf32> to vector<8x10xf32>
    %57 = arith.divf %53, %56 : vector<8x10xf32>
    %58 = arith.truncf %57 : vector<8x10xf32> to vector<8x10xbf16>
    %c0_22 = arith.constant 0 : index
    %c2 = arith.constant 2 : index
    %c0_23 = arith.constant 0 : index
    %c0_24 = arith.constant 0 : index
    %59 = vector.load %arg4[%c0_22, %c2, %c0_23, %c0_24] : memref<1x4x8x10xbf16, #tpu.memory_space<vmem>>, vector<1x1x8x10xbf16>
    %60 = vector.shape_cast %59 : vector<1x1x8x10xbf16> to vector<8x10xbf16>
    %61 = vector.shape_cast %58 : vector<8x10xbf16> to vector<1x1x8x10xbf16>
    tpu.vector_store %arg4[%c0_22, %c2, %c0_23, %c0_24], %61 {strides = array<i32>} : memref<1x4x8x10xbf16, #tpu.memory_space<vmem>>, vector<1x1x8x10xbf16>,
    %62 = arith.truncf %57 : vector<8x10xf32> to vector<8x10xbf16>
    %cst_25 = arith.constant dense<0.000000e+00> : vector<8x8xf32>
    %63 = tpu.matmul %62, %46, %cst_25 {dimension_numbers = #tpu.dot_dimension_numbers<[1], [0], [0], [1], [0, 0, 1, 1], [], []>} : vector<8x10xbf16>, vector<10x8xbf16>, vector<8x8xf32> -> vector<8x8xf32>
    %64 = vector.extract_strided_slice %1 {offsets = [0, 24], sizes = [8, 8], strides = [1, 1]} : vector<8x32xbf16> to vector<8x8xbf16>
    %65 = vector.extract_strided_slice %3 {offsets = [0, 24], sizes = [10, 8], strides = [1, 1]} : vector<10x64xbf16> to vector<10x8xbf16>
    %66 = vector.extract_strided_slice %3 {offsets = [0, 56], sizes = [10, 8], strides = [1, 1]} : vector<10x64xbf16> to vector<10x8xbf16>
    %67 = tpu.transpose %65, [1, 0] : vector<10x8xbf16> -> vector<8x10xbf16>
    %cst_26 = arith.constant dense<0.000000e+00> : vector<8x10xf32>
    %68 = tpu.matmul %64, %67, %cst_26 {dimension_numbers = #tpu.dot_dimension_numbers<[1], [0], [0], [1], [0, 0, 1, 1], [], []>} : vector<8x8xbf16>, vector<8x10xbf16>, vector<8x10xf32> -> vector<8x10xf32>
    %cst_27 = arith.constant dense<0xFF800000> : vector<8xf32>
    %69 = vector.multi_reduction <maximumf>, %68, %cst_27 [1] : vector<8x10xf32> to vector<8xf32>
    %70 = vector.shape_cast %69 : vector<8xf32> to vector<8x1xf32>
    %71 = vector.broadcast %70 : vector<8x1xf32> to vector<8x10xf32>
    %72 = arith.subf %68, %71 : vector<8x10xf32>
    %73 = math.exp %72 : vector<8x10xf32>
    %cst_28 = arith.constant dense<0.000000e+00> : vector<8xf32>
    %74 = vector.multi_reduction <add>, %73, %cst_28 [1] : vector<8x10xf32> to vector<8xf32>
    %75 = vector.shape_cast %74 : vector<8xf32> to vector<8x1xf32>
    %76 = vector.broadcast %75 : vector<8x1xf32> to vector<8x10xf32>
    %77 = arith.divf %73, %76 : vector<8x10xf32>
    %78 = arith.truncf %77 : vector<8x10xf32> to vector<8x10xbf16>
    %c0_29 = arith.constant 0 : index
    %c3 = arith.constant 3 : index
    %c0_30 = arith.constant 0 : index
    %c0_31 = arith.constant 0 : index
    %79 = vector.load %arg4[%c0_29, %c3, %c0_30, %c0_31] : memref<1x4x8x10xbf16, #tpu.memory_space<vmem>>, vector<1x1x8x10xbf16>
    %80 = vector.shape_cast %79 : vector<1x1x8x10xbf16> to vector<8x10xbf16>
    %81 = vector.shape_cast %78 : vector<8x10xbf16> to vector<1x1x8x10xbf16>
    tpu.vector_store %arg4[%c0_29, %c3, %c0_30, %c0_31], %81 {strides = array<i32>} : memref<1x4x8x10xbf16, #tpu.memory_space<vmem>>, vector<1x1x8x10xbf16>,
    %82 = arith.truncf %77 : vector<8x10xf32> to vector<8x10xbf16>
    %cst_32 = arith.constant dense<0.000000e+00> : vector<8x8xf32>
    %83 = tpu.matmul %82, %66, %cst_32 {dimension_numbers = #tpu.dot_dimension_numbers<[1], [0], [0], [1], [0, 0, 1, 1], [], []>} : vector<8x10xbf16>, vector<10x8xbf16>, vector<8x8xf32> -> vector<8x8xf32>
    %84 = tpu.concatenate %23, %43, %63, %83 in 1 : vector<8x8xf32>, vector<8x8xf32>, vector<8x8xf32>, vector<8x8xf32> -> vector<8x32xf32>
    %85 = arith.truncf %84 : vector<8x32xf32> to vector<8x32xbf16>
    %c0_33 = arith.constant 0 : index
    %c0_34 = arith.constant 0 : index
    %c0_35 = arith.constant 0 : index
    %86 = vector.load %arg3[%c0_33, %c0_34, %c0_35] : memref<1x8x32xbf16, #tpu.memory_space<vmem>>, vector<1x8x32xbf16>
    %87 = vector.shape_cast %86 : vector<1x8x32xbf16> to vector<8x32xbf16>
    %88 = vector.shape_cast %85 : vector<8x32xbf16> to vector<1x8x32xbf16>
    tpu.vector_store %arg3[%c0_33, %c0_34, %c0_35], %88 {strides = array<i32>} : memref<1x8x32xbf16, #tpu.memory_space<vmem>>, vector<1x8x32xbf16>,
    return
  }
  func.func @transform_0(%arg0: i32) -> (i32, i32, i32) {
    %c0_i32 = arith.constant 0 : i32
    %c0_i32_0 = arith.constant 0 : i32
    %c0_i32_1 = arith.constant 0 : i32
    return %arg0, %c0_i32, %c0_i32_0 : i32, i32, i32
  }
  func.func @transform_1(%arg0: i32) -> (i32, i32, i32) {
    %c0_i32 = arith.constant 0 : i32
    %c0_i32_0 = arith.constant 0 : i32
    %c0_i32_1 = arith.constant 0 : i32
    return %arg0, %c0_i32, %c0_i32_0 : i32, i32, i32
  }
  func.func @transform_2(%arg0: i32) -> (i32, i32, i32) {
    %c0_i32 = arith.constant 0 : i32
    %c0_i32_0 = arith.constant 0 : i32
    %c0_i32_1 = arith.constant 0 : i32
    return %arg0, %c0_i32, %c0_i32_0 : i32, i32, i32
  }
  func.func @transform_3(%arg0: i32) -> (i32, i32, i32, i32) {
    %c0_i32 = arith.constant 0 : i32
    %c0_i32_0 = arith.constant 0 : i32
    %c0_i32_1 = arith.constant 0 : i32
    %c0_i32_2 = arith.constant 0 : i32
    return %arg0, %c0_i32, %c0_i32_0, %c0_i32_1 : i32, i32, i32, i32
  }
}

module attributes {stable_mosaic.version = 11 : i64} {
  func.func @_proj_add_ln_kernel(%arg0: i32, %arg1: memref<16x32xbf16, #tpu.memory_space<vmem>>, %arg2: memref<32x32xbf16, #tpu.memory_space<vmem>>, %arg3: memref<1x32xf32, #tpu.memory_space<vmem>>, %arg4: memref<16x32xbf16, #tpu.memory_space<vmem>>, %arg5: memref<1x32xf32, #tpu.memory_space<vmem>>, %arg6: memref<1x32xf32, #tpu.memory_space<vmem>>, %arg7: memref<16x32xbf16, #tpu.memory_space<vmem>>) attributes {dimension_semantics = [#tpu.dimension_semantics<parallel>], iteration_bounds = array<i64: 1>, scalar_prefetch = 0 : i64, scratch_operands = 0 : i64, tpu.core_type = #tpu.core_type<tc>, window_params = [{transform_indices = @transform_0, window_bounds = array<i64: 16, 32>}, {pipeline_mode = #tpu.pipeline_mode<synchronous>, transform_indices = @transform_1, window_bounds = array<i64: 32, 32>}, {pipeline_mode = #tpu.pipeline_mode<synchronous>, transform_indices = @transform_2, window_bounds = array<i64: 1, 32>}, {transform_indices = @transform_3, window_bounds = array<i64: 16, 32>}, {pipeline_mode = #tpu.pipeline_mode<synchronous>, transform_indices = @transform_4, window_bounds = array<i64: 1, 32>}, {pipeline_mode = #tpu.pipeline_mode<synchronous>, transform_indices = @transform_5, window_bounds = array<i64: 1, 32>}, {transform_indices = @transform_6, window_bounds = array<i64: 16, 32>}]} {
    %c0 = arith.constant 0 : index
    %c0_0 = arith.constant 0 : index
    %0 = vector.load %arg1[%c0, %c0_0] : memref<16x32xbf16, #tpu.memory_space<vmem>>, vector<16x32xbf16>
    %c0_1 = arith.constant 0 : index
    %c0_2 = arith.constant 0 : index
    %1 = vector.load %arg2[%c0_1, %c0_2] : memref<32x32xbf16, #tpu.memory_space<vmem>>, vector<32x32xbf16>
    %cst = arith.constant dense<0.000000e+00> : vector<16x32xf32>
    %2 = tpu.matmul %0, %1, %cst {dimension_numbers = #tpu.dot_dimension_numbers<[1], [0], [0], [1], [0, 0, 1, 1], [], []>} : vector<16x32xbf16>, vector<32x32xbf16>, vector<16x32xf32> -> vector<16x32xf32>
    %c0_3 = arith.constant 0 : index
    %c0_4 = arith.constant 0 : index
    %3 = vector.load %arg3[%c0_3, %c0_4] : memref<1x32xf32, #tpu.memory_space<vmem>>, vector<1x32xf32>
    %4 = vector.broadcast %3 : vector<1x32xf32> to vector<16x32xf32>
    %5 = arith.addf %2, %4 : vector<16x32xf32>
    %c0_5 = arith.constant 0 : index
    %c0_6 = arith.constant 0 : index
    %6 = vector.load %arg4[%c0_5, %c0_6] : memref<16x32xbf16, #tpu.memory_space<vmem>>, vector<16x32xbf16>
    %7 = arith.extf %6 : vector<16x32xbf16> to vector<16x32xf32>
    %8 = arith.addf %5, %7 : vector<16x32xf32>
    %cst_7 = arith.constant dense<0.000000e+00> : vector<16xf32>
    %9 = vector.multi_reduction <add>, %8, %cst_7 [1] : vector<16x32xf32> to vector<16xf32>
    %10 = vector.shape_cast %9 : vector<16xf32> to vector<16x1xf32>
    %cst_8 = arith.constant 3.200000e+01 : f32
    %11 = vector.broadcast %cst_8 : f32 to vector<16x1xf32>
    %12 = arith.divf %10, %11 : vector<16x1xf32>
    %13 = vector.broadcast %12 : vector<16x1xf32> to vector<16x32xf32>
    %14 = arith.subf %8, %13 : vector<16x32xf32>
    %15 = arith.mulf %14, %14 : vector<16x32xf32>
    %cst_9 = arith.constant dense<0.000000e+00> : vector<16xf32>
    %16 = vector.multi_reduction <add>, %15, %cst_9 [1] : vector<16x32xf32> to vector<16xf32>
    %17 = vector.shape_cast %16 : vector<16xf32> to vector<16x1xf32>
    %cst_10 = arith.constant 3.200000e+01 : f32
    %18 = vector.broadcast %cst_10 : f32 to vector<16x1xf32>
    %19 = arith.divf %17, %18 : vector<16x1xf32>
    %20 = vector.broadcast %12 : vector<16x1xf32> to vector<16x32xf32>
    %21 = arith.subf %8, %20 : vector<16x32xf32>
    %cst_11 = arith.constant 9.99999974E-6 : f32
    %22 = vector.broadcast %cst_11 : f32 to vector<16x1xf32>
    %23 = arith.addf %19, %22 : vector<16x1xf32>
    %24 = math.rsqrt %23 : vector<16x1xf32>
    %25 = vector.broadcast %24 : vector<16x1xf32> to vector<16x32xf32>
    %26 = arith.mulf %21, %25 : vector<16x32xf32>
    %c0_12 = arith.constant 0 : index
    %c0_13 = arith.constant 0 : index
    %27 = vector.load %arg5[%c0_12, %c0_13] : memref<1x32xf32, #tpu.memory_space<vmem>>, vector<1x32xf32>
    %28 = vector.broadcast %27 : vector<1x32xf32> to vector<16x32xf32>
    %29 = arith.mulf %26, %28 : vector<16x32xf32>
    %c0_14 = arith.constant 0 : index
    %c0_15 = arith.constant 0 : index
    %30 = vector.load %arg6[%c0_14, %c0_15] : memref<1x32xf32, #tpu.memory_space<vmem>>, vector<1x32xf32>
    %31 = vector.broadcast %30 : vector<1x32xf32> to vector<16x32xf32>
    %32 = arith.addf %29, %31 : vector<16x32xf32>
    %33 = arith.truncf %32 : vector<16x32xf32> to vector<16x32xbf16>
    %c0_16 = arith.constant 0 : index
    %c0_17 = arith.constant 0 : index
    %34 = vector.load %arg7[%c0_16, %c0_17] : memref<16x32xbf16, #tpu.memory_space<vmem>>, vector<16x32xbf16>
    tpu.vector_store %arg7[%c0_16, %c0_17], %33 {strides = array<i32>} : memref<16x32xbf16, #tpu.memory_space<vmem>>, vector<16x32xbf16>,
    return
  }
  func.func @transform_0(%arg0: i32) -> (i32, i32) {
    %c0_i32 = arith.constant 0 : i32
    %c0_i32_0 = arith.constant 0 : i32
    return %arg0, %c0_i32 : i32, i32
  }
  func.func @transform_1(%arg0: i32) -> (i32, i32) {
    %c0_i32 = arith.constant 0 : i32
    %c0_i32_0 = arith.constant 0 : i32
    %c0_i32_1 = arith.constant 0 : i32
    return %c0_i32, %c0_i32_0 : i32, i32
  }
  func.func @transform_2(%arg0: i32) -> (i32, i32) {
    %c0_i32 = arith.constant 0 : i32
    %c0_i32_0 = arith.constant 0 : i32
    %c0_i32_1 = arith.constant 0 : i32
    return %c0_i32, %c0_i32_0 : i32, i32
  }
  func.func @transform_3(%arg0: i32) -> (i32, i32) {
    %c0_i32 = arith.constant 0 : i32
    %c0_i32_0 = arith.constant 0 : i32
    return %arg0, %c0_i32 : i32, i32
  }
  func.func @transform_4(%arg0: i32) -> (i32, i32) {
    %c0_i32 = arith.constant 0 : i32
    %c0_i32_0 = arith.constant 0 : i32
    %c0_i32_1 = arith.constant 0 : i32
    return %c0_i32, %c0_i32_0 : i32, i32
  }
  func.func @transform_5(%arg0: i32) -> (i32, i32) {
    %c0_i32 = arith.constant 0 : i32
    %c0_i32_0 = arith.constant 0 : i32
    %c0_i32_1 = arith.constant 0 : i32
    return %c0_i32, %c0_i32_0 : i32, i32
  }
  func.func @transform_6(%arg0: i32) -> (i32, i32) {
    %c0_i32 = arith.constant 0 : i32
    %c0_i32_0 = arith.constant 0 : i32
    return %arg0, %c0_i32 : i32, i32
  }
}

module attributes {stable_mosaic.version = 11 : i64} {
  func.func @_proj_kernel(%arg0: i32, %arg1: memref<24x32xf32, #tpu.memory_space<vmem>>, %arg2: memref<32x64xbf16, #tpu.memory_space<vmem>>, %arg3: memref<1x64xf32, #tpu.memory_space<vmem>>, %arg4: memref<24x64xbf16, #tpu.memory_space<vmem>>) attributes {dimension_semantics = [#tpu.dimension_semantics<parallel>], iteration_bounds = array<i64: 1>, scalar_prefetch = 0 : i64, scratch_operands = 0 : i64, tpu.core_type = #tpu.core_type<tc>, window_params = [{transform_indices = @transform_0, window_bounds = array<i64: 24, 32>}, {pipeline_mode = #tpu.pipeline_mode<synchronous>, transform_indices = @transform_1, window_bounds = array<i64: 32, 64>}, {pipeline_mode = #tpu.pipeline_mode<synchronous>, transform_indices = @transform_2, window_bounds = array<i64: 1, 64>}, {transform_indices = @transform_3, window_bounds = array<i64: 24, 64>}]} {
    %c0 = arith.constant 0 : index
    %c0_0 = arith.constant 0 : index
    %0 = vector.load %arg1[%c0, %c0_0] : memref<24x32xf32, #tpu.memory_space<vmem>>, vector<24x32xf32>
    %1 = arith.truncf %0 : vector<24x32xf32> to vector<24x32xbf16>
    %c0_1 = arith.constant 0 : index
    %c0_2 = arith.constant 0 : index
    %2 = vector.load %arg2[%c0_1, %c0_2] : memref<32x64xbf16, #tpu.memory_space<vmem>>, vector<32x64xbf16>
    %cst = arith.constant dense<0.000000e+00> : vector<24x64xf32>
    %3 = tpu.matmul %1, %2, %cst {dimension_numbers = #tpu.dot_dimension_numbers<[1], [0], [0], [1], [0, 0, 1, 1], [], []>} : vector<24x32xbf16>, vector<32x64xbf16>, vector<24x64xf32> -> vector<24x64xf32>
    %c0_3 = arith.constant 0 : index
    %c0_4 = arith.constant 0 : index
    %4 = vector.load %arg3[%c0_3, %c0_4] : memref<1x64xf32, #tpu.memory_space<vmem>>, vector<1x64xf32>
    %5 = vector.broadcast %4 : vector<1x64xf32> to vector<24x64xf32>
    %6 = arith.addf %3, %5 : vector<24x64xf32>
    %7 = arith.truncf %6 : vector<24x64xf32> to vector<24x64xbf16>
    %c0_5 = arith.constant 0 : index
    %c0_6 = arith.constant 0 : index
    %8 = vector.load %arg4[%c0_5, %c0_6] : memref<24x64xbf16, #tpu.memory_space<vmem>>, vector<24x64xbf16>
    tpu.vector_store %arg4[%c0_5, %c0_6], %7 {strides = array<i32>} : memref<24x64xbf16, #tpu.memory_space<vmem>>, vector<24x64xbf16>,
    return
  }
  func.func @transform_0(%arg0: i32) -> (i32, i32) {
    %c0_i32 = arith.constant 0 : i32
    %c0_i32_0 = arith.constant 0 : i32
    return %arg0, %c0_i32 : i32, i32
  }
  func.func @transform_1(%arg0: i32) -> (i32, i32) {
    %c0_i32 = arith.constant 0 : i32
    %c0_i32_0 = arith.constant 0 : i32
    %c0_i32_1 = arith.constant 0 : i32
    return %c0_i32, %c0_i32_0 : i32, i32
  }
  func.func @transform_2(%arg0: i32) -> (i32, i32) {
    %c0_i32 = arith.constant 0 : i32
    %c0_i32_0 = arith.constant 0 : i32
    %c0_i32_1 = arith.constant 0 : i32
    return %c0_i32, %c0_i32_0 : i32, i32
  }
  func.func @transform_3(%arg0: i32) -> (i32, i32) {
    %c0_i32 = arith.constant 0 : i32
    %c0_i32_0 = arith.constant 0 : i32
    return %arg0, %c0_i32 : i32, i32
  }
}

module attributes {stable_mosaic.version = 11 : i64} {
  func.func @_ffn_add_ln_kernel(%arg0: i32, %arg1: memref<16x32xbf16, #tpu.memory_space<vmem>>, %arg2: memref<32x64xbf16, #tpu.memory_space<vmem>>, %arg3: memref<1x64xf32, #tpu.memory_space<vmem>>, %arg4: memref<64x32xbf16, #tpu.memory_space<vmem>>, %arg5: memref<1x32xf32, #tpu.memory_space<vmem>>, %arg6: memref<1x32xf32, #tpu.memory_space<vmem>>, %arg7: memref<1x32xf32, #tpu.memory_space<vmem>>, %arg8: memref<16x32xf32, #tpu.memory_space<vmem>>) attributes {dimension_semantics = [#tpu.dimension_semantics<parallel>], iteration_bounds = array<i64: 1>, scalar_prefetch = 0 : i64, scratch_operands = 0 : i64, tpu.core_type = #tpu.core_type<tc>, window_params = [{transform_indices = @transform_0, window_bounds = array<i64: 16, 32>}, {pipeline_mode = #tpu.pipeline_mode<synchronous>, transform_indices = @transform_1, window_bounds = array<i64: 32, 64>}, {pipeline_mode = #tpu.pipeline_mode<synchronous>, transform_indices = @transform_2, window_bounds = array<i64: 1, 64>}, {pipeline_mode = #tpu.pipeline_mode<synchronous>, transform_indices = @transform_3, window_bounds = array<i64: 64, 32>}, {pipeline_mode = #tpu.pipeline_mode<synchronous>, transform_indices = @transform_4, window_bounds = array<i64: 1, 32>}, {pipeline_mode = #tpu.pipeline_mode<synchronous>, transform_indices = @transform_5, window_bounds = array<i64: 1, 32>}, {pipeline_mode = #tpu.pipeline_mode<synchronous>, transform_indices = @transform_6, window_bounds = array<i64: 1, 32>}, {transform_indices = @transform_7, window_bounds = array<i64: 16, 32>}]} {
    %c0 = arith.constant 0 : index
    %c0_0 = arith.constant 0 : index
    %0 = vector.load %arg1[%c0, %c0_0] : memref<16x32xbf16, #tpu.memory_space<vmem>>, vector<16x32xbf16>
    %c0_1 = arith.constant 0 : index
    %c0_2 = arith.constant 0 : index
    %1 = vector.load %arg2[%c0_1, %c0_2] : memref<32x64xbf16, #tpu.memory_space<vmem>>, vector<32x64xbf16>
    %cst = arith.constant dense<0.000000e+00> : vector<16x64xf32>
    %2 = tpu.matmul %0, %1, %cst {dimension_numbers = #tpu.dot_dimension_numbers<[1], [0], [0], [1], [0, 0, 1, 1], [], []>} : vector<16x32xbf16>, vector<32x64xbf16>, vector<16x64xf32> -> vector<16x64xf32>
    %c0_3 = arith.constant 0 : index
    %c0_4 = arith.constant 0 : index
    %3 = vector.load %arg3[%c0_3, %c0_4] : memref<1x64xf32, #tpu.memory_space<vmem>>, vector<1x64xf32>
    %4 = vector.broadcast %3 : vector<1x64xf32> to vector<16x64xf32>
    %5 = arith.addf %2, %4 : vector<16x64xf32>
    %cst_5 = arith.constant 0.000000e+00 : f32
    %6 = vector.broadcast %cst_5 : f32 to vector<16x64xf32>
    %7 = arith.maximumf %5, %6 : vector<16x64xf32>
    %8 = arith.truncf %7 : vector<16x64xf32> to vector<16x64xbf16>
    %c0_6 = arith.constant 0 : index
    %c0_7 = arith.constant 0 : index
    %9 = vector.load %arg4[%c0_6, %c0_7] : memref<64x32xbf16, #tpu.memory_space<vmem>>, vector<64x32xbf16>
    %cst_8 = arith.constant dense<0.000000e+00> : vector<16x32xf32>
    %10 = tpu.matmul %8, %9, %cst_8 {dimension_numbers = #tpu.dot_dimension_numbers<[1], [0], [0], [1], [0, 0, 1, 1], [], []>} : vector<16x64xbf16>, vector<64x32xbf16>, vector<16x32xf32> -> vector<16x32xf32>
    %c0_9 = arith.constant 0 : index
    %c0_10 = arith.constant 0 : index
    %11 = vector.load %arg5[%c0_9, %c0_10] : memref<1x32xf32, #tpu.memory_space<vmem>>, vector<1x32xf32>
    %12 = vector.broadcast %11 : vector<1x32xf32> to vector<16x32xf32>
    %13 = arith.addf %10, %12 : vector<16x32xf32>
    %14 = arith.extf %0 : vector<16x32xbf16> to vector<16x32xf32>
    %15 = arith.addf %13, %14 : vector<16x32xf32>
    %cst_11 = arith.constant dense<0.000000e+00> : vector<16xf32>
    %16 = vector.multi_reduction <add>, %15, %cst_11 [1] : vector<16x32xf32> to vector<16xf32>
    %17 = vector.shape_cast %16 : vector<16xf32> to vector<16x1xf32>
    %cst_12 = arith.constant 3.200000e+01 : f32
    %18 = vector.broadcast %cst_12 : f32 to vector<16x1xf32>
    %19 = arith.divf %17, %18 : vector<16x1xf32>
    %20 = vector.broadcast %19 : vector<16x1xf32> to vector<16x32xf32>
    %21 = arith.subf %15, %20 : vector<16x32xf32>
    %22 = arith.mulf %21, %21 : vector<16x32xf32>
    %cst_13 = arith.constant dense<0.000000e+00> : vector<16xf32>
    %23 = vector.multi_reduction <add>, %22, %cst_13 [1] : vector<16x32xf32> to vector<16xf32>
    %24 = vector.shape_cast %23 : vector<16xf32> to vector<16x1xf32>
    %cst_14 = arith.constant 3.200000e+01 : f32
    %25 = vector.broadcast %cst_14 : f32 to vector<16x1xf32>
    %26 = arith.divf %24, %25 : vector<16x1xf32>
    %27 = vector.broadcast %19 : vector<16x1xf32> to vector<16x32xf32>
    %28 = arith.subf %15, %27 : vector<16x32xf32>
    %cst_15 = arith.constant 9.99999974E-6 : f32
    %29 = vector.broadcast %cst_15 : f32 to vector<16x1xf32>
    %30 = arith.addf %26, %29 : vector<16x1xf32>
    %31 = math.rsqrt %30 : vector<16x1xf32>
    %32 = vector.broadcast %31 : vector<16x1xf32> to vector<16x32xf32>
    %33 = arith.mulf %28, %32 : vector<16x32xf32>
    %c0_16 = arith.constant 0 : index
    %c0_17 = arith.constant 0 : index
    %34 = vector.load %arg6[%c0_16, %c0_17] : memref<1x32xf32, #tpu.memory_space<vmem>>, vector<1x32xf32>
    %35 = vector.broadcast %34 : vector<1x32xf32> to vector<16x32xf32>
    %36 = arith.mulf %33, %35 : vector<16x32xf32>
    %c0_18 = arith.constant 0 : index
    %c0_19 = arith.constant 0 : index
    %37 = vector.load %arg7[%c0_18, %c0_19] : memref<1x32xf32, #tpu.memory_space<vmem>>, vector<1x32xf32>
    %38 = vector.broadcast %37 : vector<1x32xf32> to vector<16x32xf32>
    %39 = arith.addf %36, %38 : vector<16x32xf32>
    %c0_20 = arith.constant 0 : index
    %c0_21 = arith.constant 0 : index
    %40 = vector.load %arg8[%c0_20, %c0_21] : memref<16x32xf32, #tpu.memory_space<vmem>>, vector<16x32xf32>
    tpu.vector_store %arg8[%c0_20, %c0_21], %39 {strides = array<i32>} : memref<16x32xf32, #tpu.memory_space<vmem>>, vector<16x32xf32>,
    return
  }
  func.func @transform_0(%arg0: i32) -> (i32, i32) {
    %c0_i32 = arith.constant 0 : i32
    %c0_i32_0 = arith.constant 0 : i32
    return %arg0, %c0_i32 : i32, i32
  }
  func.func @transform_1(%arg0: i32) -> (i32, i32) {
    %c0_i32 = arith.constant 0 : i32
    %c0_i32_0 = arith.constant 0 : i32
    %c0_i32_1 = arith.constant 0 : i32
    return %c0_i32, %c0_i32_0 : i32, i32
  }
  func.func @transform_2(%arg0: i32) -> (i32, i32) {
    %c0_i32 = arith.constant 0 : i32
    %c0_i32_0 = arith.constant 0 : i32
    %c0_i32_1 = arith.constant 0 : i32
    return %c0_i32, %c0_i32_0 : i32, i32
  }
  func.func @transform_3(%arg0: i32) -> (i32, i32) {
    %c0_i32 = arith.constant 0 : i32
    %c0_i32_0 = arith.constant 0 : i32
    %c0_i32_1 = arith.constant 0 : i32
    return %c0_i32, %c0_i32_0 : i32, i32
  }
  func.func @transform_4(%arg0: i32) -> (i32, i32) {
    %c0_i32 = arith.constant 0 : i32
    %c0_i32_0 = arith.constant 0 : i32
    %c0_i32_1 = arith.constant 0 : i32
    return %c0_i32, %c0_i32_0 : i32, i32
  }
  func.func @transform_5(%arg0: i32) -> (i32, i32) {
    %c0_i32 = arith.constant 0 : i32
    %c0_i32_0 = arith.constant 0 : i32
    %c0_i32_1 = arith.constant 0 : i32
    return %c0_i32, %c0_i32_0 : i32, i32
  }
  func.func @transform_6(%arg0: i32) -> (i32, i32) {
    %c0_i32 = arith.constant 0 : i32
    %c0_i32_0 = arith.constant 0 : i32
    %c0_i32_1 = arith.constant 0 : i32
    return %c0_i32, %c0_i32_0 : i32, i32
  }
  func.func @transform_7(%arg0: i32) -> (i32, i32) {
    %c0_i32 = arith.constant 0 : i32
    %c0_i32_0 = arith.constant 0 : i32
    return %arg0, %c0_i32 : i32, i32
  }
}

</mosaic_0001>

<llo_original>
// kernel: fwd.10
$region0: #{fwd.10}
  #allocation0 [shape = 'u32[]', space=smem, size = 0x4, offset = 0x4, fixed_abs, tag = 'smem constant byte address 0x4 - core index']
  #allocation1 [shape = 'u32[144,128]{1,0:T(1,128)}', space=vmem, size = 0x12000, scoped, tag = 'internal scratch']
  %s0 = inlined_call_operand.vmem [shape: bf16[16,32], index: 0, kind: input, shape index: {}]
  %s1 = inlined_call_operand.vmem [shape: bf16[32,32], index: 1, kind: input, shape index: {}]
  %s2 = inlined_call_operand.vmem [shape: f32[1,32], index: 2, kind: input, shape index: {}, may-alias: {2,5}]
  %s3 = inlined_call_operand.vmem [shape: f32[16,32], index: 3, kind: input, shape index: {}]
  %s4 = inlined_call_operand.vmem [shape: f32[1,32], index: 4, kind: input, shape index: {}]
  %s5 = inlined_call_operand.vmem [shape: f32[1,32], index: 5, kind: input, shape index: {}, may-alias: {2,5}]
  %s6 = inlined_call_operand.vmem [shape: bf16[16,32], index: 6, kind: output, shape index: {}]
  %s7 = sld [smem:[#allocation0]]
  $region34: #{fwd.10} parent=0
    _
  %s9 = ssub.s32 1, %s7
  %s10 = scalar_select 0, %s9, %s7
  // Predicated region
  $region2: #{fwd.10} parent=0 // pred_check
    _
  $region3: #{fwd.10} parent=0 // pred_check_branch
    %12 = sbr.rel (0) target = $region5
  $region4: #{fwd.10} parent=0 // pred_region
    _
  $region5: #{fwd.10} parent=0 // pred_fallthru
    _
  // Predicated region
  $region6: #{fwd.10} parent=0 // pred_check
    _
  $region7: #{fwd.10} parent=0 // pred_check_branch
    %14 = sbr.rel (0) target = $region9
  $region8: #{fwd.10} parent=0 // pred_region
    _
  $region9: #{fwd.10} parent=0 // pred_fallthru
    _
  // Predicated region
  $region10: #{fwd.10} parent=0 // pred_check
    _
  $region11: #{fwd.10} parent=0 // pred_check_branch
    %16 = sbr.rel (0) target = $region13
  $region12: #{fwd.10} parent=0 // pred_region
    _
  $region13: #{fwd.10} parent=0 // pred_fallthru
    _
  // Predicated region
  $region14: #{fwd.10} parent=0 // pred_check
    _
  $region15: #{fwd.10} parent=0 // pred_check_branch
    %18 = sbr.rel (0) target = $region17
  $region16: #{fwd.10} parent=0 // pred_region
    _
  $region17: #{fwd.10} parent=0 // pred_fallthru
    _
  // Predicated region
  $region18: #{fwd.10} parent=0 // pred_check
    _
  $region19: #{fwd.10} parent=0 // pred_check_branch
    %20 = sbr.rel (0) target = $region21
  $region20: #{fwd.10} parent=0 // pred_region
    _
  $region21: #{fwd.10} parent=0 // pred_fallthru
    _
  // Predicated region
  $region22: #{fwd.10} parent=0 // pred_check
    _
  $region23: #{fwd.10} parent=0 // pred_check_branch
    %22 = sbr.rel (0) target = $region25
  $region24: #{fwd.10} parent=0 // pred_region
    _
  $region25: #{fwd.10} parent=0 // pred_fallthru
    _
  %v24 = vld [vmem:[%s0] sm:$0xf]
  %v25 = vld [vmem:[%s0 + $0x4] sm:$0xf]
  %v26 = vld [vmem:[%s1] sm:$0xf]
  %v27 = vld [vmem:[%s1 + $0x4] sm:$0xf]
  %v28 = vld [vmem:[%s1 + $0x8] sm:$0xf]
  %v29 = vld [vmem:[%s1 + $0xc] sm:$0xf]
  %v30 = vld [vmem:[%s2] sm:$0x1]
  %v32 = vlaneseq
  %v33 = vshrl.u32 %v32, 7
  %v34 = vsub.s32 0, %v33
  %v35 = vrot.slane %v30, %v34
  %v39 = vunpack.c.l.b16 %v24
  %v40 = vunpack.c.l.b16 %v25
  %v41 = vpack.c.b16 %v40, %v39
  %v46 = vunpack.c.l.b16 %v26
  %v47 = vunpack.c.l.b16 %v27
  %v48 = vunpack.c.l.b16 %v28
  %v49 = vunpack.c.l.b16 %v29
  %v50 = vpack.c.b16 %v47, %v46
  %v51 = vpack.c.b16 %v49, %v48
  %vm54 = vcmask 261120
  %v56 = vsel %vm54, %v41, 0
  %58 = vmatprep.subr.bf16.mxu0 0
  %59 = vmatpush1.bf16.msra.mxu0 0
  %60 = vmatprep.subr.bf16.mxu0 0
  %61 = vmatpush1.bf16.msra.mxu0 0
  %62 = vmatprep.subr.bf16.mxu0 0
  %63 = vmatpush1.bf16.msra.mxu0 0
  %64 = vmatprep.subr.bf16.mxu0 0
  %65 = vmatpush1.bf16.msra.mxu0 0
  %66 = vmatprep.subr.bf16.mxu0 0
  %67 = vmatpush1.bf16.msra.mxu0 0
  %68 = vmatprep.subr.bf16.mxu0 0
  %69 = vmatpush1.bf16.msra.mxu0 0
  %70 = vmatprep.subr.bf16.mxu0 0
  %71 = vmatpush1.bf16.msra.mxu0 %v51
  %72 = vmatprep.subr.bf16.mxu0 0
  %73 = vmatpush1.bf16.msra.mxu0 %v50
  %74 = vmatprep.subr.bf16.mxu0 0
  %75 = vmatpush2.bf16.msra.mxu0 0
  %76 = vmatprep.subr.bf16.mxu0 0
  %77 = vmatpush2.bf16.msra.mxu0 0
  %78 = vmatprep.subr.bf16.mxu0 0
  %79 = vmatpush2.bf16.msra.mxu0 0
  %80 = vmatprep.subr.bf16.mxu0 0
  %81 = vmatpush2.bf16.msra.mxu0 0
  %82 = vmatprep.subr.bf16.mxu0 0
  %83 = vmatpush2.bf16.msra.mxu0 0
  %84 = vmatprep.subr.bf16.mxu0 0
  %85 = vmatpush2.bf16.msra.mxu0 0
  %86 = vmatprep.subr.bf16.mxu0 0
  %87 = vmatpush2.bf16.msra.mxu0 0
  %88 = vmatprep.subr.bf16.mxu0 0
  %89 = vmatpush2.bf16.msra.mxu0 0
  %90 = vmatprep.mubr.bf16.mxu0 0
  %91 = vmatmul.mubr.bf16.gmra.mxu0 %v56
  %v92 = vpop.f32.mrf.mxu0
  %v93 = vadd.f32 %v35, %v92
  %v94 = vpop.f32.mrf.mxu0
  %v95 = vpop.f32.mrf.mxu0
  %v96 = vadd.f32 %v35, %v95
  %v97 = vpop.f32.mrf.mxu0
  %98 = vdwg.mxu0
  %v99 = vld [vmem:[%s3] sm:$0xff]
  %v100 = vld [vmem:[%s3 + $0x8] sm:$0xff]
  %v101 = vadd.f32 %v93, %v99
  %v102 = vadd.f32 %v96, %v100
  %v103 = vsel %vm54, %v101, 0.0
  %104 = vadd.xlane.f32.xlu0 %v103
  %v105 = vpop.xlane.xlu0 %104
  %v106 = vsel %vm54, %v102, 0.0
  %107 = vadd.xlane.f32.xlu0 %v106
  %v108 = vpop.xlane.xlu0 %107
  %v109 = vrcp.pop 32.0
  %v110 = vmul.f32 %v105, %v109
  %v111 = vmul.f32 %v108, %v109
  %v112 = vsub.f32 %v101, %v110
  %v113 = vsub.f32 %v102, %v111
  %v114 = vmul.f32 %v112, %v112
  %v115 = vmul.f32 %v113, %v113
  %v116 = vsel %vm54, %v114, 0.0
  %117 = vadd.xlane.f32.xlu0 %v116
  %v118 = vpop.xlane.xlu0 %117
  %v119 = vsel %vm54, %v115, 0.0
  %120 = vadd.xlane.f32.xlu0 %v119
  %v121 = vpop.xlane.xlu0 %120
  %v122 = vmul.f32 %v118, %v109
  %v123 = vmul.f32 %v121, %v109
  %v124 = vadd.f32 %v122, 1e-05
  %v125 = vadd.f32 %v123, 1e-05
  %v126 = vrsqrt.pop %v124
  %v127 = vrsqrt.pop %v125
  %v128 = vmul.f32 %v112, %v126
  %v129 = vmul.f32 %v113, %v127
  %v130 = vld [vmem:[%s4] sm:$0x1]
  %v132 = vlaneseq
  %v133 = vshrl.u32 %v132, 7
  %v134 = vsub.s32 0, %v133
  %v135 = vrot.slane %v130, %v134
  %v137 = vmul.f32 %v128, %v135
  %v138 = vmul.f32 %v129, %v135
  %v139 = vld [vmem:[%s5] sm:$0x1]
  %v141 = vlaneseq
  %v142 = vshrl.u32 %v141, 7
  %v143 = vsub.s32 0, %v142
  %v144 = vrot.slane %v139, %v143
  %v146 = vadd.f32 %v137, %v144
  %v147 = vadd.f32 %v138, %v144
  %v148 = vpack.c.bf16 %v147, %v146
  %v150 = vunpack.c.l.b16 %v148
  %v151 = vunpack.c.h.b16 %v148
  %v152 = vpack.c.b16 %v150, %v150
  %v153 = vpack.c.b16 %v151, %v151
  %vm156 = vcmask 257024
  %157 = vst.msk [vmem:[%s6] sm:$0xf] %vm156, %v152
  %158 = vst.msk [vmem:[%s6 + $0x4] sm:$0xf] %vm156, %v153
  // Predicated region
  $region26: #{fwd.10} parent=0 // pred_check
    _
  $region27: #{fwd.10} parent=0 // pred_check_branch
    %160 = sbr.rel (0) target = $region29
  $region28: #{fwd.10} parent=0 // pred_region
    _
  $region29: #{fwd.10} parent=0 // pred_fallthru
    _
  // Predicated region
  $region30: #{fwd.10} parent=0 // pred_check
    _
  $region31: #{fwd.10} parent=0 // pred_check_branch
    %162 = sbr.rel (0) target = $region33
  $region32: #{fwd.10} parent=0 // pred_region
    _
  $region33: #{fwd.10} parent=0 // pred_fallthru
    _

// kernel: fwd.8
$region0: #{fwd.8}
  #allocation0 [shape = 'u32[]', space=smem, size = 0x4, offset = 0x4, fixed_abs, tag = 'smem constant byte address 0x4 - core index']
  #allocation1 [shape = 'u32[144,128]{1,0:T(1,128)}', space=vmem, size = 0x12000, scoped, tag = 'internal scratch']
  %s0 = inlined_call_operand.vmem [shape: f32[16,32], index: 0, kind: input, shape index: {}]
  %s1 = inlined_call_operand.vmem [shape: bf16[32,96], index: 1, kind: input, shape index: {}]
  %s2 = inlined_call_operand.vmem [shape: f32[1,96], index: 2, kind: input, shape index: {}]
  %s3 = inlined_call_operand.vmem [shape: bf16[16,96], index: 3, kind: output, shape index: {}]
  %s4 = sld [smem:[#allocation0]]
  $region22: #{fwd.8} parent=0
    _
  %s6 = ssub.s32 1, %s4
  %s7 = scalar_select 0, %s6, %s4
  // Predicated region
  $region2: #{fwd.8} parent=0 // pred_check
    _
  $region3: #{fwd.8} parent=0 // pred_check_branch
    %9 = sbr.rel (0) target = $region5
  $region4: #{fwd.8} parent=0 // pred_region
    _
  $region5: #{fwd.8} parent=0 // pred_fallthru
    _
  // Predicated region
  $region6: #{fwd.8} parent=0 // pred_check
    _
  $region7: #{fwd.8} parent=0 // pred_check_branch
    %11 = sbr.rel (0) target = $region9
  $region8: #{fwd.8} parent=0 // pred_region
    _
  $region9: #{fwd.8} parent=0 // pred_fallthru
    _
  // Predicated region
  $region10: #{fwd.8} parent=0 // pred_check
    _
  $region11: #{fwd.8} parent=0 // pred_check_branch
    %13 = sbr.rel (0) target = $region13
  $region12: #{fwd.8} parent=0 // pred_region
    _
  $region13: #{fwd.8} parent=0 // pred_fallthru
    _
  %v15 = vld [vmem:[%s0] sm:$0xff]
  %v16 = vld [vmem:[%s0 + $0x8] sm:$0xff]
  %v17 = vpack.c.bf16 %v16, %v15
  %v18 = vld [vmem:[%s1] sm:$0xf]
  %v19 = vld [vmem:[%s1 + $0x4] sm:$0xf]
  %v20 = vld [vmem:[%s1 + $0x8] sm:$0xf]
  %v21 = vld [vmem:[%s1 + $0xc] sm:$0xf]
  %v22 = vld [vmem:[%s2] sm:$0x1]
  %v24 = vlaneseq
  %v25 = vshrl.u32 %v24, 7
  %v26 = vsub.s32 0, %v25
  %v27 = vrot.slane %v22, %v26
  %v33 = vunpack.c.l.b16 %v18
  %v34 = vunpack.c.l.b16 %v19
  %v35 = vunpack.c.l.b16 %v20
  %v36 = vunpack.c.l.b16 %v21
  %v37 = vpack.c.b16 %v34, %v33
  %v38 = vpack.c.b16 %v36, %v35
  %vm41 = vcmask 261120
  %v43 = vsel %vm41, %v17, 0
  %45 = vmatprep.subr.bf16.mxu0 0
  %46 = vmatpush1.bf16.msra.mxu0 0
  %47 = vmatprep.subr.bf16.mxu0 0
  %48 = vmatpush1.bf16.msra.mxu0 0
  %49 = vmatprep.subr.bf16.mxu0 0
  %50 = vmatpush1.bf16.msra.mxu0 0
  %51 = vmatprep.subr.bf16.mxu0 0
  %52 = vmatpush1.bf16.msra.mxu0 0
  %53 = vmatprep.subr.bf16.mxu0 0
  %54 = vmatpush1.bf16.msra.mxu0 0
  %55 = vmatprep.subr.bf16.mxu0 0
  %56 = vmatpush1.bf16.msra.mxu0 0
  %57 = vmatprep.subr.bf16.mxu0 0
  %58 = vmatpush1.bf16.msra.mxu0 %v38
  %59 = vmatprep.subr.bf16.mxu0 0
  %60 = vmatpush1.bf16.msra.mxu0 %v37
  %61 = vmatprep.subr.bf16.mxu0 0
  %62 = vmatpush2.bf16.msra.mxu0 0
  %63 = vmatprep.subr.bf16.mxu0 0
  %64 = vmatpush2.bf16.msra.mxu0 0
  %65 = vmatprep.subr.bf16.mxu0 0
  %66 = vmatpush2.bf16.msra.mxu0 0
  %67 = vmatprep.subr.bf16.mxu0 0
  %68 = vmatpush2.bf16.msra.mxu0 0
  %69 = vmatprep.subr.bf16.mxu0 0
  %70 = vmatpush2.bf16.msra.mxu0 0
  %71 = vmatprep.subr.bf16.mxu0 0
  %72 = vmatpush2.bf16.msra.mxu0 0
  %73 = vmatprep.subr.bf16.mxu0 0
  %74 = vmatpush2.bf16.msra.mxu0 0
  %75 = vmatprep.subr.bf16.mxu0 0
  %76 = vmatpush2.bf16.msra.mxu0 0
  %77 = vmatprep.mubr.bf16.mxu0 0
  %78 = vmatmul.mubr.bf16.gmra.mxu0 %v43
  %v79 = vpop.f32.mrf.mxu0
  %v80 = vadd.f32 %v27, %v79
  %v81 = vpop.f32.mrf.mxu0
  %v82 = vpop.f32.mrf.mxu0
  %v83 = vadd.f32 %v27, %v82
  %v84 = vpop.f32.mrf.mxu0
  %85 = vdwg.mxu0
  %v86 = vpack.c.bf16 %v83, %v80
  %v88 = vunpack.c.l.b16 %v86
  %v89 = vunpack.c.h.b16 %v86
  %v90 = vpack.c.b16 %v88, %v88
  %v91 = vpack.c.b16 %v89, %v89
  %vm94 = vcmask 781312
  %95 = vst.msk [vmem:[%s3] sm:$0xf] %vm94, %v90
  %96 = vst.msk [vmem:[%s3 + $0x4] sm:$0xf] %vm94, %v91
  // Predicated region
  $region14: #{fwd.8} parent=0 // pred_check
    _
  $region15: #{fwd.8} parent=0 // pred_check_branch
    %98 = sbr.rel (0) target = $region17
  $region16: #{fwd.8} parent=0 // pred_region
    _
  $region17: #{fwd.8} parent=0 // pred_fallthru
    _
  // Predicated region
  $region18: #{fwd.8} parent=0 // pred_check
    _
  $region19: #{fwd.8} parent=0 // pred_check_branch
    %100 = sbr.rel (0) target = $region21
  $region20: #{fwd.8} parent=0 // pred_region
    _
  $region21: #{fwd.8} parent=0 // pred_fallthru
    _

// kernel: fwd.11
$region0: #{fwd.11}
  #allocation0 [shape = 'u32[]', space=smem, size = 0x4, offset = 0x4, fixed_abs, tag = 'smem constant byte address 0x4 - core index']
  #allocation1 [shape = 'u32[144,128]{1,0:T(1,128)}', space=vmem, size = 0x12000, scoped, tag = 'internal scratch']
  %s0 = inlined_call_operand.vmem [shape: bf16[16,32], index: 0, kind: input, shape index: {}]
  %s1 = inlined_call_operand.vmem [shape: bf16[32,32], index: 1, kind: input, shape index: {}]
  %s2 = inlined_call_operand.vmem [shape: f32[1,32], index: 2, kind: input, shape index: {}]
  %s3 = inlined_call_operand.vmem [shape: bf16[16,32], index: 3, kind: output, shape index: {}]
  %s4 = sld [smem:[#allocation0]]
  $region22: #{fwd.11} parent=0
    _
  %s6 = ssub.s32 1, %s4
  %s7 = scalar_select 0, %s6, %s4
  // Predicated region
  $region2: #{fwd.11} parent=0 // pred_check
    _
  $region3: #{fwd.11} parent=0 // pred_check_branch
    %9 = sbr.rel (0) target = $region5
  $region4: #{fwd.11} parent=0 // pred_region
    _
  $region5: #{fwd.11} parent=0 // pred_fallthru
    _
  // Predicated region
  $region6: #{fwd.11} parent=0 // pred_check
    _
  $region7: #{fwd.11} parent=0 // pred_check_branch
    %11 = sbr.rel (0) target = $region9
  $region8: #{fwd.11} parent=0 // pred_region
    _
  $region9: #{fwd.11} parent=0 // pred_fallthru
    _
  // Predicated region
  $region10: #{fwd.11} parent=0 // pred_check
    _
  $region11: #{fwd.11} parent=0 // pred_check_branch
    %13 = sbr.rel (0) target = $region13
  $region12: #{fwd.11} parent=0 // pred_region
    _
  $region13: #{fwd.11} parent=0 // pred_fallthru
    _
  %v15 = vld [vmem:[%s0] sm:$0xf]
  %v16 = vld [vmem:[%s0 + $0x4] sm:$0xf]
  %v17 = vld [vmem:[%s1] sm:$0xf]
  %v18 = vld [vmem:[%s1 + $0x4] sm:$0xf]
  %v19 = vld [vmem:[%s1 + $0x8] sm:$0xf]
  %v20 = vld [vmem:[%s1 + $0xc] sm:$0xf]
  %v21 = vld [vmem:[%s2] sm:$0x1]
  %v23 = vlaneseq
  %v24 = vshrl.u32 %v23, 7
  %v25 = vsub.s32 0, %v24
  %v26 = vrot.slane %v21, %v25
  %v30 = vunpack.c.l.b16 %v15
  %v31 = vunpack.c.l.b16 %v16
  %v32 = vpack.c.b16 %v31, %v30
  %v37 = vunpack.c.l.b16 %v17
  %v38 = vunpack.c.l.b16 %v18
  %v39 = vunpack.c.l.b16 %v19
  %v40 = vunpack.c.l.b16 %v20
  %v41 = vpack.c.b16 %v38, %v37
  %v42 = vpack.c.b16 %v40, %v39
  %vm45 = vcmask 261120
  %v47 = vsel %vm45, %v32, 0
  %49 = vmatprep.subr.bf16.mxu0 0
  %50 = vmatpush1.bf16.msra.mxu0 0
  %51 = vmatprep.subr.bf16.mxu0 0
  %52 = vmatpush1.bf16.msra.mxu0 0
  %53 = vmatprep.subr.bf16.mxu0 0
  %54 = vmatpush1.bf16.msra.mxu0 0
  %55 = vmatprep.subr.bf16.mxu0 0
  %56 = vmatpush1.bf16.msra.mxu0 0
  %57 = vmatprep.subr.bf16.mxu0 0
  %58 = vmatpush1.bf16.msra.mxu0 0
  %59 = vmatprep.subr.bf16.mxu0 0
  %60 = vmatpush1.bf16.msra.mxu0 0
  %61 = vmatprep.subr.bf16.mxu0 0
  %62 = vmatpush1.bf16.msra.mxu0 %v42
  %63 = vmatprep.subr.bf16.mxu0 0
  %64 = vmatpush1.bf16.msra.mxu0 %v41
  %65 = vmatprep.subr.bf16.mxu0 0
  %66 = vmatpush2.bf16.msra.mxu0 0
  %67 = vmatprep.subr.bf16.mxu0 0
  %68 = vmatpush2.bf16.msra.mxu0 0
  %69 = vmatprep.subr.bf16.mxu0 0
  %70 = vmatpush2.bf16.msra.mxu0 0
  %71 = vmatprep.subr.bf16.mxu0 0
  %72 = vmatpush2.bf16.msra.mxu0 0
  %73 = vmatprep.subr.bf16.mxu0 0
  %74 = vmatpush2.bf16.msra.mxu0 0
  %75 = vmatprep.subr.bf16.mxu0 0
  %76 = vmatpush2.bf16.msra.mxu0 0
  %77 = vmatprep.subr.bf16.mxu0 0
  %78 = vmatpush2.bf16.msra.mxu0 0
  %79 = vmatprep.subr.bf16.mxu0 0
  %80 = vmatpush2.bf16.msra.mxu0 0
  %81 = vmatprep.mubr.bf16.mxu0 0
  %82 = vmatmul.mubr.bf16.gmra.mxu0 %v47
  %v83 = vpop.f32.mrf.mxu0
  %v84 = vadd.f32 %v26, %v83
  %v85 = vpop.f32.mrf.mxu0
  %v86 = vpop.f32.mrf.mxu0
  %v87 = vadd.f32 %v26, %v86
  %v88 = vpop.f32.mrf.mxu0
  %89 = vdwg.mxu0
  %v90 = vpack.c.bf16 %v87, %v84
  %v92 = vunpack.c.l.b16 %v90
  %v93 = vunpack.c.h.b16 %v90
  %v94 = vpack.c.b16 %v92, %v92
  %v95 = vpack.c.b16 %v93, %v93
  %vm98 = vcmask 257024
  %99 = vst.msk [vmem:[%s3] sm:$0xf] %vm98, %v94
  %100 = vst.msk [vmem:[%s3 + $0x4] sm:$0xf] %vm98, %v95
  // Predicated region
  $region14: #{fwd.11} parent=0 // pred_check
    _
  $region15: #{fwd.11} parent=0 // pred_check_branch
    %102 = sbr.rel (0) target = $region17
  $region16: #{fwd.11} parent=0 // pred_region
    _
  $region17: #{fwd.11} parent=0 // pred_fallthru
    _
  // Predicated region
  $region18: #{fwd.11} parent=0 // pred_check
    _
  $region19: #{fwd.11} parent=0 // pred_check_branch
    %104 = sbr.rel (0) target = $region21
  $region20: #{fwd.11} parent=0 // pred_region
    _
  $region21: #{fwd.11} parent=0 // pred_fallthru
    _

// kernel: fwd.9
$region0: #{fwd.9}
  #allocation0 [shape = 'u32[]', space=smem, size = 0x4, offset = 0x4, fixed_abs, tag = 'smem constant byte address 0x4 - core index']
  #allocation1 [shape = 'u32[144,128]{1,0:T(1,128)}', space=vmem, size = 0x12000, scoped, tag = 'internal scratch']
  %s0 = inlined_call_operand.vmem [shape: bf16[2,8,96], index: 0, kind: input, shape index: {}]
  %s1 = inlined_call_operand.vmem [shape: f32[8,8], index: 1, kind: input, shape index: {}]
  %s2 = inlined_call_operand.vmem [shape: f32[2,1,8], index: 2, kind: input, shape index: {}]
  %s3 = inlined_call_operand.vmem [shape: bf16[2,8,32], index: 3, kind: output, shape index: {}]
  %s4 = sld [smem:[#allocation0]]
  $region45: #{fwd.9} parent=0
    _
  %s6 = ssub.s32 1, %s4
  %s7 = scalar_select 0, %s6, %s4
  loop: start=0, step=1, limit=4
  $region2: #{fwd.9} parent=0 // loop_pre_header
    _
  $region3: #{fwd.9} parent=0 // loop_header
    %s9 = sphi 0, %s13
    %p10 = scmp.ge.s32.totalorder %s9, 4
    %s19 = sphi 0, %s21
    %s22 = sphi 0, %s19
    %s23 = sphi 0, %s22
    %s39 = sphi 0, %s23
    %s43 = sphi 0, %s43
    %s45 = sphi 0, %s43
    %s46 = sphi 0, %s45
    %s60 = sphi 0, %s46
    %s66 = sphi 0, %s68
    %s69 = sphi 0, %s66
    %s70 = sphi 0, %s69
    %s86 = sphi 0, %s70
    %s92 = sphi 0, %s94
    %s95 = sphi 0, %s92
    %s96 = sphi 0, %s95
    %s112 = sphi 0, %s96
  $region4: #{fwd.9} parent=0 // loop_header_branch
    %12 = sbr.rel (%p10) target = $region8
  $region5: #{fwd.9} parent=0 // loop_body
    %s14 = ssub.s32 %s9, 1
    %s15 = ssub.s32 %s9, 2
    %s16 = sadd.s32 %s9, 1
    %s17 = ssub.s32 %s9, %s16
    %p18 = scmp.eq.s32.totalorder %s17, 0
    %s20 = sadd.s32 %s19, 1
    %s21 = scalar_select %p18, %s19, %s20
    %p24 = pneg %p18
    %p25 = scmp.eq.s32.totalorder %s9, 1
    %p26 = por %p24, %p25
    %p27 = scmp.ne.s32.totalorder %s19, %s22
    %p28 = scmp.eq.s32.totalorder %s9, 0
    %p29 = por %p27, %p28
    %p30 = scmp.ne.s32.totalorder %s19, %s22
    %p31 = scmp.eq.s32.totalorder %s14, 1
    %p32 = por %p30, %p31
    %p33 = scmp.ne.s32.totalorder %s22, %s23
    %p34 = scmp.eq.s32.totalorder %s14, 0
    %p35 = por %p33, %p34
    %p36 = scmp.ne.s32.totalorder %s22, %s23
    %p37 = scmp.eq.s32.totalorder %s15, 1
    %p38 = por %p36, %p37
    %p40 = scmp.ne.s32.totalorder %s23, %s39
    %p41 = scmp.eq.s32.totalorder %s15, 0
    %p42 = por %p40, %p41
    %s44 = sadd.s32 %s43, 1
    %p47 = scmp.eq.s32.totalorder %s9, 1
    %p48 = scmp.ne.s32.totalorder %s43, %s45
    %p49 = scmp.eq.s32.totalorder %s9, 0
    %p50 = por %p48, %p49
    %p51 = scmp.ne.s32.totalorder %s43, %s45
    %p52 = scmp.eq.s32.totalorder %s14, 1
    %p53 = por %p51, %p52
    %p54 = scmp.ne.s32.totalorder %s45, %s46
    %p55 = scmp.eq.s32.totalorder %s14, 0
    %p56 = por %p54, %p55
    %p57 = scmp.ne.s32.totalorder %s45, %s46
    %p58 = scmp.eq.s32.totalorder %s15, 1
    %p59 = por %p57, %p58
    %p61 = scmp.ne.s32.totalorder %s46, %s60
    %p62 = scmp.eq.s32.totalorder %s15, 0
    %p63 = por %p61, %p62
    %s64 = ssub.s32 %s9, %s16
    %p65 = scmp.eq.s32.totalorder %s64, 0
    %s67 = sadd.s32 %s66, 1
    %s68 = scalar_select %p65, %s66, %s67
    %p71 = pneg %p65
    %p72 = scmp.eq.s32.totalorder %s9, 1
    %p73 = por %p71, %p72
    %p74 = scmp.ne.s32.totalorder %s66, %s69
    %p75 = scmp.eq.s32.totalorder %s9, 0
    %p76 = por %p74, %p75
    %p77 = scmp.ne.s32.totalorder %s66, %s69
    %p78 = scmp.eq.s32.totalorder %s14, 1
    %p79 = por %p77, %p78
    %p80 = scmp.ne.s32.totalorder %s69, %s70
    %p81 = scmp.eq.s32.totalorder %s14, 0
    %p82 = por %p80, %p81
    %p83 = scmp.ne.s32.totalorder %s69, %s70
    %p84 = scmp.eq.s32.totalorder %s15, 1
    %p85 = por %p83, %p84
    %p87 = scmp.ne.s32.totalorder %s70, %s86
    %p88 = scmp.eq.s32.totalorder %s15, 0
    %p89 = por %p87, %p88
    %s90 = ssub.s32 %s9, %s16
    %p91 = scmp.eq.s32.totalorder %s90, 0
    %s93 = sadd.s32 %s92, 1
    %s94 = scalar_select %p91, %s92, %s93
    %p97 = pneg %p91
    %p98 = scmp.eq.s32.totalorder %s9, 1
    %p99 = por %p97, %p98
    %p100 = scmp.ne.s32.totalorder %s92, %s95
    %p101 = scmp.eq.s32.totalorder %s9, 0
    %p102 = por %p100, %p101
    %p103 = scmp.ne.s32.totalorder %s92, %s95
    %p104 = scmp.eq.s32.totalorder %s14, 1
    %p105 = por %p103, %p104
    %p106 = scmp.ne.s32.totalorder %s95, %s96
    %p107 = scmp.eq.s32.totalorder %s14, 0
    %p108 = por %p106, %p107
    %p109 = scmp.ne.s32.totalorder %s95, %s96
    %p110 = scmp.eq.s32.totalorder %s15, 1
    %p111 = por %p109, %p110
    %p113 = scmp.ne.s32.totalorder %s96, %s112
    %p114 = scmp.eq.s32.totalorder %s15, 0
    %p115 = por %p113, %p114
    %p116 = scmp.le.s32.totalorder 1, %s9
    %p117 = scmp.lt.s32.totalorder %s9, 3
    %p118 = pnand %p116, %p117
    %p119 = pneg %p118
    // Predicated region
    $region9: #{fwd.9} parent=5 // pred_check
      _
    $region10: #{fwd.9} parent=5 // pred_check_branch
      %121 = sbr.rel (%p118) target = $region12
    $region11: #{fwd.9} parent=5 // pred_region
      %s122 = ssub.s32 %s9, 1
      // Predicated region
      $region13: #{fwd.9} parent=11 // pred_check
        %p123 = pneg %p56
      $region14: #{fwd.9} parent=11 // pred_check_branch
        %125 = sbr.rel (%p123) target = $region16
      $region15: #{fwd.9} parent=11 // pred_region
        _
      $region16: #{fwd.9} parent=11 // pred_fallthru
        _
    $region12: #{fwd.9} parent=5 // pred_fallthru
      _
    %p126 = scmp.lt.s32.totalorder %s9, 2
    // Predicated region
    $region17: #{fwd.9} parent=5 // pred_check
      %p127 = pneg %p126
    $region18: #{fwd.9} parent=5 // pred_check_branch
      %129 = sbr.rel (%p127) target = $region20
    $region19: #{fwd.9} parent=5 // pred_region
      // Predicated region
      $region21: #{fwd.9} parent=19 // pred_check
        %p130 = pneg %p29
      $region22: #{fwd.9} parent=19 // pred_check_branch
        %132 = sbr.rel (%p130) target = $region24
      $region23: #{fwd.9} parent=19 // pred_region
        %p133 = scmp.lt.s32.totalorder %s9, 1
        %s134 = scalar_select %p133, %s9, 1
        %s135 = smul.addr %s134, 4
        %s136 = scalar_lea.vmem %s0, %s135
      $region24: #{fwd.9} parent=19 // pred_fallthru
        _
      // Predicated region
      $region25: #{fwd.9} parent=19 // pred_check
        %p137 = pneg %p76
      $region26: #{fwd.9} parent=19 // pred_check_branch
        %139 = sbr.rel (%p137) target = $region28
      $region27: #{fwd.9} parent=19 // pred_region
        %p140 = scmp.lt.s32.totalorder %s9, 1
        %s141 = scalar_select %p140, %s9, 1
        %s142 = scalar_lea.vmem %s2, %s141
      $region28: #{fwd.9} parent=19 // pred_fallthru
        _
    $region20: #{fwd.9} parent=5 // pred_fallthru
      _
    %p143 = scmp.le.s32.totalorder 1, %s9
    %p144 = scmp.lt.s32.totalorder %s9, 3
    %p145 = pnand %p143, %p144
    %p146 = pneg %p145
    // Predicated region
    $region29: #{fwd.9} parent=5 // pred_check
      _
    $region30: #{fwd.9} parent=5 // pred_check_branch
      %148 = sbr.rel (%p145) target = $region32
    $region31: #{fwd.9} parent=5 // pred_region
      %s149 = ssub.s32 %s9, 1
      %p150 = scmp.lt.s32.totalorder %s14, 1
      %s151 = scalar_select %p150, %s14, 1
      %s152 = smul.addr %s151, 4
      %s153 = scalar_lea.vmem %s0, %s152
      %p154 = pneg %p35
      %p155 = pneg %p32
      %p156 = pneg %p56
      %p157 = pneg %p53
      %p158 = scmp.lt.s32.totalorder %s14, 1
      %s159 = scalar_select %p158, %s14, 1
      %s160 = scalar_lea.vmem %s2, %s159
      %p161 = pneg %p82
      %p162 = pneg %p79
      %p163 = pneg %p108
      %p164 = pneg %p105
      %p165 = scmp.lt.s32.totalorder %s14, 1
      %s166 = scalar_select %p165, %s14, 1
      %s167 = smul.addr %s166, 4
      %s168 = scalar_lea.vmem %s3, %s167
      %p169 = scmp.lt.s32.totalorder %s14, 1
      %s170 = scalar_select %p169, %s14, 1
      %s171 = smul.addr %s170, 4
      %s172 = scalar_lea.vmem %s0, %s171
      %p173 = scmp.lt.s32.totalorder %s14, 1
      %s174 = scalar_select %p173, %s14, 1
      %s175 = scalar_lea.vmem %s2, %s174
      %p176 = scmp.lt.s32.totalorder %s14, 1
      %s177 = scalar_select %p176, %s14, 1
      %s178 = smul.addr %s177, 4
      %s179 = scalar_lea.vmem %s3, %s178
      %v181 = vld [vmem:[%s172] sm:$0xf]
      %v182 = vld [vmem:[%s1] sm:$0xff]
      %v183 = vld [vmem:[%s175] sm:$0x1]
      %v185 = vlaneseq
      %v186 = vshrl.u32 %v185, 7
      %v187 = vsub.s32 0, %v186
      %v188 = vrot.slane %v183, %v187
      %v190 = vadd.f32 %v182, %v188
      %v192 = vunpack.c.l.b16 %v181
      %v193 = vpack.c.b16 %v192, %v192
      %194 = vrot.lane.b32.xlu0 %v193, 96
      %v195 = vpop.permute.xlu0 %194
      %vm196 = vcmask 64512
      %v198 = vsel %vm196, %v181, 0
      %v201 = vsel %vm196, %v195, 0
      %203 = vmatprep.subr.bf16.mxu0 0
      %204 = vmatpush1.bf16.xpose.msra.mxu0 0
      %205 = vmatprep.subr.bf16.mxu0 0
      %206 = vmatpush1.bf16.xpose.msra.mxu0 0
      %207 = vmatprep.subr.bf16.mxu0 0
      %208 = vmatpush1.bf16.xpose.msra.mxu0 0
      %209 = vmatprep.subr.bf16.mxu0 0
      %210 = vmatpush1.bf16.xpose.msra.mxu0 0
      %211 = vmatprep.subr.bf16.mxu0 0
      %212 = vmatpush1.bf16.xpose.msra.mxu0 0
      %213 = vmatprep.subr.bf16.mxu0 0
      %214 = vmatpush1.bf16.xpose.msra.mxu0 0
      %215 = vmatprep.subr.bf16.mxu0 0
      %216 = vmatpush1.bf16.xpose.msra.mxu0 0
      %217 = vmatprep.subr.bf16.mxu0 0
      %218 = vmatpush1.bf16.xpose.msra.mxu0 %v201
      %219 = vmatprep.subr.bf16.mxu0 0
      %220 = vmatpush2.bf16.xpose.msra.mxu0 0
      %221 = vmatprep.subr.bf16.mxu0 0
      %222 = vmatpush2.bf16.xpose.msra.mxu0 0
      %223 = vmatprep.subr.bf16.mxu0 0
      %224 = vmatpush2.bf16.xpose.msra.mxu0 0
      %225 = vmatprep.subr.bf16.mxu0 0
      %226 = vmatpush2.bf16.xpose.msra.mxu0 0
      %227 = vmatprep.subr.bf16.mxu0 0
      %228 = vmatpush2.bf16.xpose.msra.mxu0 0
      %229 = vmatprep.subr.bf16.mxu0 0
      %230 = vmatpush2.bf16.xpose.msra.mxu0 0
      %231 = vmatprep.subr.bf16.mxu0 0
      %232 = vmatpush2.bf16.xpose.msra.mxu0 0
      %233 = vmatprep.subr.bf16.mxu0 0
      %234 = vmatpush2.bf16.xpose.msra.mxu0 0
      %235 = vmatprep.mubr.bf16.mxu0 0
      %236 = vmatmul.mubr.bf16.gmra.mxu0 %v198
      %v237 = vpop.f32.mrf.mxu0
      %v238 = vadd.f32 %v190, %v237
      %v239 = vpop.f32.mrf.mxu0
      %v240 = vpop.f32.mrf.mxu0
      %v241 = vpop.f32.mrf.mxu0
      %242 = vdwg.mxu0
      %v243 = vsel %vm196, %v238, -inf
      %244 = vmax.xlane.f32.xlu0 %v243
      %v245 = vpop.xlane.xlu0 %244
      %v246 = vsub.f32 %v238, %v245
      %v247 = vmul.f32 %v246, 1.442695
      %v248 = vpow.pop %v247
      %v249 = vsel %vm196, %v248, 0.0
      %250 = vadd.xlane.f32.xlu0 %v249
      %v251 = vpop.xlane.xlu0 %250
      %v252 = vrcp.pop %v251
      %v253 = vmul.f32 %v248, %v252
      %v254 = vpack.c.bf16 %v253, %v253
      %255 = vrot.lane.b32.xlu0 %v193, 64
      %v256 = vpop.permute.xlu0 %255
      %v258 = vsel %vm196, %v254, 0
      %vm260 = vcmask 1043456
      %v262 = vsel %vm260, %v256, 0
      %264 = vmatprep.subr.bf16.mxu0 0
      %265 = vmatpush1.bf16.msra.mxu0 0
      %266 = vmatprep.subr.bf16.mxu0 0
      %267 = vmatpush1.bf16.msra.mxu0 0
      %268 = vmatprep.subr.bf16.mxu0 0
      %269 = vmatpush1.bf16.msra.mxu0 0
      %270 = vmatprep.subr.bf16.mxu0 0
      %271 = vmatpush1.bf16.msra.mxu0 0
      %272 = vmatprep.subr.bf16.mxu0 0
      %273 = vmatpush1.bf16.msra.mxu0 0
      %274 = vmatprep.subr.bf16.mxu0 0
      %275 = vmatpush1.bf16.msra.mxu0 0
      %276 = vmatprep.subr.bf16.mxu0 0
      %277 = vmatpush1.bf16.msra.mxu0 0
      %278 = vmatprep.subr.bf16.mxu0 0
      %279 = vmatpush1.bf16.msra.mxu0 %v262
      %280 = vmatprep.subr.bf16.mxu0 0
      %281 = vmatpush2.bf16.msra.mxu0 0
      %282 = vmatprep.subr.bf16.mxu0 0
      %283 = vmatpush2.bf16.msra.mxu0 0
      %284 = vmatprep.subr.bf16.mxu0 0
      %285 = vmatpush2.bf16.msra.mxu0 0
      %286 = vmatprep.subr.bf16.mxu0 0
      %287 = vmatpush2.bf16.msra.mxu0 0
      %288 = vmatprep.subr.bf16.mxu0 0
      %289 = vmatpush2.bf16.msra.mxu0 0
      %290 = vmatprep.subr.bf16.mxu0 0
      %291 = vmatpush2.bf16.msra.mxu0 0
      %292 = vmatprep.subr.bf16.mxu0 0
      %293 = vmatpush2.bf16.msra.mxu0 0
      %294 = vmatprep.subr.bf16.mxu0 0
      %295 = vmatpush2.bf16.msra.mxu0 0
      %296 = vmatprep.mubr.bf16.mxu0 0
      %297 = vmatmul.mubr.bf16.gmra.mxu0 %v258
      %v298 = vpop.f32.mrf.mxu0
      %v299 = vadd.f32 0.0, %v298
      %v300 = vpop.f32.mrf.mxu0
      %v301 = vpop.f32.mrf.mxu0
      %v302 = vpop.f32.mrf.mxu0
      %303 = vdwg.mxu0
      %304 = vrot.lane.b32.xlu0 %v193, 120
      %v305 = vpop.permute.xlu0 %304
      %306 = vrot.lane.b32.xlu0 %v193, 88
      %v307 = vpop.permute.xlu0 %306
      %v309 = vsel %vm196, %v305, 0
      %v312 = vsel %vm196, %v307, 0
      %314 = vmatprep.subr.bf16.mxu0 0
      %315 = vmatpush1.bf16.xpose.msra.mxu0 0
      %316 = vmatprep.subr.bf16.mxu0 0
      %317 = vmatpush1.bf16.xpose.msra.mxu0 0
      %318 = vmatprep.subr.bf16.mxu0 0
      %319 = vmatpush1.bf16.xpose.msra.mxu0 0
      %320 = vmatprep.subr.bf16.mxu0 0
      %321 = vmatpush1.bf16.xpose.msra.mxu0 0
      %322 = vmatprep.subr.bf16.mxu0 0
      %323 = vmatpush1.bf16.xpose.msra.mxu0 0
      %324 = vmatprep.subr.bf16.mxu0 0
      %325 = vmatpush1.bf16.xpose.msra.mxu0 0
      %326 = vmatprep.subr.bf16.mxu0 0
      %327 = vmatpush1.bf16.xpose.msra.mxu0 0
      %328 = vmatprep.subr.bf16.mxu0 0
      %329 = vmatpush1.bf16.xpose.msra.mxu0 %v312
      %330 = vmatprep.subr.bf16.mxu0 0
      %331 = vmatpush2.bf16.xpose.msra.mxu0 0
      %332 = vmatprep.subr.bf16.mxu0 0
      %333 = vmatpush2.bf16.xpose.msra.mxu0 0
      %334 = vmatprep.subr.bf16.mxu0 0
      %335 = vmatpush2.bf16.xpose.msra.mxu0 0
      %336 = vmatprep.subr.bf16.mxu0 0
      %337 = vmatpush2.bf16.xpose.msra.mxu0 0
      %338 = vmatprep.subr.bf16.mxu0 0
      %339 = vmatpush2.bf16.xpose.msra.mxu0 0
      %340 = vmatprep.subr.bf16.mxu0 0
      %341 = vmatpush2.bf16.xpose.msra.mxu0 0
      %342 = vmatprep.subr.bf16.mxu0 0
      %343 = vmatpush2.bf16.xpose.msra.mxu0 0
      %344 = vmatprep.subr.bf16.mxu0 0
      %345 = vmatpush2.bf16.xpose.msra.mxu0 0
      %346 = vmatprep.mubr.bf16.mxu0 0
      %347 = vmatmul.mubr.bf16.gmra.mxu0 %v309
      %v348 = vpop.f32.mrf.mxu0
      %v349 = vadd.f32 %v190, %v348
      %v350 = vpop.f32.mrf.mxu0
      %v351 = vpop.f32.mrf.mxu0
      %v352 = vpop.f32.mrf.mxu0
      %353 = vdwg.mxu0
      %v354 = vsel %vm196, %v349, -inf
      %355 = vmax.xlane.f32.xlu0 %v354
      %v356 = vpop.xlane.xlu0 %355
      %v357 = vsub.f32 %v349, %v356
      %v358 = vmul.f32 %v357, 1.442695
      %v359 = vpow.pop %v358
      %v360 = vsel %vm196, %v359, 0.0
      %361 = vadd.xlane.f32.xlu0 %v360
      %v362 = vpop.xlane.xlu0 %361
      %v363 = vrcp.pop %v362
      %v364 = vmul.f32 %v359, %v363
      %v365 = vpack.c.bf16 %v364, %v364
      %366 = vrot.lane.b32.xlu0 %v193, 56
      %v367 = vpop.permute.xlu0 %366
      %v369 = vsel %vm196, %v365, 0
      %v372 = vsel %vm260, %v367, 0
      %374 = vmatprep.subr.bf16.mxu0 0
      %375 = vmatpush1.bf16.msra.mxu0 0
      %376 = vmatprep.subr.bf16.mxu0 0
      %377 = vmatpush1.bf16.msra.mxu0 0
      %378 = vmatprep.subr.bf16.mxu0 0
      %379 = vmatpush1.bf16.msra.mxu0 0
      %380 = vmatprep.subr.bf16.mxu0 0
      %381 = vmatpush1.bf16.msra.mxu0 0
      %382 = vmatprep.subr.bf16.mxu0 0
      %383 = vmatpush1.bf16.msra.mxu0 0
      %384 = vmatprep.subr.bf16.mxu0 0
      %385 = vmatpush1.bf16.msra.mxu0 0
      %386 = vmatprep.subr.bf16.mxu0 0
      %387 = vmatpush1.bf16.msra.mxu0 0
      %388 = vmatprep.subr.bf16.mxu0 0
      %389 = vmatpush1.bf16.msra.mxu0 %v372
      %390 = vmatprep.subr.bf16.mxu0 0
      %391 = vmatpush2.bf16.msra.mxu0 0
      %392 = vmatprep.subr.bf16.mxu0 0
      %393 = vmatpush2.bf16.msra.mxu0 0
      %394 = vmatprep.subr.bf16.mxu0 0
      %395 = vmatpush2.bf16.msra.mxu0 0
      %396 = vmatprep.subr.bf16.mxu0 0
      %397 = vmatpush2.bf16.msra.mxu0 0
      %398 = vmatprep.subr.bf16.mxu0 0
      %399 = vmatpush2.bf16.msra.mxu0 0
      %400 = vmatprep.subr.bf16.mxu0 0
      %401 = vmatpush2.bf16.msra.mxu0 0
      %402 = vmatprep.subr.bf16.mxu0 0
      %403 = vmatpush2.bf16.msra.mxu0 0
      %404 = vmatprep.subr.bf16.mxu0 0
      %405 = vmatpush2.bf16.msra.mxu0 0
      %406 = vmatprep.mubr.bf16.mxu0 0
      %407 = vmatmul.mubr.bf16.gmra.mxu0 %v369
      %v408 = vpop.f32.mrf.mxu0
      %v409 = vadd.f32 0.0, %v408
      %v410 = vpop.f32.mrf.mxu0
      %v411 = vpop.f32.mrf.mxu0
      %v412 = vpop.f32.mrf.mxu0
      %413 = vdwg.mxu0
      %414 = vrot.lane.b32.xlu0 %v193, 112
      %v415 = vpop.permute.xlu0 %414
      %416 = vrot.lane.b32.xlu0 %v193, 80
      %v417 = vpop.permute.xlu0 %416
      %v419 = vsel %vm196, %v415, 0
      %v422 = vsel %vm196, %v417, 0
      %424 = vmatprep.subr.bf16.mxu0 0
      %425 = vmatpush1.bf16.xpose.msra.mxu0 0
      %426 = vmatprep.subr.bf16.mxu0 0
      %427 = vmatpush1.bf16.xpose.msra.mxu0 0
      %428 = vmatprep.subr.bf16.mxu0 0
      %429 = vmatpush1.bf16.xpose.msra.mxu0 0
      %430 = vmatprep.subr.bf16.mxu0 0
      %431 = vmatpush1.bf16.xpose.msra.mxu0 0
      %432 = vmatprep.subr.bf16.mxu0 0
      %433 = vmatpush1.bf16.xpose.msra.mxu0 0
      %434 = vmatprep.subr.bf16.mxu0 0
      %435 = vmatpush1.bf16.xpose.msra.mxu0 0
      %436 = vmatprep.subr.bf16.mxu0 0
      %437 = vmatpush1.bf16.xpose.msra.mxu0 0
      %438 = vmatprep.subr.bf16.mxu0 0
      %439 = vmatpush1.bf16.xpose.msra.mxu0 %v422
      %440 = vmatprep.subr.bf16.mxu0 0
      %441 = vmatpush2.bf16.xpose.msra.mxu0 0
      %442 = vmatprep.subr.bf16.mxu0 0
      %443 = vmatpush2.bf16.xpose.msra.mxu0 0
      %444 = vmatprep.subr.bf16.mxu0 0
      %445 = vmatpush2.bf16.xpose.msra.mxu0 0
      %446 = vmatprep.subr.bf16.mxu0 0
      %447 = vmatpush2.bf16.xpose.msra.mxu0 0
      %448 = vmatprep.subr.bf16.mxu0 0
      %449 = vmatpush2.bf16.xpose.msra.mxu0 0
      %450 = vmatprep.subr.bf16.mxu0 0
      %451 = vmatpush2.bf16.xpose.msra.mxu0 0
      %452 = vmatprep.subr.bf16.mxu0 0
      %453 = vmatpush2.bf16.xpose.msra.mxu0 0
      %454 = vmatprep.subr.bf16.mxu0 0
      %455 = vmatpush2.bf16.xpose.msra.mxu0 0
      %456 = vmatprep.mubr.bf16.mxu0 0
      %457 = vmatmul.mubr.bf16.gmra.mxu0 %v419
      %v458 = vpop.f32.mrf.mxu0
      %v459 = vadd.f32 %v190, %v458
      %v460 = vpop.f32.mrf.mxu0
      %v461 = vpop.f32.mrf.mxu0
      %v462 = vpop.f32.mrf.mxu0
      %463 = vdwg.mxu0
      %v464 = vsel %vm196, %v459, -inf
      %465 = vmax.xlane.f32.xlu0 %v464
      %v466 = vpop.xlane.xlu0 %465
      %v467 = vsub.f32 %v459, %v466
      %v468 = vmul.f32 %v467, 1.442695
      %v469 = vpow.pop %v468
      %v470 = vsel %vm196, %v469, 0.0
      %471 = vadd.xlane.f32.xlu0 %v470
      %v472 = vpop.xlane.xlu0 %471
      %v473 = vrcp.pop %v472
      %v474 = vmul.f32 %v469, %v473
      %v475 = vpack.c.bf16 %v474, %v474
      %476 = vrot.lane.b32.xlu0 %v193, 48
      %v477 = vpop.permute.xlu0 %476
      %v479 = vsel %vm196, %v475, 0
      %v482 = vsel %vm260, %v477, 0
      %484 = vmatprep.subr.bf16.mxu0 0
      %485 = vmatpush1.bf16.msra.mxu0 0
      %486 = vmatprep.subr.bf16.mxu0 0
      %487 = vmatpush1.bf16.msra.mxu0 0
      %488 = vmatprep.subr.bf16.mxu0 0
      %489 = vmatpush1.bf16.msra.mxu0 0
      %490 = vmatprep.subr.bf16.mxu0 0
      %491 = vmatpush1.bf16.msra.mxu0 0
      %492 = vmatprep.subr.bf16.mxu0 0
      %493 = vmatpush1.bf16.msra.mxu0 0
      %494 = vmatprep.subr.bf16.mxu0 0
      %495 = vmatpush1.bf16.msra.mxu0 0
      %496 = vmatprep.subr.bf16.mxu0 0
      %497 = vmatpush1.bf16.msra.mxu0 0
      %498 = vmatprep.subr.bf16.mxu0 0
      %499 = vmatpush1.bf16.msra.mxu0 %v482
      %500 = vmatprep.subr.bf16.mxu0 0
      %501 = vmatpush2.bf16.msra.mxu0 0
      %502 = vmatprep.subr.bf16.mxu0 0
      %503 = vmatpush2.bf16.msra.mxu0 0
      %504 = vmatprep.subr.bf16.mxu0 0
      %505 = vmatpush2.bf16.msra.mxu0 0
      %506 = vmatprep.subr.bf16.mxu0 0
      %507 = vmatpush2.bf16.msra.mxu0 0
      %508 = vmatprep.subr.bf16.mxu0 0
      %509 = vmatpush2.bf16.msra.mxu0 0
      %510 = vmatprep.subr.bf16.mxu0 0
      %511 = vmatpush2.bf16.msra.mxu0 0
      %512 = vmatprep.subr.bf16.mxu0 0
      %513 = vmatpush2.bf16.msra.mxu0 0
      %514 = vmatprep.subr.bf16.mxu0 0
      %515 = vmatpush2.bf16.msra.mxu0 0
      %516 = vmatprep.mubr.bf16.mxu0 0
      %517 = vmatmul.mubr.bf16.gmra.mxu0 %v479
      %v518 = vpop.f32.mrf.mxu0
      %v519 = vadd.f32 0.0, %v518
      %v520 = vpop.f32.mrf.mxu0
      %v521 = vpop.f32.mrf.mxu0
      %v522 = vpop.f32.mrf.mxu0
      %523 = vdwg.mxu0
      %524 = vrot.lane.b32.xlu0 %v193, 104
      %v525 = vpop.permute.xlu0 %524
      %526 = vrot.lane.b32.xlu0 %v193, 72
      %v527 = vpop.permute.xlu0 %526
      %v529 = vsel %vm196, %v525, 0
      %v532 = vsel %vm196, %v527, 0
      %534 = vmatprep.subr.bf16.mxu0 0
      %535 = vmatpush1.bf16.xpose.msra.mxu0 0
      %536 = vmatprep.subr.bf16.mxu0 0
      %537 = vmatpush1.bf16.xpose.msra.mxu0 0
      %538 = vmatprep.subr.bf16.mxu0 0
      %539 = vmatpush1.bf16.xpose.msra.mxu0 0
      %540 = vmatprep.subr.bf16.mxu0 0
      %541 = vmatpush1.bf16.xpose.msra.mxu0 0
      %542 = vmatprep.subr.bf16.mxu0 0
      %543 = vmatpush1.bf16.xpose.msra.mxu0 0
      %544 = vmatprep.subr.bf16.mxu0 0
      %545 = vmatpush1.bf16.xpose.msra.mxu0 0
      %546 = vmatprep.subr.bf16.mxu0 0
      %547 = vmatpush1.bf16.xpose.msra.mxu0 0
      %548 = vmatprep.subr.bf16.mxu0 0
      %549 = vmatpush1.bf16.xpose.msra.mxu0 %v532
      %550 = vmatprep.subr.bf16.mxu0 0
      %551 = vmatpush2.bf16.xpose.msra.mxu0 0
      %552 = vmatprep.subr.bf16.mxu0 0
      %553 = vmatpush2.bf16.xpose.msra.mxu0 0
      %554 = vmatprep.subr.bf16.mxu0 0
      %555 = vmatpush2.bf16.xpose.msra.mxu0 0
      %556 = vmatprep.subr.bf16.mxu0 0
      %557 = vmatpush2.bf16.xpose.msra.mxu0 0
      %558 = vmatprep.subr.bf16.mxu0 0
      %559 = vmatpush2.bf16.xpose.msra.mxu0 0
      %560 = vmatprep.subr.bf16.mxu0 0
      %561 = vmatpush2.bf16.xpose.msra.mxu0 0
      %562 = vmatprep.subr.bf16.mxu0 0
      %563 = vmatpush2.bf16.xpose.msra.mxu0 0
      %564 = vmatprep.subr.bf16.mxu0 0
      %565 = vmatpush2.bf16.xpose.msra.mxu0 0
      %566 = vmatprep.mubr.bf16.mxu0 0
      %567 = vmatmul.mubr.bf16.gmra.mxu0 %v529
      %v568 = vpop.f32.mrf.mxu0
      %v569 = vadd.f32 %v190, %v568
      %v570 = vpop.f32.mrf.mxu0
      %v571 = vpop.f32.mrf.mxu0
      %v572 = vpop.f32.mrf.mxu0
      %573 = vdwg.mxu0
      %v574 = vsel %vm196, %v569, -inf
      %575 = vmax.xlane.f32.xlu0 %v574
      %v576 = vpop.xlane.xlu0 %575
      %v577 = vsub.f32 %v569, %v576
      %v578 = vmul.f32 %v577, 1.442695
      %v579 = vpow.pop %v578
      %v580 = vsel %vm196, %v579, 0.0
      %581 = vadd.xlane.f32.xlu0 %v580
      %v582 = vpop.xlane.xlu0 %581
      %v583 = vrcp.pop %v582
      %v584 = vmul.f32 %v579, %v583
      %v585 = vpack.c.bf16 %v584, %v584
      %586 = vrot.lane.b32.xlu0 %v193, 40
      %v587 = vpop.permute.xlu0 %586
      %v589 = vsel %vm196, %v585, 0
      %v592 = vsel %vm260, %v587, 0
      %594 = vmatprep.subr.bf16.mxu0 0
      %595 = vmatpush1.bf16.msra.mxu0 0
      %596 = vmatprep.subr.bf16.mxu0 0
      %597 = vmatpush1.bf16.msra.mxu0 0
      %598 = vmatprep.subr.bf16.mxu0 0
      %599 = vmatpush1.bf16.msra.mxu0 0
      %600 = vmatprep.subr.bf16.mxu0 0
      %601 = vmatpush1.bf16.msra.mxu0 0
      %602 = vmatprep.subr.bf16.mxu0 0
      %603 = vmatpush1.bf16.msra.mxu0 0
      %604 = vmatprep.subr.bf16.mxu0 0
      %605 = vmatpush1.bf16.msra.mxu0 0
      %606 = vmatprep.subr.bf16.mxu0 0
      %607 = vmatpush1.bf16.msra.mxu0 0
      %608 = vmatprep.subr.bf16.mxu0 0
      %609 = vmatpush1.bf16.msra.mxu0 %v592
      %610 = vmatprep.subr.bf16.mxu0 0
      %611 = vmatpush2.bf16.msra.mxu0 0
      %612 = vmatprep.subr.bf16.mxu0 0
      %613 = vmatpush2.bf16.msra.mxu0 0
      %614 = vmatprep.subr.bf16.mxu0 0
      %615 = vmatpush2.bf16.msra.mxu0 0
      %616 = vmatprep.subr.bf16.mxu0 0
      %617 = vmatpush2.bf16.msra.mxu0 0
      %618 = vmatprep.subr.bf16.mxu0 0
      %619 = vmatpush2.bf16.msra.mxu0 0
      %620 = vmatprep.subr.bf16.mxu0 0
      %621 = vmatpush2.bf16.msra.mxu0 0
      %622 = vmatprep.subr.bf16.mxu0 0
      %623 = vmatpush2.bf16.msra.mxu0 0
      %624 = vmatprep.subr.bf16.mxu0 0
      %625 = vmatpush2.bf16.msra.mxu0 0
      %626 = vmatprep.mubr.bf16.mxu0 0
      %627 = vmatmul.mubr.bf16.gmra.mxu0 %v589
      %v628 = vpop.f32.mrf.mxu0
      %v629 = vadd.f32 0.0, %v628
      %v630 = vpop.f32.mrf.mxu0
      %v631 = vpop.f32.mrf.mxu0
      %v632 = vpop.f32.mrf.mxu0
      %633 = vdwg.mxu0
      %635 = vrot.lane.b32.xlu0 %v409, 8
      %v636 = vpop.permute.xlu0 %635
      %639 = vrot.lane.b32.xlu0 %v519, 16
      %v640 = vpop.permute.xlu0 %639
      %643 = vrot.lane.b32.xlu0 %v629, 24
      %v644 = vpop.permute.xlu0 %643
      %v646 = vsel %vm196, %v299, %v636
      %vm647 = vcmask 130048
      %v648 = vsel %vm647, %v646, %v640
      %vm649 = vcmask 195584
      %v650 = vsel %vm649, %v648, %v644
      %v651 = vpack.c.bf16 %v650, %v650
      %vm652 = vcmask 257024
      %653 = vst.msk [vmem:[%s179] sm:$0xf] %vm652, %v651
      %p654 = scmp.lt.s32.totalorder %s14, 1
      %s655 = scalar_select %p654, %s14, 1
      %s656 = smul.addr %s655, 4
      %s657 = scalar_lea.vmem %s3, %s656
      // Predicated region
      $region33: #{fwd.9} parent=31 // pred_check
        %p658 = pneg %p105
      $region34: #{fwd.9} parent=31 // pred_check_branch
        %660 = sbr.rel (%p658) target = $region36
      $region35: #{fwd.9} parent=31 // pred_region
        _
      $region36: #{fwd.9} parent=31 // pred_fallthru
        _
    $region32: #{fwd.9} parent=5 // pred_fallthru
      _
    %p661 = scmp.le.s32.totalorder 2, %s9
    // Predicated region
    $region37: #{fwd.9} parent=5 // pred_check
      %p662 = pneg %p661
    $region38: #{fwd.9} parent=5 // pred_check_branch
      %664 = sbr.rel (%p662) target = $region40
    $region39: #{fwd.9} parent=5 // pred_region
      %s665 = ssub.s32 %s9, 2
      // Predicated region
      $region41: #{fwd.9} parent=39 // pred_check
        %p666 = pneg %p111
      $region42: #{fwd.9} parent=39 // pred_check_branch
        %668 = sbr.rel (%p666) target = $region44
      $region43: #{fwd.9} parent=39 // pred_region
        %p669 = scmp.lt.s32.totalorder %s15, 1
        %s670 = scalar_select %p669, %s15, 1
        %s671 = smul.addr %s670, 4
        %s672 = scalar_lea.vmem %s3, %s671
      $region44: #{fwd.9} parent=39 // pred_fallthru
        _
    $region40: #{fwd.9} parent=5 // pred_fallthru
      _
  $region6: #{fwd.9} parent=0 // loop_footer
    %s13 = sadd.s32 1, %s9
  $region7: #{fwd.9} parent=0 // loop_footer_branch
    %8 = sbr.rel target = $region3
  $region8: #{fwd.9} parent=0 // loop_exit
    _

// kernel: fwd.14
$region0: #{fwd.14}
  #allocation0 [shape = 'u32[]', space=smem, size = 0x4, offset = 0x4, fixed_abs, tag = 'smem constant byte address 0x4 - core index']
  #allocation1 [shape = 'u32[144,128]{1,0:T(1,128)}', space=vmem, size = 0x12000, scoped, tag = 'internal scratch']
  %s0 = inlined_call_operand.vmem [shape: bf16[16,32], index: 0, kind: input, shape index: {}]
  %s1 = inlined_call_operand.vmem [shape: bf16[32,32], index: 1, kind: input, shape index: {}]
  %s2 = inlined_call_operand.vmem [shape: f32[1,32], index: 2, kind: input, shape index: {}, may-alias: {2,5}]
  %s3 = inlined_call_operand.vmem [shape: bf16[16,32], index: 3, kind: input, shape index: {}]
  %s4 = inlined_call_operand.vmem [shape: f32[1,32], index: 4, kind: input, shape index: {}]
  %s5 = inlined_call_operand.vmem [shape: f32[1,32], index: 5, kind: input, shape index: {}, may-alias: {2,5}]
  %s6 = inlined_call_operand.vmem [shape: bf16[16,32], index: 6, kind: output, shape index: {}]
  %s7 = sld [smem:[#allocation0]]
  $region34: #{fwd.14} parent=0
    _
  %s9 = ssub.s32 1, %s7
  %s10 = scalar_select 0, %s9, %s7
  // Predicated region
  $region2: #{fwd.14} parent=0 // pred_check
    _
  $region3: #{fwd.14} parent=0 // pred_check_branch
    %12 = sbr.rel (0) target = $region5
  $region4: #{fwd.14} parent=0 // pred_region
    _
  $region5: #{fwd.14} parent=0 // pred_fallthru
    _
  // Predicated region
  $region6: #{fwd.14} parent=0 // pred_check
    _
  $region7: #{fwd.14} parent=0 // pred_check_branch
    %14 = sbr.rel (0) target = $region9
  $region8: #{fwd.14} parent=0 // pred_region
    _
  $region9: #{fwd.14} parent=0 // pred_fallthru
    _
  // Predicated region
  $region10: #{fwd.14} parent=0 // pred_check
    _
  $region11: #{fwd.14} parent=0 // pred_check_branch
    %16 = sbr.rel (0) target = $region13
  $region12: #{fwd.14} parent=0 // pred_region
    _
  $region13: #{fwd.14} parent=0 // pred_fallthru
    _
  // Predicated region
  $region14: #{fwd.14} parent=0 // pred_check
    _
  $region15: #{fwd.14} parent=0 // pred_check_branch
    %18 = sbr.rel (0) target = $region17
  $region16: #{fwd.14} parent=0 // pred_region
    _
  $region17: #{fwd.14} parent=0 // pred_fallthru
    _
  // Predicated region
  $region18: #{fwd.14} parent=0 // pred_check
    _
  $region19: #{fwd.14} parent=0 // pred_check_branch
    %20 = sbr.rel (0) target = $region21
  $region20: #{fwd.14} parent=0 // pred_region
    _
  $region21: #{fwd.14} parent=0 // pred_fallthru
    _
  // Predicated region
  $region22: #{fwd.14} parent=0 // pred_check
    _
  $region23: #{fwd.14} parent=0 // pred_check_branch
    %22 = sbr.rel (0) target = $region25
  $region24: #{fwd.14} parent=0 // pred_region
    _
  $region25: #{fwd.14} parent=0 // pred_fallthru
    _
  %v24 = vld [vmem:[%s0] sm:$0xf]
  %v25 = vld [vmem:[%s0 + $0x4] sm:$0xf]
  %v26 = vld [vmem:[%s1] sm:$0xf]
  %v27 = vld [vmem:[%s1 + $0x4] sm:$0xf]
  %v28 = vld [vmem:[%s1 + $0x8] sm:$0xf]
  %v29 = vld [vmem:[%s1 + $0xc] sm:$0xf]
  %v30 = vld [vmem:[%s2] sm:$0x1]
  %v32 = vlaneseq
  %v33 = vshrl.u32 %v32, 7
  %v34 = vsub.s32 0, %v33
  %v35 = vrot.slane %v30, %v34
  %v39 = vunpack.c.l.b16 %v24
  %v40 = vunpack.c.l.b16 %v25
  %v41 = vpack.c.b16 %v40, %v39
  %v46 = vunpack.c.l.b16 %v26
  %v47 = vunpack.c.l.b16 %v27
  %v48 = vunpack.c.l.b16 %v28
  %v49 = vunpack.c.l.b16 %v29
  %v50 = vpack.c.b16 %v47, %v46
  %v51 = vpack.c.b16 %v49, %v48
  %vm54 = vcmask 261120
  %v56 = vsel %vm54, %v41, 0
  %58 = vmatprep.subr.bf16.mxu0 0
  %59 = vmatpush1.bf16.msra.mxu0 0
  %60 = vmatprep.subr.bf16.mxu0 0
  %61 = vmatpush1.bf16.msra.mxu0 0
  %62 = vmatprep.subr.bf16.mxu0 0
  %63 = vmatpush1.bf16.msra.mxu0 0
  %64 = vmatprep.subr.bf16.mxu0 0
  %65 = vmatpush1.bf16.msra.mxu0 0
  %66 = vmatprep.subr.bf16.mxu0 0
  %67 = vmatpush1.bf16.msra.mxu0 0
  %68 = vmatprep.subr.bf16.mxu0 0
  %69 = vmatpush1.bf16.msra.mxu0 0
  %70 = vmatprep.subr.bf16.mxu0 0
  %71 = vmatpush1.bf16.msra.mxu0 %v51
  %72 = vmatprep.subr.bf16.mxu0 0
  %73 = vmatpush1.bf16.msra.mxu0 %v50
  %74 = vmatprep.subr.bf16.mxu0 0
  %75 = vmatpush2.bf16.msra.mxu0 0
  %76 = vmatprep.subr.bf16.mxu0 0
  %77 = vmatpush2.bf16.msra.mxu0 0
  %78 = vmatprep.subr.bf16.mxu0 0
  %79 = vmatpush2.bf16.msra.mxu0 0
  %80 = vmatprep.subr.bf16.mxu0 0
  %81 = vmatpush2.bf16.msra.mxu0 0
  %82 = vmatprep.subr.bf16.mxu0 0
  %83 = vmatpush2.bf16.msra.mxu0 0
  %84 = vmatprep.subr.bf16.mxu0 0
  %85 = vmatpush2.bf16.msra.mxu0 0
  %86 = vmatprep.subr.bf16.mxu0 0
  %87 = vmatpush2.bf16.msra.mxu0 0
  %88 = vmatprep.subr.bf16.mxu0 0
  %89 = vmatpush2.bf16.msra.mxu0 0
  %90 = vmatprep.mubr.bf16.mxu0 0
  %91 = vmatmul.mubr.bf16.gmra.mxu0 %v56
  %v92 = vpop.f32.mrf.mxu0
  %v93 = vadd.f32 %v35, %v92
  %v94 = vpop.f32.mrf.mxu0
  %v95 = vpop.f32.mrf.mxu0
  %v96 = vadd.f32 %v35, %v95
  %v97 = vpop.f32.mrf.mxu0
  %98 = vdwg.mxu0
  %v99 = vld [vmem:[%s3] sm:$0xf]
  %v100 = vld [vmem:[%s3 + $0x4] sm:$0xf]
  %v101 = vunpack.c.l.bf16 %v99
  %v102 = vunpack.c.l.bf16 %v100
  %v103 = vadd.f32 %v93, %v101
  %v104 = vadd.f32 %v96, %v102
  %v105 = vsel %vm54, %v103, 0.0
  %106 = vadd.xlane.f32.xlu0 %v105
  %v107 = vpop.xlane.xlu0 %106
  %v108 = vsel %vm54, %v104, 0.0
  %109 = vadd.xlane.f32.xlu0 %v108
  %v110 = vpop.xlane.xlu0 %109
  %v111 = vrcp.pop 32.0
  %v112 = vmul.f32 %v107, %v111
  %v113 = vmul.f32 %v110, %v111
  %v114 = vsub.f32 %v103, %v112
  %v115 = vsub.f32 %v104, %v113
  %v116 = vmul.f32 %v114, %v114
  %v117 = vmul.f32 %v115, %v115
  %v118 = vsel %vm54, %v116, 0.0
  %119 = vadd.xlane.f32.xlu0 %v118
  %v120 = vpop.xlane.xlu0 %119
  %v121 = vsel %vm54, %v117, 0.0
  %122 = vadd.xlane.f32.xlu0 %v121
  %v123 = vpop.xlane.xlu0 %122
  %v124 = vmul.f32 %v120, %v111
  %v125 = vmul.f32 %v123, %v111
  %v126 = vadd.f32 %v124, 1e-05
  %v127 = vadd.f32 %v125, 1e-05
  %v128 = vrsqrt.pop %v126
  %v129 = vrsqrt.pop %v127
  %v130 = vmul.f32 %v114, %v128
  %v131 = vmul.f32 %v115, %v129
  %v132 = vld [vmem:[%s4] sm:$0x1]
  %v134 = vlaneseq
  %v135 = vshrl.u32 %v134, 7
  %v136 = vsub.s32 0, %v135
  %v137 = vrot.slane %v132, %v136
  %v139 = vmul.f32 %v130, %v137
  %v140 = vmul.f32 %v131, %v137
  %v141 = vld [vmem:[%s5] sm:$0x1]
  %v143 = vlaneseq
  %v144 = vshrl.u32 %v143, 7
  %v145 = vsub.s32 0, %v144
  %v146 = vrot.slane %v141, %v145
  %v148 = vadd.f32 %v139, %v146
  %v149 = vadd.f32 %v140, %v146
  %v150 = vpack.c.bf16 %v149, %v148
  %v152 = vunpack.c.l.b16 %v150
  %v153 = vunpack.c.h.b16 %v150
  %v154 = vpack.c.b16 %v152, %v152
  %v155 = vpack.c.b16 %v153, %v153
  %vm158 = vcmask 257024
  %159 = vst.msk [vmem:[%s6] sm:$0xf] %vm158, %v154
  %160 = vst.msk [vmem:[%s6 + $0x4] sm:$0xf] %vm158, %v155
  // Predicated region
  $region26: #{fwd.14} parent=0 // pred_check
    _
  $region27: #{fwd.14} parent=0 // pred_check_branch
    %162 = sbr.rel (0) target = $region29
  $region28: #{fwd.14} parent=0 // pred_region
    _
  $region29: #{fwd.14} parent=0 // pred_fallthru
    _
  // Predicated region
  $region30: #{fwd.14} parent=0 // pred_check
    _
  $region31: #{fwd.14} parent=0 // pred_check_branch
    %164 = sbr.rel (0) target = $region33
  $region32: #{fwd.14} parent=0 // pred_region
    _
  $region33: #{fwd.14} parent=0 // pred_fallthru
    _

// kernel: fwd.12
$region0: #{fwd.12}
  #allocation0 [shape = 'u32[]', space=smem, size = 0x4, offset = 0x4, fixed_abs, tag = 'smem constant byte address 0x4 - core index']
  #allocation1 [shape = 'u32[144,128]{1,0:T(1,128)}', space=vmem, size = 0x12000, scoped, tag = 'internal scratch']
  %s0 = inlined_call_operand.vmem [shape: f32[24,32], index: 0, kind: input, shape index: {}]
  %s1 = inlined_call_operand.vmem [shape: bf16[32,64], index: 1, kind: input, shape index: {}]
  %s2 = inlined_call_operand.vmem [shape: f32[1,64], index: 2, kind: input, shape index: {}]
  %s3 = inlined_call_operand.vmem [shape: bf16[24,64], index: 3, kind: output, shape index: {}]
  %s4 = sld [smem:[#allocation0]]
  $region22: #{fwd.12} parent=0
    _
  %s6 = ssub.s32 1, %s4
  %s7 = scalar_select 0, %s6, %s4
  // Predicated region
  $region2: #{fwd.12} parent=0 // pred_check
    _
  $region3: #{fwd.12} parent=0 // pred_check_branch
    %9 = sbr.rel (0) target = $region5
  $region4: #{fwd.12} parent=0 // pred_region
    _
  $region5: #{fwd.12} parent=0 // pred_fallthru
    _
  // Predicated region
  $region6: #{fwd.12} parent=0 // pred_check
    _
  $region7: #{fwd.12} parent=0 // pred_check_branch
    %11 = sbr.rel (0) target = $region9
  $region8: #{fwd.12} parent=0 // pred_region
    _
  $region9: #{fwd.12} parent=0 // pred_fallthru
    _
  // Predicated region
  $region10: #{fwd.12} parent=0 // pred_check
    _
  $region11: #{fwd.12} parent=0 // pred_check_branch
    %13 = sbr.rel (0) target = $region13
  $region12: #{fwd.12} parent=0 // pred_region
    _
  $region13: #{fwd.12} parent=0 // pred_fallthru
    _
  %v15 = vld [vmem:[%s0] sm:$0xff]
  %v16 = vld [vmem:[%s0 + $0x8] sm:$0xff]
  %v17 = vld [vmem:[%s0 + $0x10] sm:$0xff]
  %v18 = vpack.c.bf16 %v16, %v15
  %v19 = vpack.c.bf16 %v17, %v17
  %v20 = vld [vmem:[%s1] sm:$0xf]
  %v21 = vld [vmem:[%s1 + $0x4] sm:$0xf]
  %v22 = vld [vmem:[%s1 + $0x8] sm:$0xf]
  %v23 = vld [vmem:[%s1 + $0xc] sm:$0xf]
  %v24 = vld [vmem:[%s2] sm:$0x1]
  %v26 = vlaneseq
  %v27 = vshrl.u32 %v26, 7
  %v28 = vsub.s32 0, %v27
  %v29 = vrot.slane %v24, %v28
  %v35 = vunpack.c.l.b16 %v20
  %v36 = vunpack.c.l.b16 %v21
  %v37 = vunpack.c.l.b16 %v22
  %v38 = vunpack.c.l.b16 %v23
  %v39 = vpack.c.b16 %v36, %v35
  %v40 = vpack.c.b16 %v38, %v37
  %vm43 = vcmask 261120
  %v45 = vsel %vm43, %v18, 0
  %v48 = vsel %vm43, %v19, 0
  %50 = vmatprep.subr.bf16.mxu0 0
  %51 = vmatpush1.bf16.msra.mxu0 0
  %52 = vmatprep.subr.bf16.mxu0 0
  %53 = vmatpush1.bf16.msra.mxu0 0
  %54 = vmatprep.subr.bf16.mxu0 0
  %55 = vmatpush1.bf16.msra.mxu0 0
  %56 = vmatprep.subr.bf16.mxu0 0
  %57 = vmatpush1.bf16.msra.mxu0 0
  %58 = vmatprep.subr.bf16.mxu0 0
  %59 = vmatpush1.bf16.msra.mxu0 0
  %60 = vmatprep.subr.bf16.mxu0 0
  %61 = vmatpush1.bf16.msra.mxu0 0
  %62 = vmatprep.subr.bf16.mxu0 0
  %63 = vmatpush1.bf16.msra.mxu0 %v40
  %64 = vmatprep.subr.bf16.mxu0 0
  %65 = vmatpush1.bf16.msra.mxu0 %v39
  %66 = vmatprep.subr.bf16.mxu0 0
  %67 = vmatpush2.bf16.msra.mxu0 0
  %68 = vmatprep.subr.bf16.mxu0 0
  %69 = vmatpush2.bf16.msra.mxu0 0
  %70 = vmatprep.subr.bf16.mxu0 0
  %71 = vmatpush2.bf16.msra.mxu0 0
  %72 = vmatprep.subr.bf16.mxu0 0
  %73 = vmatpush2.bf16.msra.mxu0 0
  %74 = vmatprep.subr.bf16.mxu0 0
  %75 = vmatpush2.bf16.msra.mxu0 0
  %76 = vmatprep.subr.bf16.mxu0 0
  %77 = vmatpush2.bf16.msra.mxu0 0
  %78 = vmatprep.subr.bf16.mxu0 0
  %79 = vmatpush2.bf16.msra.mxu0 0
  %80 = vmatprep.subr.bf16.mxu0 0
  %81 = vmatpush2.bf16.msra.mxu0 0
  %82 = vmatprep.mubr.bf16.mxu0 0
  %83 = vmatmul.mubr.bf16.gmra.mxu0 %v45
  %v84 = vpop.f32.mrf.mxu0
  %v85 = vadd.f32 %v29, %v84
  %v86 = vpop.f32.mrf.mxu0
  %v87 = vpop.f32.mrf.mxu0
  %v88 = vadd.f32 %v29, %v87
  %v89 = vpop.f32.mrf.mxu0
  %90 = vmatprep.mubr.bf16.mxu0 0
  %91 = vmatmul.mubr.bf16.gmra.mxu0 %v48
  %v92 = vpop.f32.mrf.mxu0
  %v93 = vadd.f32 %v29, %v92
  %v94 = vpop.f32.mrf.mxu0
  %v95 = vpop.f32.mrf.mxu0
  %v96 = vpop.f32.mrf.mxu0
  %97 = vdwg.mxu0
  %v98 = vpack.c.bf16 %v88, %v85
  %v99 = vpack.c.bf16 %v93, %v93
  %v102 = vunpack.c.l.b16 %v98
  %v103 = vunpack.c.h.b16 %v98
  %v104 = vunpack.c.l.b16 %v99
  %v105 = vpack.c.b16 %v102, %v102
  %v106 = vpack.c.b16 %v103, %v103
  %v107 = vpack.c.b16 %v104, %v104
  %vm111 = vcmask 519168
  %112 = vst.msk [vmem:[%s3] sm:$0xf] %vm111, %v105
  %113 = vst.msk [vmem:[%s3 + $0x4] sm:$0xf] %vm111, %v106
  %114 = vst.msk [vmem:[%s3 + $0x8] sm:$0xf] %vm111, %v107
  // Predicated region
  $region14: #{fwd.12} parent=0 // pred_check
    _
  $region15: #{fwd.12} parent=0 // pred_check_branch
    %116 = sbr.rel (0) target = $region17
  $region16: #{fwd.12} parent=0 // pred_region
    _
  $region17: #{fwd.12} parent=0 // pred_fallthru
    _
  // Predicated region
  $region18: #{fwd.12} parent=0 // pred_check
    _
  $region19: #{fwd.12} parent=0 // pred_check_branch
    %118 = sbr.rel (0) target = $region21
  $region20: #{fwd.12} parent=0 // pred_region
    _
  $region21: #{fwd.12} parent=0 // pred_fallthru
    _

// kernel: fwd.13
$region0: #{fwd.13}
  #allocation0 [shape = 'u32[]', space=smem, size = 0x4, offset = 0x4, fixed_abs, tag = 'smem constant byte address 0x4 - core index']
  #allocation1 [shape = 'u32[144,128]{1,0:T(1,128)}', space=vmem, size = 0x12000, scoped, tag = 'internal scratch']
  %s0 = inlined_call_operand.vmem [shape: bf16[2,8,32], index: 0, kind: input, shape index: {}]
  %s1 = inlined_call_operand.vmem [shape: bf16[2,10,64], index: 1, kind: input, shape index: {}]
  %s2 = inlined_call_operand.vmem [shape: bf16[2,8,32], index: 2, kind: output, shape index: {0}]
  %s3 = inlined_call_operand.hbm [shape: bf16[2,4,8,10], index: 3, kind: output, shape index: {1}]
  %4 = xla_tuple %s2, %s3
  %s5 = sld [smem:[#allocation0]]
  $region49: #{fwd.13} parent=0
    _
  %s7 = ssub.s32 1, %s5
  %s8 = scalar_select 0, %s7, %s5
  $region1: #{fwd.13} parent=0
    #allocation2 [shape = 'u8[16384]{0}', space=vmem, size = 0x4000, scoped, tag = 'output window, operand 1']
    #allocation3 [shape = 's32[2]{0}', space=sflag, size = 0x8, scoped, tag = 'scoped memory for fwd.13']
    %9 = vsyncpa [#allocation3], 0
    %s10 = scalar_lea.sflag [#allocation3], 1
    %11 = vsyncpa %s10, 0
    loop: start=0, step=1, limit=4
    $region2: #{fwd.13} parent=1 // loop_pre_header
      _
    $region3: #{fwd.13} parent=1 // loop_header
      %s13 = sphi 0, %s17
      %p14 = scmp.ge.s32.totalorder %s13, 4
      %s23 = sphi 0, %s25
      %s26 = sphi 0, %s23
      %s27 = sphi 0, %s26
      %s43 = sphi 0, %s27
      %s49 = sphi 0, %s51
      %s52 = sphi 0, %s49
      %s53 = sphi 0, %s52
      %s69 = sphi 0, %s53
      %s75 = sphi 0, %s77
      %s78 = sphi 0, %s75
      %s79 = sphi 0, %s78
      %s95 = sphi 0, %s79
      %s101 = sphi 0, %s103
      %s104 = sphi 0, %s101
      %s105 = sphi 0, %s104
      %s121 = sphi 0, %s105
    $region4: #{fwd.13} parent=1 // loop_header_branch
      %16 = sbr.rel (%p14) target = $region8
    $region5: #{fwd.13} parent=1 // loop_body
      %s18 = ssub.s32 %s13, 1
      %s19 = ssub.s32 %s13, 2
      %s20 = sadd.s32 %s13, 1
      %s21 = ssub.s32 %s13, %s20
      %p22 = scmp.eq.s32.totalorder %s21, 0
      %s24 = sadd.s32 %s23, 1
      %s25 = scalar_select %p22, %s23, %s24
      %p28 = pneg %p22
      %p29 = scmp.eq.s32.totalorder %s13, 1
      %p30 = por %p28, %p29
      %p31 = scmp.ne.s32.totalorder %s23, %s26
      %p32 = scmp.eq.s32.totalorder %s13, 0
      %p33 = por %p31, %p32
      %p34 = scmp.ne.s32.totalorder %s23, %s26
      %p35 = scmp.eq.s32.totalorder %s18, 1
      %p36 = por %p34, %p35
      %p37 = scmp.ne.s32.totalorder %s26, %s27
      %p38 = scmp.eq.s32.totalorder %s18, 0
      %p39 = por %p37, %p38
      %p40 = scmp.ne.s32.totalorder %s26, %s27
      %p41 = scmp.eq.s32.totalorder %s19, 1
      %p42 = por %p40, %p41
      %p44 = scmp.ne.s32.totalorder %s27, %s43
      %p45 = scmp.eq.s32.totalorder %s19, 0
      %p46 = por %p44, %p45
      %s47 = ssub.s32 %s13, %s20
      %p48 = scmp.eq.s32.totalorder %s47, 0
      %s50 = sadd.s32 %s49, 1
      %s51 = scalar_select %p48, %s49, %s50
      %p54 = pneg %p48
      %p55 = scmp.eq.s32.totalorder %s13, 1
      %p56 = por %p54, %p55
      %p57 = scmp.ne.s32.totalorder %s49, %s52
      %p58 = scmp.eq.s32.totalorder %s13, 0
      %p59 = por %p57, %p58
      %p60 = scmp.ne.s32.totalorder %s49, %s52
      %p61 = scmp.eq.s32.totalorder %s18, 1
      %p62 = por %p60, %p61
      %p63 = scmp.ne.s32.totalorder %s52, %s53
      %p64 = scmp.eq.s32.totalorder %s18, 0
      %p65 = por %p63, %p64
      %p66 = scmp.ne.s32.totalorder %s52, %s53
      %p67 = scmp.eq.s32.totalorder %s19, 1
      %p68 = por %p66, %p67
      %p70 = scmp.ne.s32.totalorder %s53, %s69
      %p71 = scmp.eq.s32.totalorder %s19, 0
      %p72 = por %p70, %p71
      %s73 = ssub.s32 %s13, %s20
      %p74 = scmp.eq.s32.totalorder %s73, 0
      %s76 = sadd.s32 %s75, 1
      %s77 = scalar_select %p74, %s75, %s76
      %p80 = pneg %p74
      %p81 = scmp.eq.s32.totalorder %s13, 1
      %p82 = por %p80, %p81
      %p83 = scmp.ne.s32.totalorder %s75, %s78
      %p84 = scmp.eq.s32.totalorder %s13, 0
      %p85 = por %p83, %p84
      %p86 = scmp.ne.s32.totalorder %s75, %s78
      %p87 = scmp.eq.s32.totalorder %s18, 1
      %p88 = por %p86, %p87
      %p89 = scmp.ne.s32.totalorder %s78, %s79
      %p90 = scmp.eq.s32.totalorder %s18, 0
      %p91 = por %p89, %p90
      %p92 = scmp.ne.s32.totalorder %s78, %s79
      %p93 = scmp.eq.s32.totalorder %s19, 1
      %p94 = por %p92, %p93
      %p96 = scmp.ne.s32.totalorder %s79, %s95
      %p97 = scmp.eq.s32.totalorder %s19, 0
      %p98 = por %p96, %p97
      %s99 = ssub.s32 %s13, %s20
      %p100 = scmp.eq.s32.totalorder %s99, 0
      %s102 = sadd.s32 %s101, 1
      %s103 = scalar_select %p100, %s101, %s102
      %p106 = pneg %p100
      %p107 = scmp.eq.s32.totalorder %s13, 1
      %p108 = por %p106, %p107
      %p109 = scmp.ne.s32.totalorder %s101, %s104
      %p110 = scmp.eq.s32.totalorder %s13, 0
      %p111 = por %p109, %p110
      %p112 = scmp.ne.s32.totalorder %s101, %s104
      %p113 = scmp.eq.s32.totalorder %s18, 1
      %p114 = por %p112, %p113
      %p115 = scmp.ne.s32.totalorder %s104, %s105
      %p116 = scmp.eq.s32.totalorder %s18, 0
      %p117 = por %p115, %p116
      %p118 = scmp.ne.s32.totalorder %s104, %s105
      %p119 = scmp.eq.s32.totalorder %s19, 1
      %p120 = por %p118, %p119
      %p122 = scmp.ne.s32.totalorder %s105, %s121
      %p123 = scmp.eq.s32.totalorder %s19, 0
      %p124 = por %p122, %p123
      %p125 = scmp.le.s32.totalorder 1, %s13
      %p126 = scmp.lt.s32.totalorder %s13, 3
      %p127 = pnand %p125, %p126
      %p128 = pneg %p127
      // Predicated region
      $region9: #{fwd.13} parent=5 // pred_check
        _
      $region10: #{fwd.13} parent=5 // pred_check_branch
        %130 = sbr.rel (%p127) target = $region12
      $region11: #{fwd.13} parent=5 // pred_region
        %s131 = ssub.s32 %s13, 1
      $region12: #{fwd.13} parent=5 // pred_fallthru
        _
      %p132 = scmp.lt.s32.totalorder %s13, 2
      // Predicated region
      $region13: #{fwd.13} parent=5 // pred_check
        %p133 = pneg %p132
      $region14: #{fwd.13} parent=5 // pred_check_branch
        %135 = sbr.rel (%p133) target = $region16
      $region15: #{fwd.13} parent=5 // pred_region
        // Predicated region
        $region17: #{fwd.13} parent=15 // pred_check
          %p136 = pneg %p33
        $region18: #{fwd.13} parent=15 // pred_check_branch
          %138 = sbr.rel (%p136) target = $region20
        $region19: #{fwd.13} parent=15 // pred_region
          %p139 = scmp.lt.s32.totalorder %s13, 1
          %s140 = scalar_select %p139, %s13, 1
          %s141 = smul.addr %s140, 4
          %s142 = scalar_lea.vmem %s0, %s141
        $region20: #{fwd.13} parent=15 // pred_fallthru
          _
        // Predicated region
        $region21: #{fwd.13} parent=15 // pred_check
          %p143 = pneg %p59
        $region22: #{fwd.13} parent=15 // pred_check_branch
          %145 = sbr.rel (%p143) target = $region24
        $region23: #{fwd.13} parent=15 // pred_region
          %p146 = scmp.lt.s32.totalorder %s13, 1
          %s147 = scalar_select %p146, %s13, 1
          %s148 = smul.addr %s147, 2
          %s149 = smul.addr %s148, 4
          %s150 = scalar_lea.vmem %s1, %s149
        $region24: #{fwd.13} parent=15 // pred_fallthru
          _
      $region16: #{fwd.13} parent=5 // pred_fallthru
        _
      %p151 = scmp.le.s32.totalorder 1, %s13
      %p152 = scmp.lt.s32.totalorder %s13, 3
      %p153 = pnand %p151, %p152
      %p154 = pneg %p153
      // Predicated region
      $region25: #{fwd.13} parent=5 // pred_check
        _
      $region26: #{fwd.13} parent=5 // pred_check_branch
        %156 = sbr.rel (%p153) target = $region28
      $region27: #{fwd.13} parent=5 // pred_region
        %s157 = ssub.s32 %s13, 1
        %p158 = scmp.lt.s32.totalorder %s18, 1
        %s159 = scalar_select %p158, %s18, 1
        %s160 = smul.addr %s159, 4
        %s161 = scalar_lea.vmem %s0, %s160
        %p162 = pneg %p39
        %p163 = pneg %p36
        %p164 = scmp.lt.s32.totalorder %s18, 1
        %s165 = scalar_select %p164, %s18, 1
        %s166 = smul.addr %s165, 2
        %s167 = smul.addr %s166, 4
        %s168 = scalar_lea.vmem %s1, %s167
        %p169 = pneg %p65
        %p170 = pneg %p62
        %p171 = pneg %p91
        %p172 = pneg %p88
        %p173 = scmp.lt.s32.totalorder %s18, 1
        %s174 = scalar_select %p173, %s18, 1
        %s175 = smul.addr %s174, 4
        %s176 = scalar_lea.vmem %s2, %s175
        %p177 = pneg %p117
        %p178 = pneg %p114
        %s179 = sand.u32 %s104, 1
        %s180 = scalar_lea.sflag [#allocation3], %s179
        %s181 = sand.u32 %s104, 1
        %s182 = smul.addr %s181, 16
        %s183 = scalar_lea.vmem [#allocation2], %s182
        %p184 = scmp.lt.s32.totalorder %s18, 1
        %s185 = scalar_select %p184, %s18, 1
        %s186 = smul.addr %s185, 4
        %s187 = scalar_lea.vmem %s0, %s186
        %p188 = scmp.lt.s32.totalorder %s18, 1
        %s189 = scalar_select %p188, %s18, 1
        %s190 = smul.addr %s189, 2
        %s191 = smul.addr %s190, 4
        %s192 = scalar_lea.vmem %s1, %s191
        %p193 = scmp.lt.s32.totalorder %s18, 1
        %s194 = scalar_select %p193, %s18, 1
        %s195 = smul.addr %s194, 4
        %s196 = scalar_lea.vmem %s2, %s195
        %v198 = vld [vmem:[%s187] sm:$0xf]
        %v199 = vld [vmem:[%s192] sm:$0xf]
        %v200 = vld [vmem:[%s192 + $0x4] sm:$0x1]
        %v203 = vunpack.c.l.b16 %v199
        %v204 = vunpack.c.l.b16 %v200
        %v205 = vpack.c.b16 %v204, %v203
        %vm206 = vcmask 64512
        %v208 = vsel %vm206, %v198, 0
        %v211 = vsel %vm206, %v205, 0
        %213 = vmatprep.subr.bf16.mxu0 0
        %214 = vmatpush1.bf16.xpose.msra.mxu0 0
        %215 = vmatprep.subr.bf16.mxu0 0
        %216 = vmatpush1.bf16.xpose.msra.mxu0 0
        %217 = vmatprep.subr.bf16.mxu0 0
        %218 = vmatpush1.bf16.xpose.msra.mxu0 0
        %219 = vmatprep.subr.bf16.mxu0 0
        %220 = vmatpush1.bf16.xpose.msra.mxu0 0
        %221 = vmatprep.subr.bf16.mxu0 0
        %222 = vmatpush1.bf16.xpose.msra.mxu0 0
        %223 = vmatprep.subr.bf16.mxu0 0
        %224 = vmatpush1.bf16.xpose.msra.mxu0 0
        %225 = vmatprep.subr.bf16.mxu0 0
        %226 = vmatpush1.bf16.xpose.msra.mxu0 0
        %227 = vmatprep.subr.bf16.mxu0 0
        %228 = vmatpush1.bf16.xpose.msra.mxu0 %v211
        %229 = vmatprep.subr.bf16.mxu0 0
        %230 = vmatpush2.bf16.xpose.msra.mxu0 0
        %231 = vmatprep.subr.bf16.mxu0 0
        %232 = vmatpush2.bf16.xpose.msra.mxu0 0
        %233 = vmatprep.subr.bf16.mxu0 0
        %234 = vmatpush2.bf16.xpose.msra.mxu0 0
        %235 = vmatprep.subr.bf16.mxu0 0
        %236 = vmatpush2.bf16.xpose.msra.mxu0 0
        %237 = vmatprep.subr.bf16.mxu0 0
        %238 = vmatpush2.bf16.xpose.msra.mxu0 0
        %239 = vmatprep.subr.bf16.mxu0 0
        %240 = vmatpush2.bf16.xpose.msra.mxu0 0
        %241 = vmatprep.subr.bf16.mxu0 0
        %242 = vmatpush2.bf16.xpose.msra.mxu0 0
        %243 = vmatprep.subr.bf16.mxu0 0
        %244 = vmatpush2.bf16.xpose.msra.mxu0 0
        %245 = vmatprep.mubr.bf16.mxu0 0
        %246 = vmatmul.mubr.bf16.gmra.mxu0 %v208
        %v247 = vpop.f32.mrf.mxu0
        %v248 = vadd.f32 0.0, %v247
        %v249 = vpop.f32.mrf.mxu0
        %v250 = vpop.f32.mrf.mxu0
        %v251 = vpop.f32.mrf.mxu0
        %252 = vdwg.mxu0
        %vm253 = vcmask 80896
        %v254 = vsel %vm253, %v248, -inf
        %255 = vmax.xlane.f32.xlu0 %v254
        %v256 = vpop.xlane.xlu0 %255
        %v257 = vsub.f32 %v248, %v256
        %v258 = vmul.f32 %v257, 1.442695
        %v259 = vpow.pop %v258
        %v260 = vsel %vm253, %v259, 0.0
        %261 = vadd.xlane.f32.xlu0 %v260
        %v262 = vpop.xlane.xlu0 %261
        %v263 = vrcp.pop %v262
        %v264 = vmul.f32 %v259, %v263
        %v265 = vpack.c.bf16 %v264, %v264
        %vm266 = vcmask 76800
        %267 = vst.msk [vmem:[%s183] sm:$0xf] %vm266, %v265
        %268 = vrot.lane.b32.xlu0 %v205, 96
        %v269 = vpop.permute.xlu0 %268
        %v271 = vsel %vm253, %v265, 0
        %vm273 = vcmask 1044480
        %v275 = vsel %vm273, %v269, 0
        %277 = vmatprep.subr.bf16.mxu0 0
        %278 = vmatpush1.bf16.msra.mxu0 0
        %279 = vmatprep.subr.bf16.mxu0 0
        %280 = vmatpush1.bf16.msra.mxu0 0
        %281 = vmatprep.subr.bf16.mxu0 0
        %282 = vmatpush1.bf16.msra.mxu0 0
        %283 = vmatprep.subr.bf16.mxu0 0
        %284 = vmatpush1.bf16.msra.mxu0 0
        %285 = vmatprep.subr.bf16.mxu0 0
        %286 = vmatpush1.bf16.msra.mxu0 0
        %287 = vmatprep.subr.bf16.mxu0 0
        %288 = vmatpush1.bf16.msra.mxu0 0
        %289 = vmatprep.subr.bf16.mxu0 0
        %290 = vmatpush1.bf16.msra.mxu0 0
        %291 = vmatprep.subr.bf16.mxu0 0
        %292 = vmatpush1.bf16.msra.mxu0 %v275
        %293 = vmatprep.subr.bf16.mxu0 0
        %294 = vmatpush2.bf16.msra.mxu0 0
        %295 = vmatprep.subr.bf16.mxu0 0
        %296 = vmatpush2.bf16.msra.mxu0 0
        %297 = vmatprep.subr.bf16.mxu0 0
        %298 = vmatpush2.bf16.msra.mxu0 0
        %299 = vmatprep.subr.bf16.mxu0 0
        %300 = vmatpush2.bf16.msra.mxu0 0
        %301 = vmatprep.subr.bf16.mxu0 0
        %302 = vmatpush2.bf16.msra.mxu0 0
        %303 = vmatprep.subr.bf16.mxu0 0
        %304 = vmatpush2.bf16.msra.mxu0 0
        %305 = vmatprep.subr.bf16.mxu0 0
        %306 = vmatpush2.bf16.msra.mxu0 0
        %307 = vmatprep.subr.bf16.mxu0 0
        %308 = vmatpush2.bf16.msra.mxu0 0
        %309 = vmatprep.mubr.bf16.mxu0 0
        %310 = vmatmul.mubr.bf16.gmra.mxu0 %v271
        %v311 = vpop.f32.mrf.mxu0
        %v312 = vadd.f32 0.0, %v311
        %v313 = vpop.f32.mrf.mxu0
        %v314 = vpop.f32.mrf.mxu0
        %v315 = vpop.f32.mrf.mxu0
        %316 = vdwg.mxu0
        %v318 = vunpack.c.l.b16 %v198
        %v319 = vpack.c.b16 %v318, %v318
        %320 = vrot.lane.b32.xlu0 %v319, 120
        %v321 = vpop.permute.xlu0 %320
        %322 = vrot.lane.b32.xlu0 %v205, 120
        %v323 = vpop.permute.xlu0 %322
        %v325 = vsel %vm206, %v321, 0
        %v328 = vsel %vm206, %v323, 0
        %330 = vmatprep.subr.bf16.mxu0 0
        %331 = vmatpush1.bf16.xpose.msra.mxu0 0
        %332 = vmatprep.subr.bf16.mxu0 0
        %333 = vmatpush1.bf16.xpose.msra.mxu0 0
        %334 = vmatprep.subr.bf16.mxu0 0
        %335 = vmatpush1.bf16.xpose.msra.mxu0 0
        %336 = vmatprep.subr.bf16.mxu0 0
        %337 = vmatpush1.bf16.xpose.msra.mxu0 0
        %338 = vmatprep.subr.bf16.mxu0 0
        %339 = vmatpush1.bf16.xpose.msra.mxu0 0
        %340 = vmatprep.subr.bf16.mxu0 0
        %341 = vmatpush1.bf16.xpose.msra.mxu0 0
        %342 = vmatprep.subr.bf16.mxu0 0
        %343 = vmatpush1.bf16.xpose.msra.mxu0 0
        %344 = vmatprep.subr.bf16.mxu0 0
        %345 = vmatpush1.bf16.xpose.msra.mxu0 %v328
        %346 = vmatprep.subr.bf16.mxu0 0
        %347 = vmatpush2.bf16.xpose.msra.mxu0 0
        %348 = vmatprep.subr.bf16.mxu0 0
        %349 = vmatpush2.bf16.xpose.msra.mxu0 0
        %350 = vmatprep.subr.bf16.mxu0 0
        %351 = vmatpush2.bf16.xpose.msra.mxu0 0
        %352 = vmatprep.subr.bf16.mxu0 0
        %353 = vmatpush2.bf16.xpose.msra.mxu0 0
        %354 = vmatprep.subr.bf16.mxu0 0
        %355 = vmatpush2.bf16.xpose.msra.mxu0 0
        %356 = vmatprep.subr.bf16.mxu0 0
        %357 = vmatpush2.bf16.xpose.msra.mxu0 0
        %358 = vmatprep.subr.bf16.mxu0 0
        %359 = vmatpush2.bf16.xpose.msra.mxu0 0
        %360 = vmatprep.subr.bf16.mxu0 0
        %361 = vmatpush2.bf16.xpose.msra.mxu0 0
        %362 = vmatprep.mubr.bf16.mxu0 0
        %363 = vmatmul.mubr.bf16.gmra.mxu0 %v325
        %v364 = vpop.f32.mrf.mxu0
        %v365 = vadd.f32 0.0, %v364
        %v366 = vpop.f32.mrf.mxu0
        %v367 = vpop.f32.mrf.mxu0
        %v368 = vpop.f32.mrf.mxu0
        %369 = vdwg.mxu0
        %v370 = vsel %vm253, %v365, -inf
        %371 = vmax.xlane.f32.xlu0 %v370
        %v372 = vpop.xlane.xlu0 %371
        %v373 = vsub.f32 %v365, %v372
        %v374 = vmul.f32 %v373, 1.442695
        %v375 = vpow.pop %v374
        %v376 = vsel %vm253, %v375, 0.0
        %377 = vadd.xlane.f32.xlu0 %v376
        %v378 = vpop.xlane.xlu0 %377
        %v379 = vrcp.pop %v378
        %v380 = vmul.f32 %v375, %v379
        %v381 = vpack.c.bf16 %v380, %v380
        %s382 = scalar_lea.vmem %s183, 4 [#allocation2]
        %383 = vst.msk [vmem:[%s382] sm:$0xf] %vm266, %v381
        %384 = vrot.lane.b32.xlu0 %v205, 88
        %v385 = vpop.permute.xlu0 %384
        %v387 = vsel %vm253, %v381, 0
        %v390 = vsel %vm273, %v385, 0
        %392 = vmatprep.subr.bf16.mxu0 0
        %393 = vmatpush1.bf16.msra.mxu0 0
        %394 = vmatprep.subr.bf16.mxu0 0
        %395 = vmatpush1.bf16.msra.mxu0 0
        %396 = vmatprep.subr.bf16.mxu0 0
        %397 = vmatpush1.bf16.msra.mxu0 0
        %398 = vmatprep.subr.bf16.mxu0 0
        %399 = vmatpush1.bf16.msra.mxu0 0
        %400 = vmatprep.subr.bf16.mxu0 0
        %401 = vmatpush1.bf16.msra.mxu0 0
        %402 = vmatprep.subr.bf16.mxu0 0
        %403 = vmatpush1.bf16.msra.mxu0 0
        %404 = vmatprep.subr.bf16.mxu0 0
        %405 = vmatpush1.bf16.msra.mxu0 0
        %406 = vmatprep.subr.bf16.mxu0 0
        %407 = vmatpush1.bf16.msra.mxu0 %v390
        %408 = vmatprep.subr.bf16.mxu0 0
        %409 = vmatpush2.bf16.msra.mxu0 0
        %410 = vmatprep.subr.bf16.mxu0 0
        %411 = vmatpush2.bf16.msra.mxu0 0
        %412 = vmatprep.subr.bf16.mxu0 0
        %413 = vmatpush2.bf16.msra.mxu0 0
        %414 = vmatprep.subr.bf16.mxu0 0
        %415 = vmatpush2.bf16.msra.mxu0 0
        %416 = vmatprep.subr.bf16.mxu0 0
        %417 = vmatpush2.bf16.msra.mxu0 0
        %418 = vmatprep.subr.bf16.mxu0 0
        %419 = vmatpush2.bf16.msra.mxu0 0
        %420 = vmatprep.subr.bf16.mxu0 0
        %421 = vmatpush2.bf16.msra.mxu0 0
        %422 = vmatprep.subr.bf16.mxu0 0
        %423 = vmatpush2.bf16.msra.mxu0 0
        %424 = vmatprep.mubr.bf16.mxu0 0
        %425 = vmatmul.mubr.bf16.gmra.mxu0 %v387
        %v426 = vpop.f32.mrf.mxu0
        %v427 = vadd.f32 0.0, %v426
        %v428 = vpop.f32.mrf.mxu0
        %v429 = vpop.f32.mrf.mxu0
        %v430 = vpop.f32.mrf.mxu0
        %431 = vdwg.mxu0
        %432 = vrot.lane.b32.xlu0 %v319, 112
        %v433 = vpop.permute.xlu0 %432
        %434 = vrot.lane.b32.xlu0 %v205, 112
        %v435 = vpop.permute.xlu0 %434
        %v437 = vsel %vm206, %v433, 0
        %v440 = vsel %vm206, %v435, 0
        %442 = vmatprep.subr.bf16.mxu0 0
        %443 = vmatpush1.bf16.xpose.msra.mxu0 0
        %444 = vmatprep.subr.bf16.mxu0 0
        %445 = vmatpush1.bf16.xpose.msra.mxu0 0
        %446 = vmatprep.subr.bf16.mxu0 0
        %447 = vmatpush1.bf16.xpose.msra.mxu0 0
        %448 = vmatprep.subr.bf16.mxu0 0
        %449 = vmatpush1.bf16.xpose.msra.mxu0 0
        %450 = vmatprep.subr.bf16.mxu0 0
        %451 = vmatpush1.bf16.xpose.msra.mxu0 0
        %452 = vmatprep.subr.bf16.mxu0 0
        %453 = vmatpush1.bf16.xpose.msra.mxu0 0
        %454 = vmatprep.subr.bf16.mxu0 0
        %455 = vmatpush1.bf16.xpose.msra.mxu0 0
        %456 = vmatprep.subr.bf16.mxu0 0
        %457 = vmatpush1.bf16.xpose.msra.mxu0 %v440
        %458 = vmatprep.subr.bf16.mxu0 0
        %459 = vmatpush2.bf16.xpose.msra.mxu0 0
        %460 = vmatprep.subr.bf16.mxu0 0
        %461 = vmatpush2.bf16.xpose.msra.mxu0 0
        %462 = vmatprep.subr.bf16.mxu0 0
        %463 = vmatpush2.bf16.xpose.msra.mxu0 0
        %464 = vmatprep.subr.bf16.mxu0 0
        %465 = vmatpush2.bf16.xpose.msra.mxu0 0
        %466 = vmatprep.subr.bf16.mxu0 0
        %467 = vmatpush2.bf16.xpose.msra.mxu0 0
        %468 = vmatprep.subr.bf16.mxu0 0
        %469 = vmatpush2.bf16.xpose.msra.mxu0 0
        %470 = vmatprep.subr.bf16.mxu0 0
        %471 = vmatpush2.bf16.xpose.msra.mxu0 0
        %472 = vmatprep.subr.bf16.mxu0 0
        %473 = vmatpush2.bf16.xpose.msra.mxu0 0
        %474 = vmatprep.mubr.bf16.mxu0 0
        %475 = vmatmul.mubr.bf16.gmra.mxu0 %v437
        %v476 = vpop.f32.mrf.mxu0
        %v477 = vadd.f32 0.0, %v476
        %v478 = vpop.f32.mrf.mxu0
        %v479 = vpop.f32.mrf.mxu0
        %v480 = vpop.f32.mrf.mxu0
        %481 = vdwg.mxu0
        %v482 = vsel %vm253, %v477, -inf
        %483 = vmax.xlane.f32.xlu0 %v482
        %v484 = vpop.xlane.xlu0 %483
        %v485 = vsub.f32 %v477, %v484
        %v486 = vmul.f32 %v485, 1.442695
        %v487 = vpow.pop %v486
        %v488 = vsel %vm253, %v487, 0.0
        %489 = vadd.xlane.f32.xlu0 %v488
        %v490 = vpop.xlane.xlu0 %489
        %v491 = vrcp.pop %v490
        %v492 = vmul.f32 %v487, %v491
        %v493 = vpack.c.bf16 %v492, %v492
        %s494 = scalar_lea.vmem %s183, 8 [#allocation2]
        %495 = vst.msk [vmem:[%s494] sm:$0xf] %vm266, %v493
        %496 = vrot.lane.b32.xlu0 %v205, 80
        %v497 = vpop.permute.xlu0 %496
        %v499 = vsel %vm253, %v493, 0
        %v502 = vsel %vm273, %v497, 0
        %504 = vmatprep.subr.bf16.mxu0 0
        %505 = vmatpush1.bf16.msra.mxu0 0
        %506 = vmatprep.subr.bf16.mxu0 0
        %507 = vmatpush1.bf16.msra.mxu0 0
        %508 = vmatprep.subr.bf16.mxu0 0
        %509 = vmatpush1.bf16.msra.mxu0 0
        %510 = vmatprep.subr.bf16.mxu0 0
        %511 = vmatpush1.bf16.msra.mxu0 0
        %512 = vmatprep.subr.bf16.mxu0 0
        %513 = vmatpush1.bf16.msra.mxu0 0
        %514 = vmatprep.subr.bf16.mxu0 0
        %515 = vmatpush1.bf16.msra.mxu0 0
        %516 = vmatprep.subr.bf16.mxu0 0
        %517 = vmatpush1.bf16.msra.mxu0 0
        %518 = vmatprep.subr.bf16.mxu0 0
        %519 = vmatpush1.bf16.msra.mxu0 %v502
        %520 = vmatprep.subr.bf16.mxu0 0
        %521 = vmatpush2.bf16.msra.mxu0 0
        %522 = vmatprep.subr.bf16.mxu0 0
        %523 = vmatpush2.bf16.msra.mxu0 0
        %524 = vmatprep.subr.bf16.mxu0 0
        %525 = vmatpush2.bf16.msra.mxu0 0
        %526 = vmatprep.subr.bf16.mxu0 0
        %527 = vmatpush2.bf16.msra.mxu0 0
        %528 = vmatprep.subr.bf16.mxu0 0
        %529 = vmatpush2.bf16.msra.mxu0 0
        %530 = vmatprep.subr.bf16.mxu0 0
        %531 = vmatpush2.bf16.msra.mxu0 0
        %532 = vmatprep.subr.bf16.mxu0 0
        %533 = vmatpush2.bf16.msra.mxu0 0
        %534 = vmatprep.subr.bf16.mxu0 0
        %535 = vmatpush2.bf16.msra.mxu0 0
        %536 = vmatprep.mubr.bf16.mxu0 0
        %537 = vmatmul.mubr.bf16.gmra.mxu0 %v499
        %v538 = vpop.f32.mrf.mxu0
        %v539 = vadd.f32 0.0, %v538
        %v540 = vpop.f32.mrf.mxu0
        %v541 = vpop.f32.mrf.mxu0
        %v542 = vpop.f32.mrf.mxu0
        %543 = vdwg.mxu0
        %544 = vrot.lane.b32.xlu0 %v319, 104
        %v545 = vpop.permute.xlu0 %544
        %546 = vrot.lane.b32.xlu0 %v205, 104
        %v547 = vpop.permute.xlu0 %546
        %v549 = vsel %vm206, %v545, 0
        %v552 = vsel %vm206, %v547, 0
        %554 = vmatprep.subr.bf16.mxu0 0
        %555 = vmatpush1.bf16.xpose.msra.mxu0 0
        %556 = vmatprep.subr.bf16.mxu0 0
        %557 = vmatpush1.bf16.xpose.msra.mxu0 0
        %558 = vmatprep.subr.bf16.mxu0 0
        %559 = vmatpush1.bf16.xpose.msra.mxu0 0
        %560 = vmatprep.subr.bf16.mxu0 0
        %561 = vmatpush1.bf16.xpose.msra.mxu0 0
        %562 = vmatprep.subr.bf16.mxu0 0
        %563 = vmatpush1.bf16.xpose.msra.mxu0 0
        %564 = vmatprep.subr.bf16.mxu0 0
        %565 = vmatpush1.bf16.xpose.msra.mxu0 0
        %566 = vmatprep.subr.bf16.mxu0 0
        %567 = vmatpush1.bf16.xpose.msra.mxu0 0
        %568 = vmatprep.subr.bf16.mxu0 0
        %569 = vmatpush1.bf16.xpose.msra.mxu0 %v552
        %570 = vmatprep.subr.bf16.mxu0 0
        %571 = vmatpush2.bf16.xpose.msra.mxu0 0
        %572 = vmatprep.subr.bf16.mxu0 0
        %573 = vmatpush2.bf16.xpose.msra.mxu0 0
        %574 = vmatprep.subr.bf16.mxu0 0
        %575 = vmatpush2.bf16.xpose.msra.mxu0 0
        %576 = vmatprep.subr.bf16.mxu0 0
        %577 = vmatpush2.bf16.xpose.msra.mxu0 0
        %578 = vmatprep.subr.bf16.mxu0 0
        %579 = vmatpush2.bf16.xpose.msra.mxu0 0
        %580 = vmatprep.subr.bf16.mxu0 0
        %581 = vmatpush2.bf16.xpose.msra.mxu0 0
        %582 = vmatprep.subr.bf16.mxu0 0
        %583 = vmatpush2.bf16.xpose.msra.mxu0 0
        %584 = vmatprep.subr.bf16.mxu0 0
        %585 = vmatpush2.bf16.xpose.msra.mxu0 0
        %586 = vmatprep.mubr.bf16.mxu0 0
        %587 = vmatmul.mubr.bf16.gmra.mxu0 %v549
        %v588 = vpop.f32.mrf.mxu0
        %v589 = vadd.f32 0.0, %v588
        %v590 = vpop.f32.mrf.mxu0
        %v591 = vpop.f32.mrf.mxu0
        %v592 = vpop.f32.mrf.mxu0
        %593 = vdwg.mxu0
        %v594 = vsel %vm253, %v589, -inf
        %595 = vmax.xlane.f32.xlu0 %v594
        %v596 = vpop.xlane.xlu0 %595
        %v597 = vsub.f32 %v589, %v596
        %v598 = vmul.f32 %v597, 1.442695
        %v599 = vpow.pop %v598
        %v600 = vsel %vm253, %v599, 0.0
        %601 = vadd.xlane.f32.xlu0 %v600
        %v602 = vpop.xlane.xlu0 %601
        %v603 = vrcp.pop %v602
        %v604 = vmul.f32 %v599, %v603
        %v605 = vpack.c.bf16 %v604, %v604
        %s606 = scalar_lea.vmem %s183, 12 [#allocation2]
        %607 = vst.msk [vmem:[%s606] sm:$0xf] %vm266, %v605
        %608 = vrot.lane.b32.xlu0 %v205, 72
        %v609 = vpop.permute.xlu0 %608
        %v611 = vsel %vm253, %v605, 0
        %v614 = vsel %vm273, %v609, 0
        %616 = vmatprep.subr.bf16.mxu0 0
        %617 = vmatpush1.bf16.msra.mxu0 0
        %618 = vmatprep.subr.bf16.mxu0 0
        %619 = vmatpush1.bf16.msra.mxu0 0
        %620 = vmatprep.subr.bf16.mxu0 0
        %621 = vmatpush1.bf16.msra.mxu0 0
        %622 = vmatprep.subr.bf16.mxu0 0
        %623 = vmatpush1.bf16.msra.mxu0 0
        %624 = vmatprep.subr.bf16.mxu0 0
        %625 = vmatpush1.bf16.msra.mxu0 0
        %626 = vmatprep.subr.bf16.mxu0 0
        %627 = vmatpush1.bf16.msra.mxu0 0
        %628 = vmatprep.subr.bf16.mxu0 0
        %629 = vmatpush1.bf16.msra.mxu0 0
        %630 = vmatprep.subr.bf16.mxu0 0
        %631 = vmatpush1.bf16.msra.mxu0 %v614
        %632 = vmatprep.subr.bf16.mxu0 0
        %633 = vmatpush2.bf16.msra.mxu0 0
        %634 = vmatprep.subr.bf16.mxu0 0
        %635 = vmatpush2.bf16.msra.mxu0 0
        %636 = vmatprep.subr.bf16.mxu0 0
        %637 = vmatpush2.bf16.msra.mxu0 0
        %638 = vmatprep.subr.bf16.mxu0 0
        %639 = vmatpush2.bf16.msra.mxu0 0
        %640 = vmatprep.subr.bf16.mxu0 0
        %641 = vmatpush2.bf16.msra.mxu0 0
        %642 = vmatprep.subr.bf16.mxu0 0
        %643 = vmatpush2.bf16.msra.mxu0 0
        %644 = vmatprep.subr.bf16.mxu0 0
        %645 = vmatpush2.bf16.msra.mxu0 0
        %646 = vmatprep.subr.bf16.mxu0 0
        %647 = vmatpush2.bf16.msra.mxu0 0
        %648 = vmatprep.mubr.bf16.mxu0 0
        %649 = vmatmul.mubr.bf16.gmra.mxu0 %v611
        %v650 = vpop.f32.mrf.mxu0
        %v651 = vadd.f32 0.0, %v650
        %v652 = vpop.f32.mrf.mxu0
        %v653 = vpop.f32.mrf.mxu0
        %v654 = vpop.f32.mrf.mxu0
        %655 = vdwg.mxu0
        %657 = vrot.lane.b32.xlu0 %v427, 8
        %v658 = vpop.permute.xlu0 %657
        %661 = vrot.lane.b32.xlu0 %v539, 16
        %v662 = vpop.permute.xlu0 %661
        %665 = vrot.lane.b32.xlu0 %v651, 24
        %v666 = vpop.permute.xlu0 %665
        %v668 = vsel %vm206, %v312, %v658
        %vm669 = vcmask 130048
        %v670 = vsel %vm669, %v668, %v662
        %vm671 = vcmask 195584
        %v672 = vsel %vm671, %v670, %v666
        %v673 = vpack.c.bf16 %v672, %v672
        %vm674 = vcmask 257024
        %675 = vst.msk [vmem:[%s196] sm:$0xf] %vm674, %v673
        %p676 = scmp.lt.s32.totalorder %s18, 1
        %s677 = scalar_select %p676, %s18, 1
        %s678 = smul.addr %s677, 4
        %s679 = scalar_lea.vmem %s2, %s678
        %s680 = sand.u32 %s104, 1
        %s681 = scalar_lea.sflag [#allocation3], %s680
        %s682 = sand.u32 %s104, 1
        %s683 = smul.addr %s682, 16
        %s684 = scalar_lea.vmem [#allocation2], %s683
        // Predicated region
        $region29: #{fwd.13} parent=27 // pred_check
          %p685 = pneg %p88
        $region30: #{fwd.13} parent=27 // pred_check_branch
          %687 = sbr.rel (%p685) target = $region32
        $region31: #{fwd.13} parent=27 // pred_region
          _
        $region32: #{fwd.13} parent=27 // pred_fallthru
          _
        // Predicated region
        $region33: #{fwd.13} parent=27 // pred_check
          %p688 = pneg %p114
        $region34: #{fwd.13} parent=27 // pred_check_branch
          %690 = sbr.rel (%p688) target = $region36
        $region35: #{fwd.13} parent=27 // pred_region
          %s692 = ssub.s32 256, 256
          %693 = vsyncadd %s681, %s692
          %s694 = smul.addr %s18, 4
          %s695 = smul.addr %s694, 64
          %s696 = scalar_lea.hbm %s3, %s695
          %s697 = sshll.u32 %s684, 4
          %s698 = int_to_ptr.vmem [resolvable:$true] %s697
          %703 = dma.vmem_to_hbm [thread:$0]  %s698, 256, %s696, %s681, 64, 64, 4
        $region36: #{fwd.13} parent=27 // pred_fallthru
          _
      $region28: #{fwd.13} parent=5 // pred_fallthru
        _
      %p704 = scmp.le.s32.totalorder 2, %s13
      // Predicated region
      $region37: #{fwd.13} parent=5 // pred_check
        %p705 = pneg %p704
      $region38: #{fwd.13} parent=5 // pred_check_branch
        %707 = sbr.rel (%p705) target = $region40
      $region39: #{fwd.13} parent=5 // pred_region
        %s708 = ssub.s32 %s13, 2
        // Predicated region
        $region41: #{fwd.13} parent=39 // pred_check
          %p709 = pneg %p94
        $region42: #{fwd.13} parent=39 // pred_check_branch
          %711 = sbr.rel (%p709) target = $region44
        $region43: #{fwd.13} parent=39 // pred_region
          %p712 = scmp.lt.s32.totalorder %s19, 1
          %s713 = scalar_select %p712, %s19, 1
          %s714 = smul.addr %s713, 4
          %s715 = scalar_lea.vmem %s2, %s714
        $region44: #{fwd.13} parent=39 // pred_fallthru
          _
        // Predicated region
        $region45: #{fwd.13} parent=39 // pred_check
          %p716 = pneg %p120
        $region46: #{fwd.13} parent=39 // pred_check_branch
          %718 = sbr.rel (%p716) target = $region48
        $region47: #{fwd.13} parent=39 // pred_region
          %s719 = sand.u32 %s105, 1
          %s720 = scalar_lea.sflag [#allocation3], %s719
          %s721 = sand.u32 %s105, 1
          %s722 = smul.addr %s721, 16
          %s723 = scalar_lea.vmem [#allocation2], %s722
          %724 = dma.done %s720, 256
        $region48: #{fwd.13} parent=39 // pred_fallthru
          _
      $region40: #{fwd.13} parent=5 // pred_fallthru
        _
    $region6: #{fwd.13} parent=1 // loop_footer
      %s17 = sadd.s32 1, %s13
    $region7: #{fwd.13} parent=1 // loop_footer_branch
      %12 = sbr.rel target = $region3
    $region8: #{fwd.13} parent=1 // loop_exit
      _
    %725 = vsyncpa [#allocation3], 1
    %s726 = scalar_lea.sflag [#allocation3], 1
    %727 = vsyncpa %s726, 1

// kernel: fwd.15
$region0: #{fwd.15}
  #allocation0 [shape = 'u32[]', space=smem, size = 0x4, offset = 0x4, fixed_abs, tag = 'smem constant byte address 0x4 - core index']
  #allocation1 [shape = 'u32[144,128]{1,0:T(1,128)}', space=vmem, size = 0x12000, scoped, tag = 'internal scratch']
  %s0 = inlined_call_operand.vmem [shape: bf16[16,32], index: 0, kind: input, shape index: {}]
  %s1 = inlined_call_operand.vmem [shape: bf16[32,64], index: 1, kind: input, shape index: {}]
  %s2 = inlined_call_operand.vmem [shape: f32[1,64], index: 2, kind: input, shape index: {}]
  %s3 = inlined_call_operand.vmem [shape: bf16[64,32], index: 3, kind: input, shape index: {}]
  %s4 = inlined_call_operand.vmem [shape: f32[1,32], index: 4, kind: input, shape index: {}]
  %s5 = inlined_call_operand.vmem [shape: f32[1,32], index: 5, kind: input, shape index: {}]
  %s6 = inlined_call_operand.vmem [shape: f32[1,32], index: 6, kind: input, shape index: {}]
  %s7 = inlined_call_operand.vmem [shape: f32[16,32], index: 7, kind: output, shape index: {}]
  %s8 = sld [smem:[#allocation0]]
  $region38: #{fwd.15} parent=0
    _
  %s10 = ssub.s32 1, %s8
  %s11 = scalar_select 0, %s10, %s8
  // Predicated region
  $region2: #{fwd.15} parent=0 // pred_check
    _
  $region3: #{fwd.15} parent=0 // pred_check_branch
    %13 = sbr.rel (0) target = $region5
  $region4: #{fwd.15} parent=0 // pred_region
    _
  $region5: #{fwd.15} parent=0 // pred_fallthru
    _
  // Predicated region
  $region6: #{fwd.15} parent=0 // pred_check
    _
  $region7: #{fwd.15} parent=0 // pred_check_branch
    %15 = sbr.rel (0) target = $region9
  $region8: #{fwd.15} parent=0 // pred_region
    _
  $region9: #{fwd.15} parent=0 // pred_fallthru
    _
  // Predicated region
  $region10: #{fwd.15} parent=0 // pred_check
    _
  $region11: #{fwd.15} parent=0 // pred_check_branch
    %17 = sbr.rel (0) target = $region13
  $region12: #{fwd.15} parent=0 // pred_region
    _
  $region13: #{fwd.15} parent=0 // pred_fallthru
    _
  // Predicated region
  $region14: #{fwd.15} parent=0 // pred_check
    _
  $region15: #{fwd.15} parent=0 // pred_check_branch
    %19 = sbr.rel (0) target = $region17
  $region16: #{fwd.15} parent=0 // pred_region
    _
  $region17: #{fwd.15} parent=0 // pred_fallthru
    _
  // Predicated region
  $region18: #{fwd.15} parent=0 // pred_check
    _
  $region19: #{fwd.15} parent=0 // pred_check_branch
    %21 = sbr.rel (0) target = $region21
  $region20: #{fwd.15} parent=0 // pred_region
    _
  $region21: #{fwd.15} parent=0 // pred_fallthru
    _
  // Predicated region
  $region22: #{fwd.15} parent=0 // pred_check
    _
  $region23: #{fwd.15} parent=0 // pred_check_branch
    %23 = sbr.rel (0) target = $region25
  $region24: #{fwd.15} parent=0 // pred_region
    _
  $region25: #{fwd.15} parent=0 // pred_fallthru
    _
  // Predicated region
  $region26: #{fwd.15} parent=0 // pred_check
    _
  $region27: #{fwd.15} parent=0 // pred_check_branch
    %25 = sbr.rel (0) target = $region29
  $region28: #{fwd.15} parent=0 // pred_region
    _
  $region29: #{fwd.15} parent=0 // pred_fallthru
    _
  %v27 = vld [vmem:[%s0] sm:$0xf]
  %v28 = vld [vmem:[%s0 + $0x4] sm:$0xf]
  %v29 = vld [vmem:[%s1] sm:$0xf]
  %v30 = vld [vmem:[%s1 + $0x4] sm:$0xf]
  %v31 = vld [vmem:[%s1 + $0x8] sm:$0xf]
  %v32 = vld [vmem:[%s1 + $0xc] sm:$0xf]
  %v33 = vld [vmem:[%s2] sm:$0x1]
  %v35 = vlaneseq
  %v36 = vshrl.u32 %v35, 7
  %v37 = vsub.s32 0, %v36
  %v38 = vrot.slane %v33, %v37
  %v42 = vunpack.c.l.b16 %v27
  %v43 = vunpack.c.l.b16 %v28
  %v44 = vpack.c.b16 %v43, %v42
  %v49 = vunpack.c.l.b16 %v29
  %v50 = vunpack.c.l.b16 %v30
  %v51 = vunpack.c.l.b16 %v31
  %v52 = vunpack.c.l.b16 %v32
  %v53 = vpack.c.b16 %v50, %v49
  %v54 = vpack.c.b16 %v52, %v51
  %vm57 = vcmask 261120
  %v59 = vsel %vm57, %v44, 0
  %61 = vmatprep.subr.bf16.mxu0 0
  %62 = vmatpush1.bf16.msra.mxu0 0
  %63 = vmatprep.subr.bf16.mxu0 0
  %64 = vmatpush1.bf16.msra.mxu0 0
  %65 = vmatprep.subr.bf16.mxu0 0
  %66 = vmatpush1.bf16.msra.mxu0 0
  %67 = vmatprep.subr.bf16.mxu0 0
  %68 = vmatpush1.bf16.msra.mxu0 0
  %69 = vmatprep.subr.bf16.mxu0 0
  %70 = vmatpush1.bf16.msra.mxu0 0
  %71 = vmatprep.subr.bf16.mxu0 0
  %72 = vmatpush1.bf16.msra.mxu0 0
  %73 = vmatprep.subr.bf16.mxu0 0
  %74 = vmatpush1.bf16.msra.mxu0 %v54
  %75 = vmatprep.subr.bf16.mxu0 0
  %76 = vmatpush1.bf16.msra.mxu0 %v53
  %77 = vmatprep.subr.bf16.mxu0 0
  %78 = vmatpush2.bf16.msra.mxu0 0
  %79 = vmatprep.subr.bf16.mxu0 0
  %80 = vmatpush2.bf16.msra.mxu0 0
  %81 = vmatprep.subr.bf16.mxu0 0
  %82 = vmatpush2.bf16.msra.mxu0 0
  %83 = vmatprep.subr.bf16.mxu0 0
  %84 = vmatpush2.bf16.msra.mxu0 0
  %85 = vmatprep.subr.bf16.mxu0 0
  %86 = vmatpush2.bf16.msra.mxu0 0
  %87 = vmatprep.subr.bf16.mxu0 0
  %88 = vmatpush2.bf16.msra.mxu0 0
  %89 = vmatprep.subr.bf16.mxu0 0
  %90 = vmatpush2.bf16.msra.mxu0 0
  %91 = vmatprep.subr.bf16.mxu0 0
  %92 = vmatpush2.bf16.msra.mxu0 0
  %93 = vmatprep.mubr.bf16.mxu0 0
  %94 = vmatmul.mubr.bf16.gmra.mxu0 %v59
  %v95 = vpop.f32.mrf.mxu0
  %v96 = vadd.f32 %v38, %v95
  %v97 = vpop.f32.mrf.mxu0
  %v98 = vpop.f32.mrf.mxu0
  %v99 = vadd.f32 %v38, %v98
  %v100 = vpop.f32.mrf.mxu0
  %101 = vdwg.mxu0
  %v102 = vmax.f32 %v96, 0.0
  %v103 = vmax.f32 %v99, 0.0
  %v104 = vpack.c.bf16 %v103, %v102
  %v105 = vld [vmem:[%s3] sm:$0xf]
  %v106 = vld [vmem:[%s3 + $0x4] sm:$0xf]
  %v107 = vld [vmem:[%s3 + $0x8] sm:$0xf]
  %v108 = vld [vmem:[%s3 + $0xc] sm:$0xf]
  %v109 = vld [vmem:[%s3 + $0x10] sm:$0xf]
  %v110 = vld [vmem:[%s3 + $0x14] sm:$0xf]
  %v111 = vld [vmem:[%s3 + $0x18] sm:$0xf]
  %v112 = vld [vmem:[%s3 + $0x1c] sm:$0xf]
  %v113 = vld [vmem:[%s4] sm:$0x1]
  %v115 = vlaneseq
  %v116 = vshrl.u32 %v115, 7
  %v117 = vsub.s32 0, %v116
  %v118 = vrot.slane %v113, %v117
  %v128 = vunpack.c.l.b16 %v105
  %v129 = vunpack.c.l.b16 %v106
  %v130 = vunpack.c.l.b16 %v107
  %v131 = vunpack.c.l.b16 %v108
  %v132 = vunpack.c.l.b16 %v109
  %v133 = vunpack.c.l.b16 %v110
  %v134 = vunpack.c.l.b16 %v111
  %v135 = vunpack.c.l.b16 %v112
  %v136 = vpack.c.b16 %v129, %v128
  %v137 = vpack.c.b16 %v131, %v130
  %v138 = vpack.c.b16 %v133, %v132
  %v139 = vpack.c.b16 %v135, %v134
  %vm144 = vcmask 523264
  %v146 = vsel %vm144, %v104, 0
  %148 = vmatprep.subr.bf16.mxu0 0
  %149 = vmatpush1.bf16.msra.mxu0 0
  %150 = vmatprep.subr.bf16.mxu0 0
  %151 = vmatpush1.bf16.msra.mxu0 0
  %152 = vmatprep.subr.bf16.mxu0 0
  %153 = vmatpush1.bf16.msra.mxu0 0
  %154 = vmatprep.subr.bf16.mxu0 0
  %155 = vmatpush1.bf16.msra.mxu0 0
  %156 = vmatprep.subr.bf16.mxu0 0
  %157 = vmatpush1.bf16.msra.mxu0 %v139
  %158 = vmatprep.subr.bf16.mxu0 0
  %159 = vmatpush1.bf16.msra.mxu0 %v138
  %160 = vmatprep.subr.bf16.mxu0 0
  %161 = vmatpush1.bf16.msra.mxu0 %v137
  %162 = vmatprep.subr.bf16.mxu0 0
  %163 = vmatpush1.bf16.msra.mxu0 %v136
  %164 = vmatprep.subr.bf16.mxu0 0
  %165 = vmatpush2.bf16.msra.mxu0 0
  %166 = vmatprep.subr.bf16.mxu0 0
  %167 = vmatpush2.bf16.msra.mxu0 0
  %168 = vmatprep.subr.bf16.mxu0 0
  %169 = vmatpush2.bf16.msra.mxu0 0
  %170 = vmatprep.subr.bf16.mxu0 0
  %171 = vmatpush2.bf16.msra.mxu0 0
  %172 = vmatprep.subr.bf16.mxu0 0
  %173 = vmatpush2.bf16.msra.mxu0 0
  %174 = vmatprep.subr.bf16.mxu0 0
  %175 = vmatpush2.bf16.msra.mxu0 0
  %176 = vmatprep.subr.bf16.mxu0 0
  %177 = vmatpush2.bf16.msra.mxu0 0
  %178 = vmatprep.subr.bf16.mxu0 0
  %179 = vmatpush2.bf16.msra.mxu0 0
  %180 = vmatprep.mubr.bf16.mxu0 0
  %181 = vmatmul.mubr.bf16.gmra.mxu0 %v146
  %v182 = vpop.f32.mrf.mxu0
  %v183 = vadd.f32 %v118, %v182
  %v184 = vpop.f32.mrf.mxu0
  %v185 = vpop.f32.mrf.mxu0
  %v186 = vadd.f32 %v118, %v185
  %v187 = vpop.f32.mrf.mxu0
  %188 = vdwg.mxu0
  %v189 = vunpack.c.l.bf16 %v27
  %v190 = vunpack.c.l.bf16 %v28
  %v191 = vadd.f32 %v183, %v189
  %v192 = vadd.f32 %v186, %v190
  %v193 = vsel %vm57, %v191, 0.0
  %194 = vadd.xlane.f32.xlu0 %v193
  %v195 = vpop.xlane.xlu0 %194
  %v196 = vsel %vm57, %v192, 0.0
  %197 = vadd.xlane.f32.xlu0 %v196
  %v198 = vpop.xlane.xlu0 %197
  %v199 = vrcp.pop 32.0
  %v200 = vmul.f32 %v195, %v199
  %v201 = vmul.f32 %v198, %v199
  %v202 = vsub.f32 %v191, %v200
  %v203 = vsub.f32 %v192, %v201
  %v204 = vmul.f32 %v202, %v202
  %v205 = vmul.f32 %v203, %v203
  %v206 = vsel %vm57, %v204, 0.0
  %207 = vadd.xlane.f32.xlu0 %v206
  %v208 = vpop.xlane.xlu0 %207
  %v209 = vsel %vm57, %v205, 0.0
  %210 = vadd.xlane.f32.xlu0 %v209
  %v211 = vpop.xlane.xlu0 %210
  %v212 = vmul.f32 %v208, %v199
  %v213 = vmul.f32 %v211, %v199
  %v214 = vadd.f32 %v212, 1e-05
  %v215 = vadd.f32 %v213, 1e-05
  %v216 = vrsqrt.pop %v214
  %v217 = vrsqrt.pop %v215
  %v218 = vmul.f32 %v202, %v216
  %v219 = vmul.f32 %v203, %v217
  %v220 = vld [vmem:[%s5] sm:$0x1]
  %v222 = vlaneseq
  %v223 = vshrl.u32 %v222, 7
  %v224 = vsub.s32 0, %v223
  %v225 = vrot.slane %v220, %v224
  %v227 = vmul.f32 %v218, %v225
  %v228 = vmul.f32 %v219, %v225
  %v229 = vld [vmem:[%s6] sm:$0x1]
  %v231 = vlaneseq
  %v232 = vshrl.u32 %v231, 7
  %v233 = vsub.s32 0, %v232
  %v234 = vrot.slane %v229, %v233
  %v236 = vadd.f32 %v227, %v234
  %v237 = vadd.f32 %v228, %v234
  %238 = vst.msk [vmem:[%s7] sm:$0xff] %vm57, %v236
  %239 = vst.msk [vmem:[%s7 + $0x8] sm:$0xff] %vm57, %v237
  // Predicated region
  $region30: #{fwd.15} parent=0 // pred_check
    _
  $region31: #{fwd.15} parent=0 // pred_check_branch
    %241 = sbr.rel (0) target = $region33
  $region32: #{fwd.15} parent=0 // pred_region
    _
  $region33: #{fwd.15} parent=0 // pred_fallthru
    _
  // Predicated region
  $region34: #{fwd.15} parent=0 // pred_check
    _
  $region35: #{fwd.15} parent=0 // pred_check_branch
    %243 = sbr.rel (0) target = $region37
  $region36: #{fwd.15} parent=0 // pred_region
    _
  $region37: #{fwd.15} parent=0 // pred_fallthru
    _

</llo_original>
